<compile_context>
chip_gen: v5e
topology: v5e:2x2
jax: 0.10.0
libtpu: 0.0.40
codegen_flags: <defaults>
</compile_context>

<pallas_src>
import functools

import numpy as np
import jax
import jax.numpy as jnp
from jax import lax
from jax.experimental import pallas as pl
from jax.experimental.pallas import tpu as pltpu

BN_EPS = 1e-5
MIN_NORM = 1e-15
ATANH_CLAMP = 1.0 - 1e-5
MXU_DTYPE = jnp.bfloat16   # MXU operand dtype for fc1/fc2 (f32 accumulation)


def _artanh(x):
    # avoid relying on an arctanh lowering inside Mosaic
    return 0.5 * jnp.log((1.0 + x) / (1.0 - x))


def fft_stacked_hb_kernel(scal_ref,            # SMEM (2,)  [alpha, beta]
                          x_ref,               # (B, Din_pad)   bf16
                          w1_ref,              # (Din_pad, H)   bf16
                          g1_ref, be1_ref,     # bn1 gamma/beta (1, H) f32
                          m_ref,               # folded spectral matrix (H, H) f32
                          g2_ref, be2_ref,     # bn2 gamma/beta (1, H) f32
                          w2_ref, b2_ref,      # (H, O_pad) bf16, (1, O_pad) f32
                          o_ref,               # (B, O_pad) f32
                          *, c, batch):
    sqrt_c = jnp.float32(np.sqrt(c))
    inv_sqrt_c = jnp.float32(1.0 / np.sqrt(c))
    inv_b = jnp.float32(1.0 / batch)
    alpha = scal_ref[0]
    beta = scal_ref[1]

    # ---- fc1 (zero-padded K; bias exactly cancelled by train-mode BN mean) ----
    h_lin = jnp.dot(x_ref[...], w1_ref[...], preferred_element_type=jnp.float32)

    # ---- bn1: single-pass batch stats (biased var), then relu ----
    s1 = jnp.sum(h_lin, axis=0, keepdims=True)
    s2 = jnp.sum(h_lin * h_lin, axis=0, keepdims=True)
    mu1 = s1 * inv_b
    var1 = jnp.maximum(s2 * inv_b - mu1 * mu1, 0.0)
    scale1 = lax.rsqrt(var1 + BN_EPS) * g1_ref[...]
    h = jnp.maximum((h_lin - mu1) * scale1 + be1_ref[...], 0.0)

    # ---- hyperbolic log map at origin (Poincare ball, curvature c) ----
    sumsq = jnp.sum(h * h, axis=1, keepdims=True)
    inv_hn = lax.rsqrt(jnp.maximum(sumsq, MIN_NORM * MIN_NORM))
    hn = sumsq * inv_hn
    arg = jnp.minimum(sqrt_c * hn, ATANH_CLAMP)
    u = h * (_artanh(arg) * (inv_hn * inv_sqrt_c))

    # ---- FFT -> *H_eff -> IFFT.real folded into one real (H,H) matmul ----
    v = jnp.dot(u, m_ref[...], preferred_element_type=jnp.float32)

    # ---- hyperbolic exp map at origin ----
    vsumsq = jnp.sum(v * v, axis=1, keepdims=True)
    inv_vn = lax.rsqrt(jnp.maximum(vsumsq, MIN_NORM * MIN_NORM))
    vn = vsumsq * inv_vn
    y = v * (jnp.tanh(sqrt_c * vn) * (inv_vn * inv_sqrt_c))

    # ---- residual mix, bn2 (single-pass stats), relu, fc2 (lane-padded out) ----
    h2 = alpha * y + beta * h
    t1 = jnp.sum(h2, axis=0, keepdims=True)
    t2 = jnp.sum(h2 * h2, axis=0, keepdims=True)
    mu2 = t1 * inv_b
    var2 = jnp.maximum(t2 * inv_b - mu2 * mu2, 0.0)
    scale2 = lax.rsqrt(var2 + BN_EPS) * g2_ref[...]
    h3 = jnp.maximum((h2 - mu2) * scale2 + be2_ref[...], 0.0)

    o_ref[...] = (jnp.dot(h3.astype(w2_ref.dtype), w2_ref[...],
                          preferred_element_type=jnp.float32) + b2_ref[...])


# ------------------------- parameter-only host setup ------------------------- #

def host_complex_power(g_real, g_imag, L):
    """(g_re + i g_im)^L in float64 on host (robust for very large L)."""
    g = np.asarray(g_real, np.float64) + 1j * np.asarray(g_imag, np.float64)
    r = np.abs(g)
    theta = np.angle(g)
    mag = np.exp(L * np.log(np.maximum(r, 1e-300)))
    ang = L * theta
    return (mag * np.cos(ang)).astype(np.float64), (mag * np.sin(ang)).astype(np.float64)


def make_spectral_matrix(g_real, g_imag, L, n):
    """M = real(W_fwd @ diag(H_eff) @ W_inv), so real(ifft(fft(u)*H_eff)) == u @ M."""
    hre, him = host_complex_power(g_real, g_imag, L)
    h_eff = hre + 1j * him
    idx = np.arange(n)
    ang = 2.0 * np.pi * np.outer(idx, idx) / n
    w_fwd = np.exp(-1j * ang)          # torch.fft.fft convention along dim=1
    w_inv = np.exp(1j * ang) / n       # torch.fft.ifft
    m = np.real((w_fwd * h_eff[None, :]) @ w_inv)
    return m.astype(np.float32)


def prepare_params(params, *, c):
    """One-time host setup: spectral fold, padding, bf16 casts.  Cache the result."""
    Din, H = params["w1"].shape
    O = params["w2"].shape[1]
    Din_pad = ((Din + 127) // 128) * 128     # lane-dense K for fc1
    O_pad = ((O + 127) // 128) * 128         # lane-dense output store

    M = make_spectral_matrix(np.asarray(params["g_real"]),
                             np.asarray(params["g_imag"]),
                             params["L"], H)

    w1_pad = (jnp.zeros((Din_pad, H), jnp.float32)
              .at[:Din].set(params["w1"]).astype(MXU_DTYPE))
    w2_pad = (jnp.zeros((H, O_pad), jnp.float32)
              .at[:, :O].set(params["w2"]).astype(MXU_DTYPE))
    b2_pad = jnp.zeros((1, O_pad), jnp.float32).at[0, :O].set(params["b2"])
    row = lambda a: jnp.asarray(a, jnp.float32).reshape(1, -1)
    scalars = jnp.concatenate([params["alpha"].reshape(-1),
                               params["beta"].reshape(-1)]).astype(jnp.float32)

    return dict(
        scalars=scalars,
        w1=w1_pad, bn1_g=row(params["bn1_g"]), bn1_b=row(params["bn1_b"]),
        M=jnp.asarray(M, jnp.float32),     # keep f32: fold embeds |g|^L, L=1e8
        bn2_g=row(params["bn2_g"]), bn2_b=row(params["bn2_b"]),
        w2=w2_pad, b2=b2_pad,
        din=Din, din_pad=Din_pad, hidden=H, out_dim=O, out_pad=O_pad, c=c,
    )


# --------------------------------- forward ----------------------------------- #

def make_forward(prep):
    """Build a jit'ed forward; all parameter prep is already done in `prep`."""
    c = prep["c"]
    din, din_pad = prep["din"], prep["din_pad"]
    H, O, O_pad = prep["hidden"], prep["out_dim"], prep["out_pad"]
    scalars = prep["scalars"]
    w1, g1, be1 = prep["w1"], prep["bn1_g"], prep["bn1_b"]
    M = prep["M"]
    g2, be2 = prep["bn2_g"], prep["bn2_b"]
    w2, b2 = prep["w2"], prep["b2"]

    vmem = pl.BlockSpec(memory_space=pltpu.MemorySpace.VMEM)
    smem = pl.BlockSpec(memory_space=pltpu.MemorySpace.SMEM)

    @jax.jit
    def forward(x):
        B = x.shape[0]
        x2d = x.reshape(B, -1).astype(jnp.float32)
        # lane-dense, canonical-K operand for the first matmul (zero pad is exact)
        x_pad = (jnp.zeros((B, din_pad), jnp.float32)
                 .at[:, :din].set(x2d).astype(MXU_DTYPE))

        cost = pl.CostEstimate(
            flops=2 * B * (din_pad * H + H * H + H * O_pad),
            transcendentals=4 * B + 2 * H,
            bytes_accessed=(B * din_pad * 2 + din_pad * H * 2 + H * H * 4
                            + H * O_pad * 2 + 4 * H * 4 + O_pad * 4
                            + B * O_pad * 4))

        # Single block: full batch in one invocation so training-mode BatchNorm
        # batch statistics stay exact (no grid over batch).
        out = pl.pallas_call(
            functools.partial(fft_stacked_hb_kernel, c=c, batch=B),
            out_shape=jax.ShapeDtypeStruct((B, O_pad), jnp.float32),
            in_specs=[smem] + [vmem] * 9,
            out_specs=vmem,
            cost_estimate=cost,
        )(scalars, x_pad, w1, g1, be1, M, g2, be2, w2, b2)
        return out[:, :O]

    return forward


# ------------------------------ pure-JAX reference --------------------------- #

def reference_forward(x, params, *, c):
    """Pure-JAX reference (real FFT path, f32, with fc1 bias) for validation."""
    B = x.shape[0]
    x2d = x.reshape(B, -1).astype(jnp.float32)
    h_lin = x2d @ params["w1"] + params["b1"]
    mu1 = h_lin.mean(0, keepdims=True)
    var1 = ((h_lin - mu1) ** 2).mean(0, keepdims=True)
    h = jnp.maximum((h_lin - mu1) / jnp.sqrt(var1 + BN_EPS) * params["bn1_g"]
                    + params["bn1_b"], 0.0)
    sqrt_c = np.sqrt(c)
    hn = jnp.maximum(jnp.linalg.norm(h, axis=1, keepdims=True), MIN_NORM)
    arg = jnp.minimum(sqrt_c * hn, ATANH_CLAMP)
    u = jnp.arctanh(arg) / (sqrt_c * hn) * h
    U = jnp.fft.fft(u, axis=1)
    hre, him = host_complex_power(np.asarray(params["g_real"]),
                                  np.asarray(params["g_imag"]), params["L"])
    h_eff = jnp.asarray((hre + 1j * him).astype(np.complex64))
    V = U * h_eff[None, :]
    v = jnp.real(jnp.fft.ifft(V, axis=1))
    vn = jnp.maximum(jnp.linalg.norm(v, axis=1, keepdims=True), MIN_NORM)
    y = jnp.tanh(sqrt_c * vn) / (sqrt_c * vn) * v
    h2 = params["alpha"] * y + params["beta"] * h
    mu2 = h2.mean(0, keepdims=True)
    var2 = ((h2 - mu2) ** 2).mean(0, keepdims=True)
    h3 = jnp.maximum((h2 - mu2) / jnp.sqrt(var2 + BN_EPS) * params["bn2_g"]
                     + params["bn2_b"], 0.0)
    return h3 @ params["w2"] + params["b2"]


if __name__ == "__main__":
    # B=256 so the 256x256 MXU (v6e/v7x) is fed and per-call overhead is amortized.
    B, IN_DIM, HIDDEN, OUT_DIM = 256, 64, 128, 10
    L, c = 100000000, 1e-3

    key = jax.random.PRNGKey(0)
    k1, k2, k3, k4, kx = jax.random.split(key, 5)
    lim1 = 1.0 / np.sqrt(IN_DIM)
    lim2 = 1.0 / np.sqrt(HIDDEN)
    params = dict(
        w1=jax.random.uniform(k1, (IN_DIM, HIDDEN), jnp.float32, -lim1, lim1),
        b1=jax.random.uniform(k2, (HIDDEN,), jnp.float32, -lim1, lim1),
        bn1_g=jnp.ones((HIDDEN,), jnp.float32),
        bn1_b=jnp.zeros((HIDDEN,), jnp.float32),
        g_real=jnp.ones((HIDDEN,), jnp.float32),     # as in __init__
        g_imag=jnp.zeros((HIDDEN,), jnp.float32),    # as in __init__
        alpha=jnp.ones((1,), jnp.float32),
        beta=jnp.zeros((1,), jnp.float32),
        bn2_g=jnp.ones((HIDDEN,), jnp.float32),
        bn2_b=jnp.zeros((HIDDEN,), jnp.float32),
        w2=jax.random.uniform(k3, (HIDDEN, OUT_DIM), jnp.float32, -lim2, lim2),
        b2=jax.random.uniform(k4, (OUT_DIM,), jnp.float32, -lim2, lim2),
        L=L,
    )

    # One-time parameter setup (spectral fold, padding, bf16 casts) — cached.
    prep = prepare_params(params, c=c)
    forward = make_forward(prep)

    # image-like input; forward flattens it to (B, IN_DIM) like x.view(B, -1)
    x = jax.random.normal(kx, (B, 1, 8, 8), jnp.float32)

    out = forward(x)
    out = jax.block_until_ready(out)

    assert out.shape == (B, OUT_DIM)
    assert bool(jnp.all(jnp.isfinite(out)))
    ref = reference_forward(x, params, c=c)
    # bf16 MXU operands on fc1/fc2 (f32 accumulation) -> keep a modest tolerance
    np.testing.assert_allclose(np.asarray(out), np.asarray(ref), rtol=2e-2, atol=2e-2)

    print("KERNEL_OK")
</pallas_src>

<mosaic_0001>
module attributes {stable_mosaic.version = 11 : i64} {
  func.func @fft_stacked_hb_kernel(%arg0: memref<2xf32, #tpu.memory_space<smem>>, %arg1: memref<256x128xbf16, #tpu.memory_space<vmem>>, %arg2: memref<128x128xbf16, #tpu.memory_space<vmem>>, %arg3: memref<1x128xf32, #tpu.memory_space<vmem>>, %arg4: memref<1x128xf32, #tpu.memory_space<vmem>>, %arg5: memref<128x128xf32, #tpu.memory_space<vmem>>, %arg6: memref<1x128xf32, #tpu.memory_space<vmem>>, %arg7: memref<1x128xf32, #tpu.memory_space<vmem>>, %arg8: memref<128x128xbf16, #tpu.memory_space<vmem>>, %arg9: memref<1x128xf32, #tpu.memory_space<vmem>>, %arg10: memref<256x128xf32, #tpu.memory_space<vmem>>) attributes {dimension_semantics = [], scalar_prefetch = 0 : i64, scratch_operands = 0 : i64, tpu.core_type = #tpu.core_type<tc>} {
    %c0 = arith.constant 0 : index
    %0 = memref.load %arg0[%c0] : memref<2xf32, #tpu.memory_space<smem>>
    %c1 = arith.constant 1 : index
    %1 = memref.load %arg0[%c1] : memref<2xf32, #tpu.memory_space<smem>>
    %c0_0 = arith.constant 0 : index
    %c0_1 = arith.constant 0 : index
    %2 = vector.load %arg1[%c0_0, %c0_1] : memref<256x128xbf16, #tpu.memory_space<vmem>>, vector<256x128xbf16>
    %c0_2 = arith.constant 0 : index
    %c0_3 = arith.constant 0 : index
    %3 = vector.load %arg2[%c0_2, %c0_3] : memref<128x128xbf16, #tpu.memory_space<vmem>>, vector<128x128xbf16>
    %cst = arith.constant dense<0.000000e+00> : vector<256x128xf32>
    %4 = tpu.matmul %2, %3, %cst {dimension_numbers = #tpu.dot_dimension_numbers<[1], [0], [0], [1], [0, 0, 1, 1], [], []>} : vector<256x128xbf16>, vector<128x128xbf16>, vector<256x128xf32> -> vector<256x128xf32>
    %cst_4 = arith.constant dense<0.000000e+00> : vector<128xf32>
    %5 = vector.multi_reduction <add>, %4, %cst_4 [0] : vector<256x128xf32> to vector<128xf32>
    %6 = vector.shape_cast %5 : vector<128xf32> to vector<1x128xf32>
    %7 = arith.mulf %4, %4 : vector<256x128xf32>
    %cst_5 = arith.constant dense<0.000000e+00> : vector<128xf32>
    %8 = vector.multi_reduction <add>, %7, %cst_5 [0] : vector<256x128xf32> to vector<128xf32>
    %9 = vector.shape_cast %8 : vector<128xf32> to vector<1x128xf32>
    %cst_6 = arith.constant 3.906250e-03 : f32
    %10 = vector.broadcast %cst_6 : f32 to vector<1x128xf32>
    %11 = arith.mulf %6, %10 : vector<1x128xf32>
    %cst_7 = arith.constant 3.906250e-03 : f32
    %12 = vector.broadcast %cst_7 : f32 to vector<1x128xf32>
    %13 = arith.mulf %9, %12 : vector<1x128xf32>
    %14 = arith.mulf %11, %11 : vector<1x128xf32>
    %15 = arith.subf %13, %14 : vector<1x128xf32>
    %cst_8 = arith.constant 0.000000e+00 : f32
    %16 = vector.broadcast %cst_8 : f32 to vector<1x128xf32>
    %17 = arith.maximumf %15, %16 : vector<1x128xf32>
    %cst_9 = arith.constant 9.99999974E-6 : f32
    %18 = vector.broadcast %cst_9 : f32 to vector<1x128xf32>
    %19 = arith.addf %17, %18 : vector<1x128xf32>
    %20 = math.rsqrt %19 : vector<1x128xf32>
    %c0_10 = arith.constant 0 : index
    %c0_11 = arith.constant 0 : index
    %21 = vector.load %arg3[%c0_10, %c0_11] : memref<1x128xf32, #tpu.memory_space<vmem>>, vector<1x128xf32>
    %22 = arith.mulf %20, %21 : vector<1x128xf32>
    %23 = vector.broadcast %11 : vector<1x128xf32> to vector<256x128xf32>
    %24 = arith.subf %4, %23 : vector<256x128xf32>
    %25 = vector.broadcast %22 : vector<1x128xf32> to vector<256x128xf32>
    %26 = arith.mulf %24, %25 : vector<256x128xf32>
    %c0_12 = arith.constant 0 : index
    %c0_13 = arith.constant 0 : index
    %27 = vector.load %arg4[%c0_12, %c0_13] : memref<1x128xf32, #tpu.memory_space<vmem>>, vector<1x128xf32>
    %28 = vector.broadcast %27 : vector<1x128xf32> to vector<256x128xf32>
    %29 = arith.addf %26, %28 : vector<256x128xf32>
    %cst_14 = arith.constant 0.000000e+00 : f32
    %30 = vector.broadcast %cst_14 : f32 to vector<256x128xf32>
    %31 = arith.maximumf %29, %30 : vector<256x128xf32>
    %32 = arith.mulf %31, %31 : vector<256x128xf32>
    %cst_15 = arith.constant dense<0.000000e+00> : vector<256xf32>
    %33 = vector.multi_reduction <add>, %32, %cst_15 [1] : vector<256x128xf32> to vector<256xf32>
    %34 = vector.shape_cast %33 : vector<256xf32> to vector<256x1xf32>
    %cst_16 = arith.constant 1.000000e-30 : f32
    %35 = vector.broadcast %cst_16 : f32 to vector<256x1xf32>
    %36 = arith.maximumf %34, %35 : vector<256x1xf32>
    %37 = math.rsqrt %36 : vector<256x1xf32>
    %38 = arith.mulf %34, %37 : vector<256x1xf32>
    %cst_17 = arith.constant 0.0316227749 : f32
    %39 = vector.broadcast %cst_17 : f32 to vector<256x1xf32>
    %40 = arith.mulf %39, %38 : vector<256x1xf32>
    %cst_18 = arith.constant 0.999989986 : f32
    %41 = vector.broadcast %cst_18 : f32 to vector<256x1xf32>
    %42 = arith.minimumf %40, %41 : vector<256x1xf32>
    %cst_19 = arith.constant 1.000000e+00 : f32
    %43 = vector.broadcast %cst_19 : f32 to vector<256x1xf32>
    %44 = arith.addf %43, %42 : vector<256x1xf32>
    %cst_20 = arith.constant 1.000000e+00 : f32
    %45 = vector.broadcast %cst_20 : f32 to vector<256x1xf32>
    %46 = arith.subf %45, %42 : vector<256x1xf32>
    %47 = arith.divf %44, %46 : vector<256x1xf32>
    %48 = math.log %47 : vector<256x1xf32>
    %cst_21 = arith.constant 5.000000e-01 : f32
    %49 = vector.broadcast %cst_21 : f32 to vector<256x1xf32>
    %50 = arith.mulf %49, %48 : vector<256x1xf32>
    %cst_22 = arith.constant 31.622776 : f32
    %51 = vector.broadcast %cst_22 : f32 to vector<256x1xf32>
    %52 = arith.mulf %37, %51 : vector<256x1xf32>
    %53 = arith.mulf %50, %52 : vector<256x1xf32>
    %54 = vector.broadcast %53 : vector<256x1xf32> to vector<256x128xf32>
    %55 = arith.mulf %31, %54 : vector<256x128xf32>
    %c0_23 = arith.constant 0 : index
    %c0_24 = arith.constant 0 : index
    %56 = vector.load %arg5[%c0_23, %c0_24] : memref<128x128xf32, #tpu.memory_space<vmem>>, vector<128x128xf32>
    %cst_25 = arith.constant dense<0.000000e+00> : vector<256x128xf32>
    %57 = tpu.matmul %55, %56, %cst_25 {dimension_numbers = #tpu.dot_dimension_numbers<[1], [0], [0], [1], [0, 0, 1, 1], [], []>} : vector<256x128xf32>, vector<128x128xf32>, vector<256x128xf32> -> vector<256x128xf32>
    %58 = arith.mulf %57, %57 : vector<256x128xf32>
    %cst_26 = arith.constant dense<0.000000e+00> : vector<256xf32>
    %59 = vector.multi_reduction <add>, %58, %cst_26 [1] : vector<256x128xf32> to vector<256xf32>
    %60 = vector.shape_cast %59 : vector<256xf32> to vector<256x1xf32>
    %cst_27 = arith.constant 1.000000e-30 : f32
    %61 = vector.broadcast %cst_27 : f32 to vector<256x1xf32>
    %62 = arith.maximumf %60, %61 : vector<256x1xf32>
    %63 = math.rsqrt %62 : vector<256x1xf32>
    %64 = arith.mulf %60, %63 : vector<256x1xf32>
    %cst_28 = arith.constant 0.0316227749 : f32
    %65 = vector.broadcast %cst_28 : f32 to vector<256x1xf32>
    %66 = arith.mulf %65, %64 : vector<256x1xf32>
    %67 = math.tanh %66 : vector<256x1xf32>
    %cst_29 = arith.constant 31.622776 : f32
    %68 = vector.broadcast %cst_29 : f32 to vector<256x1xf32>
    %69 = arith.mulf %63, %68 : vector<256x1xf32>
    %70 = arith.mulf %67, %69 : vector<256x1xf32>
    %71 = vector.broadcast %70 : vector<256x1xf32> to vector<256x128xf32>
    %72 = arith.mulf %57, %71 : vector<256x128xf32>
    %73 = vector.broadcast %0 : f32 to vector<256x128xf32>
    %74 = arith.mulf %73, %72 : vector<256x128xf32>
    %75 = vector.broadcast %1 : f32 to vector<256x128xf32>
    %76 = arith.mulf %75, %31 : vector<256x128xf32>
    %77 = arith.addf %74, %76 : vector<256x128xf32>
    %cst_30 = arith.constant dense<0.000000e+00> : vector<128xf32>
    %78 = vector.multi_reduction <add>, %77, %cst_30 [0] : vector<256x128xf32> to vector<128xf32>
    %79 = vector.shape_cast %78 : vector<128xf32> to vector<1x128xf32>
    %80 = arith.mulf %77, %77 : vector<256x128xf32>
    %cst_31 = arith.constant dense<0.000000e+00> : vector<128xf32>
    %81 = vector.multi_reduction <add>, %80, %cst_31 [0] : vector<256x128xf32> to vector<128xf32>
    %82 = vector.shape_cast %81 : vector<128xf32> to vector<1x128xf32>
    %cst_32 = arith.constant 3.906250e-03 : f32
    %83 = vector.broadcast %cst_32 : f32 to vector<1x128xf32>
    %84 = arith.mulf %79, %83 : vector<1x128xf32>
    %cst_33 = arith.constant 3.906250e-03 : f32
    %85 = vector.broadcast %cst_33 : f32 to vector<1x128xf32>
    %86 = arith.mulf %82, %85 : vector<1x128xf32>
    %87 = arith.mulf %84, %84 : vector<1x128xf32>
    %88 = arith.subf %86, %87 : vector<1x128xf32>
    %cst_34 = arith.constant 0.000000e+00 : f32
    %89 = vector.broadcast %cst_34 : f32 to vector<1x128xf32>
    %90 = arith.maximumf %88, %89 : vector<1x128xf32>
    %cst_35 = arith.constant 9.99999974E-6 : f32
    %91 = vector.broadcast %cst_35 : f32 to vector<1x128xf32>
    %92 = arith.addf %90, %91 : vector<1x128xf32>
    %93 = math.rsqrt %92 : vector<1x128xf32>
    %c0_36 = arith.constant 0 : index
    %c0_37 = arith.constant 0 : index
    %94 = vector.load %arg6[%c0_36, %c0_37] : memref<1x128xf32, #tpu.memory_space<vmem>>, vector<1x128xf32>
    %95 = arith.mulf %93, %94 : vector<1x128xf32>
    %96 = vector.broadcast %84 : vector<1x128xf32> to vector<256x128xf32>
    %97 = arith.subf %77, %96 : vector<256x128xf32>
    %98 = vector.broadcast %95 : vector<1x128xf32> to vector<256x128xf32>
    %99 = arith.mulf %97, %98 : vector<256x128xf32>
    %c0_38 = arith.constant 0 : index
    %c0_39 = arith.constant 0 : index
    %100 = vector.load %arg7[%c0_38, %c0_39] : memref<1x128xf32, #tpu.memory_space<vmem>>, vector<1x128xf32>
    %101 = vector.broadcast %100 : vector<1x128xf32> to vector<256x128xf32>
    %102 = arith.addf %99, %101 : vector<256x128xf32>
    %cst_40 = arith.constant 0.000000e+00 : f32
    %103 = vector.broadcast %cst_40 : f32 to vector<256x128xf32>
    %104 = arith.maximumf %102, %103 : vector<256x128xf32>
    %105 = arith.truncf %104 : vector<256x128xf32> to vector<256x128xbf16>
    %c0_41 = arith.constant 0 : index
    %c0_42 = arith.constant 0 : index
    %106 = vector.load %arg8[%c0_41, %c0_42] : memref<128x128xbf16, #tpu.memory_space<vmem>>, vector<128x128xbf16>
    %cst_43 = arith.constant dense<0.000000e+00> : vector<256x128xf32>
    %107 = tpu.matmul %105, %106, %cst_43 {dimension_numbers = #tpu.dot_dimension_numbers<[1], [0], [0], [1], [0, 0, 1, 1], [], []>} : vector<256x128xbf16>, vector<128x128xbf16>, vector<256x128xf32> -> vector<256x128xf32>
    %c0_44 = arith.constant 0 : index
    %c0_45 = arith.constant 0 : index
    %108 = vector.load %arg9[%c0_44, %c0_45] : memref<1x128xf32, #tpu.memory_space<vmem>>, vector<1x128xf32>
    %109 = vector.broadcast %108 : vector<1x128xf32> to vector<256x128xf32>
    %110 = arith.addf %107, %109 : vector<256x128xf32>
    %c0_46 = arith.constant 0 : index
    %c0_47 = arith.constant 0 : index
    %111 = vector.load %arg10[%c0_46, %c0_47] : memref<256x128xf32, #tpu.memory_space<vmem>>, vector<256x128xf32>
    tpu.vector_store %arg10[%c0_46, %c0_47], %110 {strides = array<i32>} : memref<256x128xf32, #tpu.memory_space<vmem>>, vector<256x128xf32>,
    return
  }
}

</mosaic_0001>

<llo_original>
// kernel: forward.1
$region0: #{forward.1}
  #allocation0 [shape = 'u32[]', space=smem, size = 0x4, offset = 0x4, fixed_abs, tag = 'smem constant byte address 0x4 - core index']
  #allocation1 [shape = 'u32[72,128]{1,0:T(1,128)}', space=vmem, size = 0x9000, scoped, tag = 'internal scratch']
  %s0 = inlined_call_operand.vmem [shape: f32[2], index: 0, kind: input, shape index: {}]
  %s1 = inlined_call_operand.vmem [shape: bf16[256,128], index: 1, kind: input, shape index: {}]
  %s2 = inlined_call_operand.vmem [shape: bf16[128,128], index: 2, kind: input, shape index: {}]
  %s3 = inlined_call_operand.vmem [shape: f32[1,128], index: 3, kind: input, shape index: {}, may-alias: {3,6}]
  %s4 = inlined_call_operand.vmem [shape: f32[1,128], index: 4, kind: input, shape index: {}, may-alias: {4,7}]
  %s5 = inlined_call_operand.vmem [shape: f32[128,128], index: 5, kind: input, shape index: {}]
  %s6 = inlined_call_operand.vmem [shape: f32[1,128], index: 6, kind: input, shape index: {}, may-alias: {3,6}]
  %s7 = inlined_call_operand.vmem [shape: f32[1,128], index: 7, kind: input, shape index: {}, may-alias: {4,7}]
  %s8 = inlined_call_operand.vmem [shape: bf16[128,128], index: 8, kind: input, shape index: {}]
  %s9 = inlined_call_operand.vmem [shape: f32[1,128], index: 9, kind: input, shape index: {}]
  %s10 = inlined_call_operand.vmem [shape: f32[256,128], index: 10, kind: output, shape index: {}]
  %s11 = sld [smem:[#allocation0]]
  $region54: #{forward.1} parent=0
    _
  %s13 = ssub.s32 1, %s11
  %s14 = scalar_select 0, %s13, %s11
  $region1: #{forward.1} parent=0
    #allocation2 [shape = 'u8[512]{0}', space=smem, size = 0x200, scoped, tag = 'input window, operand 0, single buffered']
    #allocation3 [shape = 's32[1]{0}', space=sflag, size = 0x4, scoped, tag = 'scoped memory for forward.1']
    %15 = vsyncpa [#allocation3], 0
    // Predicated region
    $region2: #{forward.1} parent=1 // pred_check
      _
    $region3: #{forward.1} parent=1 // pred_check_branch
      %17 = sbr.rel (0) target = $region5
    $region4: #{forward.1} parent=1 // pred_region
      %19 = vsyncadd [#allocation3], 0
      %s21 = sshll.u32 %s0, 4
      %s22 = int_to_ptr.vmem [resolvable:$true] %s21
      %24 = dma.vmem_to_smem %s22, 16, [#allocation2], [#allocation3]
    $region5: #{forward.1} parent=1 // pred_fallthru
      _
    // Predicated region
    $region6: #{forward.1} parent=1 // pred_check
      _
    $region7: #{forward.1} parent=1 // pred_check_branch
      %26 = sbr.rel (0) target = $region9
    $region8: #{forward.1} parent=1 // pred_region
      _
    $region9: #{forward.1} parent=1 // pred_fallthru
      _
    // Predicated region
    $region10: #{forward.1} parent=1 // pred_check
      _
    $region11: #{forward.1} parent=1 // pred_check_branch
      %28 = sbr.rel (0) target = $region13
    $region12: #{forward.1} parent=1 // pred_region
      _
    $region13: #{forward.1} parent=1 // pred_fallthru
      _
    // Predicated region
    $region14: #{forward.1} parent=1 // pred_check
      _
    $region15: #{forward.1} parent=1 // pred_check_branch
      %30 = sbr.rel (0) target = $region17
    $region16: #{forward.1} parent=1 // pred_region
      _
    $region17: #{forward.1} parent=1 // pred_fallthru
      _
    // Predicated region
    $region18: #{forward.1} parent=1 // pred_check
      _
    $region19: #{forward.1} parent=1 // pred_check_branch
      %32 = sbr.rel (0) target = $region21
    $region20: #{forward.1} parent=1 // pred_region
      _
    $region21: #{forward.1} parent=1 // pred_fallthru
      _
    // Predicated region
    $region22: #{forward.1} parent=1 // pred_check
      _
    $region23: #{forward.1} parent=1 // pred_check_branch
      %34 = sbr.rel (0) target = $region25
    $region24: #{forward.1} parent=1 // pred_region
      _
    $region25: #{forward.1} parent=1 // pred_fallthru
      _
    // Predicated region
    $region26: #{forward.1} parent=1 // pred_check
      _
    $region27: #{forward.1} parent=1 // pred_check_branch
      %36 = sbr.rel (0) target = $region29
    $region28: #{forward.1} parent=1 // pred_region
      _
    $region29: #{forward.1} parent=1 // pred_fallthru
      _
    // Predicated region
    $region30: #{forward.1} parent=1 // pred_check
      _
    $region31: #{forward.1} parent=1 // pred_check_branch
      %38 = sbr.rel (0) target = $region33
    $region32: #{forward.1} parent=1 // pred_region
      _
    $region33: #{forward.1} parent=1 // pred_fallthru
      _
    // Predicated region
    $region34: #{forward.1} parent=1 // pred_check
      _
    $region35: #{forward.1} parent=1 // pred_check_branch
      %40 = sbr.rel (0) target = $region37
    $region36: #{forward.1} parent=1 // pred_region
      _
    $region37: #{forward.1} parent=1 // pred_fallthru
      _
    // Predicated region
    $region38: #{forward.1} parent=1 // pred_check
      _
    $region39: #{forward.1} parent=1 // pred_check_branch
      %42 = sbr.rel (0) target = $region41
    $region40: #{forward.1} parent=1 // pred_region
      _
    $region41: #{forward.1} parent=1 // pred_fallthru
      _
    // Predicated region
    $region42: #{forward.1} parent=1 // pred_check
      _
    $region43: #{forward.1} parent=1 // pred_check_branch
      %44 = sbr.rel (0) target = $region45
    $region44: #{forward.1} parent=1 // pred_region
      %46 = dma.done [#allocation3], 16
    $region45: #{forward.1} parent=1 // pred_fallthru
      _
    %47 = sfence
    %s48 = sld [smem:[#allocation2]]
    %s49 = sld [smem:[#allocation2 + $0x1]]
    %v50 = vld [vmem:[%s1] sm:$0xf]
    %v51 = vld [vmem:[%s1 + $0x4] sm:$0xf]
    %v52 = vld [vmem:[%s1 + $0x8] sm:$0xf]
    %v53 = vld [vmem:[%s1 + $0xc] sm:$0xf]
    %v54 = vld [vmem:[%s1 + $0x10] sm:$0xf]
    %v55 = vld [vmem:[%s1 + $0x14] sm:$0xf]
    %v56 = vld [vmem:[%s1 + $0x18] sm:$0xf]
    %v57 = vld [vmem:[%s1 + $0x1c] sm:$0xf]
    %v58 = vld [vmem:[%s1 + $0x20] sm:$0xf]
    %v59 = vld [vmem:[%s1 + $0x24] sm:$0xf]
    %v60 = vld [vmem:[%s1 + $0x28] sm:$0xf]
    %v61 = vld [vmem:[%s1 + $0x2c] sm:$0xf]
    %v62 = vld [vmem:[%s1 + $0x30] sm:$0xf]
    %v63 = vld [vmem:[%s1 + $0x34] sm:$0xf]
    %v64 = vld [vmem:[%s1 + $0x38] sm:$0xf]
    %v65 = vld [vmem:[%s1 + $0x3c] sm:$0xf]
    %v66 = vld [vmem:[%s1 + $0x40] sm:$0xf]
    %v67 = vld [vmem:[%s1 + $0x44] sm:$0xf]
    %v68 = vld [vmem:[%s1 + $0x48] sm:$0xf]
    %v69 = vld [vmem:[%s1 + $0x4c] sm:$0xf]
    %v70 = vld [vmem:[%s1 + $0x50] sm:$0xf]
    %v71 = vld [vmem:[%s1 + $0x54] sm:$0xf]
    %v72 = vld [vmem:[%s1 + $0x58] sm:$0xf]
    %v73 = vld [vmem:[%s1 + $0x5c] sm:$0xf]
    %v74 = vld [vmem:[%s1 + $0x60] sm:$0xf]
    %v75 = vld [vmem:[%s1 + $0x64] sm:$0xf]
    %v76 = vld [vmem:[%s1 + $0x68] sm:$0xf]
    %v77 = vld [vmem:[%s1 + $0x6c] sm:$0xf]
    %v78 = vld [vmem:[%s1 + $0x70] sm:$0xf]
    %v79 = vld [vmem:[%s1 + $0x74] sm:$0xf]
    %v80 = vld [vmem:[%s1 + $0x78] sm:$0xf]
    %v81 = vld [vmem:[%s1 + $0x7c] sm:$0xf]
    %v82 = vld [vmem:[%s2] sm:$0xf]
    %v83 = vld [vmem:[%s2 + $0x4] sm:$0xf]
    %v84 = vld [vmem:[%s2 + $0x8] sm:$0xf]
    %v85 = vld [vmem:[%s2 + $0xc] sm:$0xf]
    %v86 = vld [vmem:[%s2 + $0x10] sm:$0xf]
    %v87 = vld [vmem:[%s2 + $0x14] sm:$0xf]
    %v88 = vld [vmem:[%s2 + $0x18] sm:$0xf]
    %v89 = vld [vmem:[%s2 + $0x1c] sm:$0xf]
    %v90 = vld [vmem:[%s2 + $0x20] sm:$0xf]
    %v91 = vld [vmem:[%s2 + $0x24] sm:$0xf]
    %v92 = vld [vmem:[%s2 + $0x28] sm:$0xf]
    %v93 = vld [vmem:[%s2 + $0x2c] sm:$0xf]
    %v94 = vld [vmem:[%s2 + $0x30] sm:$0xf]
    %v95 = vld [vmem:[%s2 + $0x34] sm:$0xf]
    %v96 = vld [vmem:[%s2 + $0x38] sm:$0xf]
    %v97 = vld [vmem:[%s2 + $0x3c] sm:$0xf]
    %v130 = vunpack.c.l.b16 %v50
    %v131 = vunpack.c.l.b16 %v51
    %v132 = vunpack.c.l.b16 %v52
    %v133 = vunpack.c.l.b16 %v53
    %v134 = vunpack.c.l.b16 %v54
    %v135 = vunpack.c.l.b16 %v55
    %v136 = vunpack.c.l.b16 %v56
    %v137 = vunpack.c.l.b16 %v57
    %v138 = vunpack.c.l.b16 %v58
    %v139 = vunpack.c.l.b16 %v59
    %v140 = vunpack.c.l.b16 %v60
    %v141 = vunpack.c.l.b16 %v61
    %v142 = vunpack.c.l.b16 %v62
    %v143 = vunpack.c.l.b16 %v63
    %v144 = vunpack.c.l.b16 %v64
    %v145 = vunpack.c.l.b16 %v65
    %v146 = vunpack.c.l.b16 %v66
    %v147 = vunpack.c.l.b16 %v67
    %v148 = vunpack.c.l.b16 %v68
    %v149 = vunpack.c.l.b16 %v69
    %v150 = vunpack.c.l.b16 %v70
    %v151 = vunpack.c.l.b16 %v71
    %v152 = vunpack.c.l.b16 %v72
    %v153 = vunpack.c.l.b16 %v73
    %v154 = vunpack.c.l.b16 %v74
    %v155 = vunpack.c.l.b16 %v75
    %v156 = vunpack.c.l.b16 %v76
    %v157 = vunpack.c.l.b16 %v77
    %v158 = vunpack.c.l.b16 %v78
    %v159 = vunpack.c.l.b16 %v79
    %v160 = vunpack.c.l.b16 %v80
    %v161 = vunpack.c.l.b16 %v81
    %v162 = vpack.c.b16 %v131, %v130
    %v163 = vpack.c.b16 %v133, %v132
    %v164 = vpack.c.b16 %v135, %v134
    %v165 = vpack.c.b16 %v137, %v136
    %v166 = vpack.c.b16 %v139, %v138
    %v167 = vpack.c.b16 %v141, %v140
    %v168 = vpack.c.b16 %v143, %v142
    %v169 = vpack.c.b16 %v145, %v144
    %v170 = vpack.c.b16 %v147, %v146
    %v171 = vpack.c.b16 %v149, %v148
    %v172 = vpack.c.b16 %v151, %v150
    %v173 = vpack.c.b16 %v153, %v152
    %v174 = vpack.c.b16 %v155, %v154
    %v175 = vpack.c.b16 %v157, %v156
    %v176 = vpack.c.b16 %v159, %v158
    %v177 = vpack.c.b16 %v161, %v160
    %v210 = vunpack.c.l.b16 %v82
    %v211 = vunpack.c.l.b16 %v83
    %v212 = vunpack.c.l.b16 %v84
    %v213 = vunpack.c.l.b16 %v85
    %v214 = vunpack.c.l.b16 %v86
    %v215 = vunpack.c.l.b16 %v87
    %v216 = vunpack.c.l.b16 %v88
    %v217 = vunpack.c.l.b16 %v89
    %v218 = vunpack.c.l.b16 %v90
    %v219 = vunpack.c.l.b16 %v91
    %v220 = vunpack.c.l.b16 %v92
    %v221 = vunpack.c.l.b16 %v93
    %v222 = vunpack.c.l.b16 %v94
    %v223 = vunpack.c.l.b16 %v95
    %v224 = vunpack.c.l.b16 %v96
    %v225 = vunpack.c.l.b16 %v97
    %v226 = vpack.c.b16 %v211, %v210
    %v227 = vpack.c.b16 %v213, %v212
    %v228 = vpack.c.b16 %v215, %v214
    %v229 = vpack.c.b16 %v217, %v216
    %v230 = vpack.c.b16 %v219, %v218
    %v231 = vpack.c.b16 %v221, %v220
    %v232 = vpack.c.b16 %v223, %v222
    %v233 = vpack.c.b16 %v225, %v224
    %242 = vmatpush.bf16.msra.mxu0 %v233
    %243 = vmatpush.bf16.msra.mxu0 %v232
    %244 = vmatpush.bf16.msra.mxu0 %v231
    %245 = vmatpush.bf16.msra.mxu0 %v230
    %246 = vmatpush.bf16.msra.mxu0 %v229
    %247 = vmatpush.bf16.msra.mxu0 %v228
    %248 = vmatpush.bf16.msra.mxu0 %v227
    %249 = vmatpush.bf16.msra.mxu0 %v226
    %250 = vmatmul.bf16.gmra.mxu0 %v162
    %v251 = vpop.f32.mrf.mxu0
    %v252 = vadd.f32 0.0, %v251
    %v253 = vpop.f32.mrf.mxu0
    %v254 = vadd.f32 0.0, %v253
    %255 = vmatmul.bf16.gmra.mxu0 %v163
    %v256 = vpop.f32.mrf.mxu0
    %v257 = vadd.f32 0.0, %v256
    %v258 = vpop.f32.mrf.mxu0
    %v259 = vadd.f32 0.0, %v258
    %260 = vmatmul.bf16.gmra.mxu0 %v164
    %v261 = vpop.f32.mrf.mxu0
    %v262 = vadd.f32 0.0, %v261
    %v263 = vpop.f32.mrf.mxu0
    %v264 = vadd.f32 0.0, %v263
    %265 = vmatmul.bf16.gmra.mxu0 %v165
    %v266 = vpop.f32.mrf.mxu0
    %v267 = vadd.f32 0.0, %v266
    %v268 = vpop.f32.mrf.mxu0
    %v269 = vadd.f32 0.0, %v268
    %270 = vmatmul.bf16.gmra.mxu0 %v166
    %v271 = vpop.f32.mrf.mxu0
    %v272 = vadd.f32 0.0, %v271
    %v273 = vpop.f32.mrf.mxu0
    %v274 = vadd.f32 0.0, %v273
    %275 = vmatmul.bf16.gmra.mxu0 %v167
    %v276 = vpop.f32.mrf.mxu0
    %v277 = vadd.f32 0.0, %v276
    %v278 = vpop.f32.mrf.mxu0
    %v279 = vadd.f32 0.0, %v278
    %280 = vmatmul.bf16.gmra.mxu0 %v168
    %v281 = vpop.f32.mrf.mxu0
    %v282 = vadd.f32 0.0, %v281
    %v283 = vpop.f32.mrf.mxu0
    %v284 = vadd.f32 0.0, %v283
    %285 = vmatmul.bf16.gmra.mxu0 %v169
    %v286 = vpop.f32.mrf.mxu0
    %v287 = vadd.f32 0.0, %v286
    %v288 = vpop.f32.mrf.mxu0
    %v289 = vadd.f32 0.0, %v288
    %290 = vmatmul.bf16.gmra.mxu0 %v170
    %v291 = vpop.f32.mrf.mxu0
    %v292 = vadd.f32 0.0, %v291
    %v293 = vpop.f32.mrf.mxu0
    %v294 = vadd.f32 0.0, %v293
    %295 = vmatmul.bf16.gmra.mxu0 %v171
    %v296 = vpop.f32.mrf.mxu0
    %v297 = vadd.f32 0.0, %v296
    %v298 = vpop.f32.mrf.mxu0
    %v299 = vadd.f32 0.0, %v298
    %300 = vmatmul.bf16.gmra.mxu0 %v172
    %v301 = vpop.f32.mrf.mxu0
    %v302 = vadd.f32 0.0, %v301
    %v303 = vpop.f32.mrf.mxu0
    %v304 = vadd.f32 0.0, %v303
    %305 = vmatmul.bf16.gmra.mxu0 %v173
    %v306 = vpop.f32.mrf.mxu0
    %v307 = vadd.f32 0.0, %v306
    %v308 = vpop.f32.mrf.mxu0
    %v309 = vadd.f32 0.0, %v308
    %310 = vmatmul.bf16.gmra.mxu0 %v174
    %v311 = vpop.f32.mrf.mxu0
    %v312 = vadd.f32 0.0, %v311
    %v313 = vpop.f32.mrf.mxu0
    %v314 = vadd.f32 0.0, %v313
    %315 = vmatmul.bf16.gmra.mxu0 %v175
    %v316 = vpop.f32.mrf.mxu0
    %v317 = vadd.f32 0.0, %v316
    %v318 = vpop.f32.mrf.mxu0
    %v319 = vadd.f32 0.0, %v318
    %320 = vmatmul.bf16.gmra.mxu0 %v176
    %v321 = vpop.f32.mrf.mxu0
    %v322 = vadd.f32 0.0, %v321
    %v323 = vpop.f32.mrf.mxu0
    %v324 = vadd.f32 0.0, %v323
    %325 = vmatmul.bf16.gmra.mxu0 %v177
    %v326 = vpop.f32.mrf.mxu0
    %v327 = vadd.f32 0.0, %v326
    %v328 = vpop.f32.mrf.mxu0
    %v329 = vadd.f32 0.0, %v328
    %330 = vdwg.mxu0
    %v331 = vadd.f32 %v252, %v254
    %v332 = vadd.f32 %v331, %v257
    %v333 = vadd.f32 %v332, %v259
    %v334 = vadd.f32 %v333, %v262
    %v335 = vadd.f32 %v334, %v264
    %v336 = vadd.f32 %v335, %v267
    %v337 = vadd.f32 %v336, %v269
    %v338 = vadd.f32 %v337, %v272
    %v339 = vadd.f32 %v338, %v274
    %v340 = vadd.f32 %v339, %v277
    %v341 = vadd.f32 %v340, %v279
    %v342 = vadd.f32 %v341, %v282
    %v343 = vadd.f32 %v342, %v284
    %v344 = vadd.f32 %v343, %v287
    %v345 = vadd.f32 %v344, %v289
    %v346 = vadd.f32 %v345, %v292
    %v347 = vadd.f32 %v346, %v294
    %v348 = vadd.f32 %v347, %v297
    %v349 = vadd.f32 %v348, %v299
    %v350 = vadd.f32 %v349, %v302
    %v351 = vadd.f32 %v350, %v304
    %v352 = vadd.f32 %v351, %v307
    %v353 = vadd.f32 %v352, %v309
    %v354 = vadd.f32 %v353, %v312
    %v355 = vadd.f32 %v354, %v314
    %v356 = vadd.f32 %v355, %v317
    %v357 = vadd.f32 %v356, %v319
    %v358 = vadd.f32 %v357, %v322
    %v359 = vadd.f32 %v358, %v324
    %v360 = vadd.f32 %v359, %v327
    %v361 = vadd.f32 %v360, %v329
    %v362 = vrot.slane %v361, 4
    %v363 = vadd.f32 %v361, %v362
    %v364 = vrot.slane %v363, 2
    %v365 = vadd.f32 %v363, %v364
    %v366 = vrot.slane %v365, 1
    %v367 = vadd.f32 %v365, %v366
    %v368 = vmul.f32 %v252, %v252
    %v369 = vmul.f32 %v254, %v254
    %v370 = vmul.f32 %v257, %v257
    %v371 = vmul.f32 %v259, %v259
    %v372 = vmul.f32 %v262, %v262
    %v373 = vmul.f32 %v264, %v264
    %v374 = vmul.f32 %v267, %v267
    %v375 = vmul.f32 %v269, %v269
    %v376 = vmul.f32 %v272, %v272
    %v377 = vmul.f32 %v274, %v274
    %v378 = vmul.f32 %v277, %v277
    %v379 = vmul.f32 %v279, %v279
    %v380 = vmul.f32 %v282, %v282
    %v381 = vmul.f32 %v284, %v284
    %v382 = vmul.f32 %v287, %v287
    %v383 = vmul.f32 %v289, %v289
    %v384 = vmul.f32 %v292, %v292
    %v385 = vmul.f32 %v294, %v294
    %v386 = vmul.f32 %v297, %v297
    %v387 = vmul.f32 %v299, %v299
    %v388 = vmul.f32 %v302, %v302
    %v389 = vmul.f32 %v304, %v304
    %v390 = vmul.f32 %v307, %v307
    %v391 = vmul.f32 %v309, %v309
    %v392 = vmul.f32 %v312, %v312
    %v393 = vmul.f32 %v314, %v314
    %v394 = vmul.f32 %v317, %v317
    %v395 = vmul.f32 %v319, %v319
    %v396 = vmul.f32 %v322, %v322
    %v397 = vmul.f32 %v324, %v324
    %v398 = vmul.f32 %v327, %v327
    %v399 = vmul.f32 %v329, %v329
    %v400 = vadd.f32 %v368, %v369
    %v401 = vadd.f32 %v400, %v370
    %v402 = vadd.f32 %v401, %v371
    %v403 = vadd.f32 %v402, %v372
    %v404 = vadd.f32 %v403, %v373
    %v405 = vadd.f32 %v404, %v374
    %v406 = vadd.f32 %v405, %v375
    %v407 = vadd.f32 %v406, %v376
    %v408 = vadd.f32 %v407, %v377
    %v409 = vadd.f32 %v408, %v378
    %v410 = vadd.f32 %v409, %v379
    %v411 = vadd.f32 %v410, %v380
    %v412 = vadd.f32 %v411, %v381
    %v413 = vadd.f32 %v412, %v382
    %v414 = vadd.f32 %v413, %v383
    %v415 = vadd.f32 %v414, %v384
    %v416 = vadd.f32 %v415, %v385
    %v417 = vadd.f32 %v416, %v386
    %v418 = vadd.f32 %v417, %v387
    %v419 = vadd.f32 %v418, %v388
    %v420 = vadd.f32 %v419, %v389
    %v421 = vadd.f32 %v420, %v390
    %v422 = vadd.f32 %v421, %v391
    %v423 = vadd.f32 %v422, %v392
    %v424 = vadd.f32 %v423, %v393
    %v425 = vadd.f32 %v424, %v394
    %v426 = vadd.f32 %v425, %v395
    %v427 = vadd.f32 %v426, %v396
    %v428 = vadd.f32 %v427, %v397
    %v429 = vadd.f32 %v428, %v398
    %v430 = vadd.f32 %v429, %v399
    %v431 = vrot.slane %v430, 4
    %v432 = vadd.f32 %v430, %v431
    %v433 = vrot.slane %v432, 2
    %v434 = vadd.f32 %v432, %v433
    %v435 = vrot.slane %v434, 1
    %v436 = vadd.f32 %v434, %v435
    %v437 = vmul.f32 %v367, 0.00390625
    %v438 = vmul.f32 %v436, 0.00390625
    %v439 = vmul.f32 %v437, %v437
    %v440 = vsub.f32 %v438, %v439
    %v441 = vmax.f32 %v440, 0.0
    %v442 = vadd.f32 %v441, 1e-05
    %v443 = vrsqrt.pop %v442
    %v444 = vmul.f32 %v443, %v442
    %v445 = vmul.f32 %v444, %v443
    %v446 = vmul.f32 0.5, %v445
    %v447 = vsub.f32 1.5, %v446
    %v448 = vmul.f32 %v443, %v447
    %vm449 = vweird.f32 %v442
    %vm450 = vweird.f32 %v443
    %vm451 = vmor %vm449, %vm450
    %v452 = vsel %vm451, %v443, %v448
    %v453 = vld [vmem:[%s3] sm:$0x1]
    %v454 = vmul.f32 %v452, %v453
    %v455 = vsub.f32 %v252, %v437
    %v456 = vsub.f32 %v254, %v437
    %v457 = vsub.f32 %v257, %v437
    %v458 = vsub.f32 %v259, %v437
    %v459 = vsub.f32 %v262, %v437
    %v460 = vsub.f32 %v264, %v437
    %v461 = vsub.f32 %v267, %v437
    %v462 = vsub.f32 %v269, %v437
    %v463 = vsub.f32 %v272, %v437
    %v464 = vsub.f32 %v274, %v437
    %v465 = vsub.f32 %v277, %v437
    %v466 = vsub.f32 %v279, %v437
    %v467 = vsub.f32 %v282, %v437
    %v468 = vsub.f32 %v284, %v437
    %v469 = vsub.f32 %v287, %v437
    %v470 = vsub.f32 %v289, %v437
    %v471 = vsub.f32 %v292, %v437
    %v472 = vsub.f32 %v294, %v437
    %v473 = vsub.f32 %v297, %v437
    %v474 = vsub.f32 %v299, %v437
    %v475 = vsub.f32 %v302, %v437
    %v476 = vsub.f32 %v304, %v437
    %v477 = vsub.f32 %v307, %v437
    %v478 = vsub.f32 %v309, %v437
    %v479 = vsub.f32 %v312, %v437
    %v480 = vsub.f32 %v314, %v437
    %v481 = vsub.f32 %v317, %v437
    %v482 = vsub.f32 %v319, %v437
    %v483 = vsub.f32 %v322, %v437
    %v484 = vsub.f32 %v324, %v437
    %v485 = vsub.f32 %v327, %v437
    %v486 = vsub.f32 %v329, %v437
    %v487 = vperm.slane %v454, 0
    %v488 = vmul.f32 %v455, %v487
    %v489 = vmul.f32 %v456, %v487
    %v490 = vmul.f32 %v457, %v487
    %v491 = vmul.f32 %v458, %v487
    %v492 = vmul.f32 %v459, %v487
    %v493 = vmul.f32 %v460, %v487
    %v494 = vmul.f32 %v461, %v487
    %v495 = vmul.f32 %v462, %v487
    %v496 = vmul.f32 %v463, %v487
    %v497 = vmul.f32 %v464, %v487
    %v498 = vmul.f32 %v465, %v487
    %v499 = vmul.f32 %v466, %v487
    %v500 = vmul.f32 %v467, %v487
    %v501 = vmul.f32 %v468, %v487
    %v502 = vmul.f32 %v469, %v487
    %v503 = vmul.f32 %v470, %v487
    %v504 = vmul.f32 %v471, %v487
    %v505 = vmul.f32 %v472, %v487
    %v506 = vmul.f32 %v473, %v487
    %v507 = vmul.f32 %v474, %v487
    %v508 = vmul.f32 %v475, %v487
    %v509 = vmul.f32 %v476, %v487
    %v510 = vmul.f32 %v477, %v487
    %v511 = vmul.f32 %v478, %v487
    %v512 = vmul.f32 %v479, %v487
    %v513 = vmul.f32 %v480, %v487
    %v514 = vmul.f32 %v481, %v487
    %v515 = vmul.f32 %v482, %v487
    %v516 = vmul.f32 %v483, %v487
    %v517 = vmul.f32 %v484, %v487
    %v518 = vmul.f32 %v485, %v487
    %v519 = vmul.f32 %v486, %v487
    %v520 = vld [vmem:[%s4] sm:$0x1]
    %v522 = vperm.slane %v520, 0
    %v524 = vadd.f32 %v488, %v522
    %v525 = vadd.f32 %v489, %v522
    %v526 = vadd.f32 %v490, %v522
    %v527 = vadd.f32 %v491, %v522
    %v528 = vadd.f32 %v492, %v522
    %v529 = vadd.f32 %v493, %v522
    %v530 = vadd.f32 %v494, %v522
    %v531 = vadd.f32 %v495, %v522
    %v532 = vadd.f32 %v496, %v522
    %v533 = vadd.f32 %v497, %v522
    %v534 = vadd.f32 %v498, %v522
    %v535 = vadd.f32 %v499, %v522
    %v536 = vadd.f32 %v500, %v522
    %v537 = vadd.f32 %v501, %v522
    %v538 = vadd.f32 %v502, %v522
    %v539 = vadd.f32 %v503, %v522
    %v540 = vadd.f32 %v504, %v522
    %v541 = vadd.f32 %v505, %v522
    %v542 = vadd.f32 %v506, %v522
    %v543 = vadd.f32 %v507, %v522
    %v544 = vadd.f32 %v508, %v522
    %v545 = vadd.f32 %v509, %v522
    %v546 = vadd.f32 %v510, %v522
    %v547 = vadd.f32 %v511, %v522
    %v548 = vadd.f32 %v512, %v522
    %v549 = vadd.f32 %v513, %v522
    %v550 = vadd.f32 %v514, %v522
    %v551 = vadd.f32 %v515, %v522
    %v552 = vadd.f32 %v516, %v522
    %v553 = vadd.f32 %v517, %v522
    %v554 = vadd.f32 %v518, %v522
    %v555 = vadd.f32 %v519, %v522
    %v556 = vmax.f32 %v524, 0.0
    %v557 = vmax.f32 %v525, 0.0
    %v558 = vmax.f32 %v526, 0.0
    %v559 = vmax.f32 %v527, 0.0
    %v560 = vmax.f32 %v528, 0.0
    %v561 = vmax.f32 %v529, 0.0
    %v562 = vmax.f32 %v530, 0.0
    %v563 = vmax.f32 %v531, 0.0
    %v564 = vmax.f32 %v532, 0.0
    %v565 = vmax.f32 %v533, 0.0
    %v566 = vmax.f32 %v534, 0.0
    %v567 = vmax.f32 %v535, 0.0
    %v568 = vmax.f32 %v536, 0.0
    %v569 = vmax.f32 %v537, 0.0
    %v570 = vmax.f32 %v538, 0.0
    %v571 = vmax.f32 %v539, 0.0
    %v572 = vmax.f32 %v540, 0.0
    %v573 = vmax.f32 %v541, 0.0
    %v574 = vmax.f32 %v542, 0.0
    %v575 = vmax.f32 %v543, 0.0
    %v576 = vmax.f32 %v544, 0.0
    %v577 = vmax.f32 %v545, 0.0
    %v578 = vmax.f32 %v546, 0.0
    %v579 = vmax.f32 %v547, 0.0
    %v580 = vmax.f32 %v548, 0.0
    %v581 = vmax.f32 %v549, 0.0
    %v582 = vmax.f32 %v550, 0.0
    %v583 = vmax.f32 %v551, 0.0
    %v584 = vmax.f32 %v552, 0.0
    %v585 = vmax.f32 %v553, 0.0
    %v586 = vmax.f32 %v554, 0.0
    %v587 = vmax.f32 %v555, 0.0
    %v588 = vmul.f32 %v556, %v556
    %v589 = vmul.f32 %v557, %v557
    %v590 = vmul.f32 %v558, %v558
    %v591 = vmul.f32 %v559, %v559
    %v592 = vmul.f32 %v560, %v560
    %v593 = vmul.f32 %v561, %v561
    %v594 = vmul.f32 %v562, %v562
    %v595 = vmul.f32 %v563, %v563
    %v596 = vmul.f32 %v564, %v564
    %v597 = vmul.f32 %v565, %v565
    %v598 = vmul.f32 %v566, %v566
    %v599 = vmul.f32 %v567, %v567
    %v600 = vmul.f32 %v568, %v568
    %v601 = vmul.f32 %v569, %v569
    %v602 = vmul.f32 %v570, %v570
    %v603 = vmul.f32 %v571, %v571
    %v604 = vmul.f32 %v572, %v572
    %v605 = vmul.f32 %v573, %v573
    %v606 = vmul.f32 %v574, %v574
    %v607 = vmul.f32 %v575, %v575
    %v608 = vmul.f32 %v576, %v576
    %v609 = vmul.f32 %v577, %v577
    %v610 = vmul.f32 %v578, %v578
    %v611 = vmul.f32 %v579, %v579
    %v612 = vmul.f32 %v580, %v580
    %v613 = vmul.f32 %v581, %v581
    %v614 = vmul.f32 %v582, %v582
    %v615 = vmul.f32 %v583, %v583
    %v616 = vmul.f32 %v584, %v584
    %v617 = vmul.f32 %v585, %v585
    %v618 = vmul.f32 %v586, %v586
    %v619 = vmul.f32 %v587, %v587
    %620 = vadd.xlane.f32.xlu0 %v588
    %v621 = vpop.xlane.xlu0 %620
    %622 = vadd.xlane.f32.xlu0 %v589
    %v623 = vpop.xlane.xlu0 %622
    %624 = vadd.xlane.f32.xlu0 %v590
    %v625 = vpop.xlane.xlu0 %624
    %626 = vadd.xlane.f32.xlu0 %v591
    %v627 = vpop.xlane.xlu0 %626
    %628 = vadd.xlane.f32.xlu0 %v592
    %v629 = vpop.xlane.xlu0 %628
    %630 = vadd.xlane.f32.xlu0 %v593
    %v631 = vpop.xlane.xlu0 %630
    %632 = vadd.xlane.f32.xlu0 %v594
    %v633 = vpop.xlane.xlu0 %632
    %634 = vadd.xlane.f32.xlu0 %v595
    %v635 = vpop.xlane.xlu0 %634
    %636 = vadd.xlane.f32.xlu0 %v596
    %v637 = vpop.xlane.xlu0 %636
    %638 = vadd.xlane.f32.xlu0 %v597
    %v639 = vpop.xlane.xlu0 %638
    %640 = vadd.xlane.f32.xlu0 %v598
    %v641 = vpop.xlane.xlu0 %640
    %642 = vadd.xlane.f32.xlu0 %v599
    %v643 = vpop.xlane.xlu0 %642
    %644 = vadd.xlane.f32.xlu0 %v600
    %v645 = vpop.xlane.xlu0 %644
    %646 = vadd.xlane.f32.xlu0 %v601
    %v647 = vpop.xlane.xlu0 %646
    %648 = vadd.xlane.f32.xlu0 %v602
    %v649 = vpop.xlane.xlu0 %648
    %650 = vadd.xlane.f32.xlu0 %v603
    %v651 = vpop.xlane.xlu0 %650
    %652 = vadd.xlane.f32.xlu0 %v604
    %v653 = vpop.xlane.xlu0 %652
    %654 = vadd.xlane.f32.xlu0 %v605
    %v655 = vpop.xlane.xlu0 %654
    %656 = vadd.xlane.f32.xlu0 %v606
    %v657 = vpop.xlane.xlu0 %656
    %658 = vadd.xlane.f32.xlu0 %v607
    %v659 = vpop.xlane.xlu0 %658
    %660 = vadd.xlane.f32.xlu0 %v608
    %v661 = vpop.xlane.xlu0 %660
    %662 = vadd.xlane.f32.xlu0 %v609
    %v663 = vpop.xlane.xlu0 %662
    %664 = vadd.xlane.f32.xlu0 %v610
    %v665 = vpop.xlane.xlu0 %664
    %666 = vadd.xlane.f32.xlu0 %v611
    %v667 = vpop.xlane.xlu0 %666
    %668 = vadd.xlane.f32.xlu0 %v612
    %v669 = vpop.xlane.xlu0 %668
    %670 = vadd.xlane.f32.xlu0 %v613
    %v671 = vpop.xlane.xlu0 %670
    %672 = vadd.xlane.f32.xlu0 %v614
    %v673 = vpop.xlane.xlu0 %672
    %674 = vadd.xlane.f32.xlu0 %v615
    %v675 = vpop.xlane.xlu0 %674
    %676 = vadd.xlane.f32.xlu0 %v616
    %v677 = vpop.xlane.xlu0 %676
    %678 = vadd.xlane.f32.xlu0 %v617
    %v679 = vpop.xlane.xlu0 %678
    %680 = vadd.xlane.f32.xlu0 %v618
    %v681 = vpop.xlane.xlu0 %680
    %682 = vadd.xlane.f32.xlu0 %v619
    %v683 = vpop.xlane.xlu0 %682
    %v684 = vmax.f32 %v621, 1e-30
    %v685 = vmax.f32 %v623, 1e-30
    %v686 = vmax.f32 %v625, 1e-30
    %v687 = vmax.f32 %v627, 1e-30
    %v688 = vmax.f32 %v629, 1e-30
    %v689 = vmax.f32 %v631, 1e-30
    %v690 = vmax.f32 %v633, 1e-30
    %v691 = vmax.f32 %v635, 1e-30
    %v692 = vmax.f32 %v637, 1e-30
    %v693 = vmax.f32 %v639, 1e-30
    %v694 = vmax.f32 %v641, 1e-30
    %v695 = vmax.f32 %v643, 1e-30
    %v696 = vmax.f32 %v645, 1e-30
    %v697 = vmax.f32 %v647, 1e-30
    %v698 = vmax.f32 %v649, 1e-30
    %v699 = vmax.f32 %v651, 1e-30
    %v700 = vmax.f32 %v653, 1e-30
    %v701 = vmax.f32 %v655, 1e-30
    %v702 = vmax.f32 %v657, 1e-30
    %v703 = vmax.f32 %v659, 1e-30
    %v704 = vmax.f32 %v661, 1e-30
    %v705 = vmax.f32 %v663, 1e-30
    %v706 = vmax.f32 %v665, 1e-30
    %v707 = vmax.f32 %v667, 1e-30
    %v708 = vmax.f32 %v669, 1e-30
    %v709 = vmax.f32 %v671, 1e-30
    %v710 = vmax.f32 %v673, 1e-30
    %v711 = vmax.f32 %v675, 1e-30
    %v712 = vmax.f32 %v677, 1e-30
    %v713 = vmax.f32 %v679, 1e-30
    %v714 = vmax.f32 %v681, 1e-30
    %v715 = vmax.f32 %v683, 1e-30
    %v716 = vrsqrt.pop %v684
    %v717 = vmul.f32 %v716, %v684
    %v718 = vmul.f32 %v717, %v716
    %v719 = vmul.f32 0.5, %v718
    %v720 = vsub.f32 1.5, %v719
    %v721 = vmul.f32 %v716, %v720
    %vm722 = vweird.f32 %v684
    %vm723 = vweird.f32 %v716
    %vm724 = vmor %vm722, %vm723
    %v725 = vsel %vm724, %v716, %v721
    %v726 = vrsqrt.pop %v685
    %v727 = vmul.f32 %v726, %v685
    %v728 = vmul.f32 %v727, %v726
    %v729 = vmul.f32 0.5, %v728
    %v730 = vsub.f32 1.5, %v729
    %v731 = vmul.f32 %v726, %v730
    %vm732 = vweird.f32 %v685
    %vm733 = vweird.f32 %v726
    %vm734 = vmor %vm732, %vm733
    %v735 = vsel %vm734, %v726, %v731
    %v736 = vrsqrt.pop %v686
    %v737 = vmul.f32 %v736, %v686
    %v738 = vmul.f32 %v737, %v736
    %v739 = vmul.f32 0.5, %v738
    %v740 = vsub.f32 1.5, %v739
    %v741 = vmul.f32 %v736, %v740
    %vm742 = vweird.f32 %v686
    %vm743 = vweird.f32 %v736
    %vm744 = vmor %vm742, %vm743
    %v745 = vsel %vm744, %v736, %v741
    %v746 = vrsqrt.pop %v687
    %v747 = vmul.f32 %v746, %v687
    %v748 = vmul.f32 %v747, %v746
    %v749 = vmul.f32 0.5, %v748
    %v750 = vsub.f32 1.5, %v749
    %v751 = vmul.f32 %v746, %v750
    %vm752 = vweird.f32 %v687
    %vm753 = vweird.f32 %v746
    %vm754 = vmor %vm752, %vm753
    %v755 = vsel %vm754, %v746, %v751
    %v756 = vrsqrt.pop %v688
    %v757 = vmul.f32 %v756, %v688
    %v758 = vmul.f32 %v757, %v756
    %v759 = vmul.f32 0.5, %v758
    %v760 = vsub.f32 1.5, %v759
    %v761 = vmul.f32 %v756, %v760
    %vm762 = vweird.f32 %v688
    %vm763 = vweird.f32 %v756
    %vm764 = vmor %vm762, %vm763
    %v765 = vsel %vm764, %v756, %v761
    %v766 = vrsqrt.pop %v689
    %v767 = vmul.f32 %v766, %v689
    %v768 = vmul.f32 %v767, %v766
    %v769 = vmul.f32 0.5, %v768
    %v770 = vsub.f32 1.5, %v769
    %v771 = vmul.f32 %v766, %v770
    %vm772 = vweird.f32 %v689
    %vm773 = vweird.f32 %v766
    %vm774 = vmor %vm772, %vm773
    %v775 = vsel %vm774, %v766, %v771
    %v776 = vrsqrt.pop %v690
    %v777 = vmul.f32 %v776, %v690
    %v778 = vmul.f32 %v777, %v776
    %v779 = vmul.f32 0.5, %v778
    %v780 = vsub.f32 1.5, %v779
    %v781 = vmul.f32 %v776, %v780
    %vm782 = vweird.f32 %v690
    %vm783 = vweird.f32 %v776
    %vm784 = vmor %vm782, %vm783
    %v785 = vsel %vm784, %v776, %v781
    %v786 = vrsqrt.pop %v691
    %v787 = vmul.f32 %v786, %v691
    %v788 = vmul.f32 %v787, %v786
    %v789 = vmul.f32 0.5, %v788
    %v790 = vsub.f32 1.5, %v789
    %v791 = vmul.f32 %v786, %v790
    %vm792 = vweird.f32 %v691
    %vm793 = vweird.f32 %v786
    %vm794 = vmor %vm792, %vm793
    %v795 = vsel %vm794, %v786, %v791
    %v796 = vrsqrt.pop %v692
    %v797 = vmul.f32 %v796, %v692
    %v798 = vmul.f32 %v797, %v796
    %v799 = vmul.f32 0.5, %v798
    %v800 = vsub.f32 1.5, %v799
    %v801 = vmul.f32 %v796, %v800
    %vm802 = vweird.f32 %v692
    %vm803 = vweird.f32 %v796
    %vm804 = vmor %vm802, %vm803
    %v805 = vsel %vm804, %v796, %v801
    %v806 = vrsqrt.pop %v693
    %v807 = vmul.f32 %v806, %v693
    %v808 = vmul.f32 %v807, %v806
    %v809 = vmul.f32 0.5, %v808
    %v810 = vsub.f32 1.5, %v809
    %v811 = vmul.f32 %v806, %v810
    %vm812 = vweird.f32 %v693
    %vm813 = vweird.f32 %v806
    %vm814 = vmor %vm812, %vm813
    %v815 = vsel %vm814, %v806, %v811
    %v816 = vrsqrt.pop %v694
    %v817 = vmul.f32 %v816, %v694
    %v818 = vmul.f32 %v817, %v816
    %v819 = vmul.f32 0.5, %v818
    %v820 = vsub.f32 1.5, %v819
    %v821 = vmul.f32 %v816, %v820
    %vm822 = vweird.f32 %v694
    %vm823 = vweird.f32 %v816
    %vm824 = vmor %vm822, %vm823
    %v825 = vsel %vm824, %v816, %v821
    %v826 = vrsqrt.pop %v695
    %v827 = vmul.f32 %v826, %v695
    %v828 = vmul.f32 %v827, %v826
    %v829 = vmul.f32 0.5, %v828
    %v830 = vsub.f32 1.5, %v829
    %v831 = vmul.f32 %v826, %v830
    %vm832 = vweird.f32 %v695
    %vm833 = vweird.f32 %v826
    %vm834 = vmor %vm832, %vm833
    %v835 = vsel %vm834, %v826, %v831
    %v836 = vrsqrt.pop %v696
    %v837 = vmul.f32 %v836, %v696
    %v838 = vmul.f32 %v837, %v836
    %v839 = vmul.f32 0.5, %v838
    %v840 = vsub.f32 1.5, %v839
    %v841 = vmul.f32 %v836, %v840
    %vm842 = vweird.f32 %v696
    %vm843 = vweird.f32 %v836
    %vm844 = vmor %vm842, %vm843
    %v845 = vsel %vm844, %v836, %v841
    %v846 = vrsqrt.pop %v697
    %v847 = vmul.f32 %v846, %v697
    %v848 = vmul.f32 %v847, %v846
    %v849 = vmul.f32 0.5, %v848
    %v850 = vsub.f32 1.5, %v849
    %v851 = vmul.f32 %v846, %v850
    %vm852 = vweird.f32 %v697
    %vm853 = vweird.f32 %v846
    %vm854 = vmor %vm852, %vm853
    %v855 = vsel %vm854, %v846, %v851
    %v856 = vrsqrt.pop %v698
    %v857 = vmul.f32 %v856, %v698
    %v858 = vmul.f32 %v857, %v856
    %v859 = vmul.f32 0.5, %v858
    %v860 = vsub.f32 1.5, %v859
    %v861 = vmul.f32 %v856, %v860
    %vm862 = vweird.f32 %v698
    %vm863 = vweird.f32 %v856
    %vm864 = vmor %vm862, %vm863
    %v865 = vsel %vm864, %v856, %v861
    %v866 = vrsqrt.pop %v699
    %v867 = vmul.f32 %v866, %v699
    %v868 = vmul.f32 %v867, %v866
    %v869 = vmul.f32 0.5, %v868
    %v870 = vsub.f32 1.5, %v869
    %v871 = vmul.f32 %v866, %v870
    %vm872 = vweird.f32 %v699
    %vm873 = vweird.f32 %v866
    %vm874 = vmor %vm872, %vm873
    %v875 = vsel %vm874, %v866, %v871
    %v876 = vrsqrt.pop %v700
    %v877 = vmul.f32 %v876, %v700
    %v878 = vmul.f32 %v877, %v876
    %v879 = vmul.f32 0.5, %v878
    %v880 = vsub.f32 1.5, %v879
    %v881 = vmul.f32 %v876, %v880
    %vm882 = vweird.f32 %v700
    %vm883 = vweird.f32 %v876
    %vm884 = vmor %vm882, %vm883
    %v885 = vsel %vm884, %v876, %v881
    %v886 = vrsqrt.pop %v701
    %v887 = vmul.f32 %v886, %v701
    %v888 = vmul.f32 %v887, %v886
    %v889 = vmul.f32 0.5, %v888
    %v890 = vsub.f32 1.5, %v889
    %v891 = vmul.f32 %v886, %v890
    %vm892 = vweird.f32 %v701
    %vm893 = vweird.f32 %v886
    %vm894 = vmor %vm892, %vm893
    %v895 = vsel %vm894, %v886, %v891
    %v896 = vrsqrt.pop %v702
    %v897 = vmul.f32 %v896, %v702
    %v898 = vmul.f32 %v897, %v896
    %v899 = vmul.f32 0.5, %v898
    %v900 = vsub.f32 1.5, %v899
    %v901 = vmul.f32 %v896, %v900
    %vm902 = vweird.f32 %v702
    %vm903 = vweird.f32 %v896
    %vm904 = vmor %vm902, %vm903
    %v905 = vsel %vm904, %v896, %v901
    %v906 = vrsqrt.pop %v703
    %v907 = vmul.f32 %v906, %v703
    %v908 = vmul.f32 %v907, %v906
    %v909 = vmul.f32 0.5, %v908
    %v910 = vsub.f32 1.5, %v909
    %v911 = vmul.f32 %v906, %v910
    %vm912 = vweird.f32 %v703
    %vm913 = vweird.f32 %v906
    %vm914 = vmor %vm912, %vm913
    %v915 = vsel %vm914, %v906, %v911
    %v916 = vrsqrt.pop %v704
    %v917 = vmul.f32 %v916, %v704
    %v918 = vmul.f32 %v917, %v916
    %v919 = vmul.f32 0.5, %v918
    %v920 = vsub.f32 1.5, %v919
    %v921 = vmul.f32 %v916, %v920
    %vm922 = vweird.f32 %v704
    %vm923 = vweird.f32 %v916
    %vm924 = vmor %vm922, %vm923
    %v925 = vsel %vm924, %v916, %v921
    %v926 = vrsqrt.pop %v705
    %v927 = vmul.f32 %v926, %v705
    %v928 = vmul.f32 %v927, %v926
    %v929 = vmul.f32 0.5, %v928
    %v930 = vsub.f32 1.5, %v929
    %v931 = vmul.f32 %v926, %v930
    %vm932 = vweird.f32 %v705
    %vm933 = vweird.f32 %v926
    %vm934 = vmor %vm932, %vm933
    %v935 = vsel %vm934, %v926, %v931
    %v936 = vrsqrt.pop %v706
    %v937 = vmul.f32 %v936, %v706
    %v938 = vmul.f32 %v937, %v936
    %v939 = vmul.f32 0.5, %v938
    %v940 = vsub.f32 1.5, %v939
    %v941 = vmul.f32 %v936, %v940
    %vm942 = vweird.f32 %v706
    %vm943 = vweird.f32 %v936
    %vm944 = vmor %vm942, %vm943
    %v945 = vsel %vm944, %v936, %v941
    %v946 = vrsqrt.pop %v707
    %v947 = vmul.f32 %v946, %v707
    %v948 = vmul.f32 %v947, %v946
    %v949 = vmul.f32 0.5, %v948
    %v950 = vsub.f32 1.5, %v949
    %v951 = vmul.f32 %v946, %v950
    %vm952 = vweird.f32 %v707
    %vm953 = vweird.f32 %v946
    %vm954 = vmor %vm952, %vm953
    %v955 = vsel %vm954, %v946, %v951
    %v956 = vrsqrt.pop %v708
    %v957 = vmul.f32 %v956, %v708
    %v958 = vmul.f32 %v957, %v956
    %v959 = vmul.f32 0.5, %v958
    %v960 = vsub.f32 1.5, %v959
    %v961 = vmul.f32 %v956, %v960
    %vm962 = vweird.f32 %v708
    %vm963 = vweird.f32 %v956
    %vm964 = vmor %vm962, %vm963
    %v965 = vsel %vm964, %v956, %v961
    %v966 = vrsqrt.pop %v709
    %v967 = vmul.f32 %v966, %v709
    %v968 = vmul.f32 %v967, %v966
    %v969 = vmul.f32 0.5, %v968
    %v970 = vsub.f32 1.5, %v969
    %v971 = vmul.f32 %v966, %v970
    %vm972 = vweird.f32 %v709
    %vm973 = vweird.f32 %v966
    %vm974 = vmor %vm972, %vm973
    %v975 = vsel %vm974, %v966, %v971
    %v976 = vrsqrt.pop %v710
    %v977 = vmul.f32 %v976, %v710
    %v978 = vmul.f32 %v977, %v976
    %v979 = vmul.f32 0.5, %v978
    %v980 = vsub.f32 1.5, %v979
    %v981 = vmul.f32 %v976, %v980
    %vm982 = vweird.f32 %v710
    %vm983 = vweird.f32 %v976
    %vm984 = vmor %vm982, %vm983
    %v985 = vsel %vm984, %v976, %v981
    %v986 = vrsqrt.pop %v711
    %v987 = vmul.f32 %v986, %v711
    %v988 = vmul.f32 %v987, %v986
    %v989 = vmul.f32 0.5, %v988
    %v990 = vsub.f32 1.5, %v989
    %v991 = vmul.f32 %v986, %v990
    %vm992 = vweird.f32 %v711
    %vm993 = vweird.f32 %v986
    %vm994 = vmor %vm992, %vm993
    %v995 = vsel %vm994, %v986, %v991
    %v996 = vrsqrt.pop %v712
    %v997 = vmul.f32 %v996, %v712
    %v998 = vmul.f32 %v997, %v996
    %v999 = vmul.f32 0.5, %v998
    %v1000 = vsub.f32 1.5, %v999
    %v1001 = vmul.f32 %v996, %v1000
    %vm1002 = vweird.f32 %v712
    %vm1003 = vweird.f32 %v996
    %vm1004 = vmor %vm1002, %vm1003
    %v1005 = vsel %vm1004, %v996, %v1001
    %v1006 = vrsqrt.pop %v713
    %v1007 = vmul.f32 %v1006, %v713
    %v1008 = vmul.f32 %v1007, %v1006
    %v1009 = vmul.f32 0.5, %v1008
    %v1010 = vsub.f32 1.5, %v1009
    %v1011 = vmul.f32 %v1006, %v1010
    %vm1012 = vweird.f32 %v713
    %vm1013 = vweird.f32 %v1006
    %vm1014 = vmor %vm1012, %vm1013
    %v1015 = vsel %vm1014, %v1006, %v1011
    %v1016 = vrsqrt.pop %v714
    %v1017 = vmul.f32 %v1016, %v714
    %v1018 = vmul.f32 %v1017, %v1016
    %v1019 = vmul.f32 0.5, %v1018
    %v1020 = vsub.f32 1.5, %v1019
    %v1021 = vmul.f32 %v1016, %v1020
    %vm1022 = vweird.f32 %v714
    %vm1023 = vweird.f32 %v1016
    %vm1024 = vmor %vm1022, %vm1023
    %v1025 = vsel %vm1024, %v1016, %v1021
    %v1026 = vrsqrt.pop %v715
    %v1027 = vmul.f32 %v1026, %v715
    %v1028 = vmul.f32 %v1027, %v1026
    %v1029 = vmul.f32 0.5, %v1028
    %v1030 = vsub.f32 1.5, %v1029
    %v1031 = vmul.f32 %v1026, %v1030
    %vm1032 = vweird.f32 %v715
    %vm1033 = vweird.f32 %v1026
    %vm1034 = vmor %vm1032, %vm1033
    %v1035 = vsel %vm1034, %v1026, %v1031
    %v1036 = vmul.f32 %v621, %v725
    %v1037 = vmul.f32 %v623, %v735
    %v1038 = vmul.f32 %v625, %v745
    %v1039 = vmul.f32 %v627, %v755
    %v1040 = vmul.f32 %v629, %v765
    %v1041 = vmul.f32 %v631, %v775
    %v1042 = vmul.f32 %v633, %v785
    %v1043 = vmul.f32 %v635, %v795
    %v1044 = vmul.f32 %v637, %v805
    %v1045 = vmul.f32 %v639, %v815
    %v1046 = vmul.f32 %v641, %v825
    %v1047 = vmul.f32 %v643, %v835
    %v1048 = vmul.f32 %v645, %v845
    %v1049 = vmul.f32 %v647, %v855
    %v1050 = vmul.f32 %v649, %v865
    %v1051 = vmul.f32 %v651, %v875
    %v1052 = vmul.f32 %v653, %v885
    %v1053 = vmul.f32 %v655, %v895
    %v1054 = vmul.f32 %v657, %v905
    %v1055 = vmul.f32 %v659, %v915
    %v1056 = vmul.f32 %v661, %v925
    %v1057 = vmul.f32 %v663, %v935
    %v1058 = vmul.f32 %v665, %v945
    %v1059 = vmul.f32 %v667, %v955
    %v1060 = vmul.f32 %v669, %v965
    %v1061 = vmul.f32 %v671, %v975
    %v1062 = vmul.f32 %v673, %v985
    %v1063 = vmul.f32 %v675, %v995
    %v1064 = vmul.f32 %v677, %v1005
    %v1065 = vmul.f32 %v679, %v1015
    %v1066 = vmul.f32 %v681, %v1025
    %v1067 = vmul.f32 %v683, %v1035
    %v1068 = vmul.f32 %v1036, 0.031622775
    %v1069 = vmul.f32 %v1037, 0.031622775
    %v1070 = vmul.f32 %v1038, 0.031622775
    %v1071 = vmul.f32 %v1039, 0.031622775
    %v1072 = vmul.f32 %v1040, 0.031622775
    %v1073 = vmul.f32 %v1041, 0.031622775
    %v1074 = vmul.f32 %v1042, 0.031622775
    %v1075 = vmul.f32 %v1043, 0.031622775
    %v1076 = vmul.f32 %v1044, 0.031622775
    %v1077 = vmul.f32 %v1045, 0.031622775
    %v1078 = vmul.f32 %v1046, 0.031622775
    %v1079 = vmul.f32 %v1047, 0.031622775
    %v1080 = vmul.f32 %v1048, 0.031622775
    %v1081 = vmul.f32 %v1049, 0.031622775
    %v1082 = vmul.f32 %v1050, 0.031622775
    %v1083 = vmul.f32 %v1051, 0.031622775
    %v1084 = vmul.f32 %v1052, 0.031622775
    %v1085 = vmul.f32 %v1053, 0.031622775
    %v1086 = vmul.f32 %v1054, 0.031622775
    %v1087 = vmul.f32 %v1055, 0.031622775
    %v1088 = vmul.f32 %v1056, 0.031622775
    %v1089 = vmul.f32 %v1057, 0.031622775
    %v1090 = vmul.f32 %v1058, 0.031622775
    %v1091 = vmul.f32 %v1059, 0.031622775
    %v1092 = vmul.f32 %v1060, 0.031622775
    %v1093 = vmul.f32 %v1061, 0.031622775
    %v1094 = vmul.f32 %v1062, 0.031622775
    %v1095 = vmul.f32 %v1063, 0.031622775
    %v1096 = vmul.f32 %v1064, 0.031622775
    %v1097 = vmul.f32 %v1065, 0.031622775
    %v1098 = vmul.f32 %v1066, 0.031622775
    %v1099 = vmul.f32 %v1067, 0.031622775
    %v1100 = vmin.f32 %v1068, 0.99999
    %v1101 = vmin.f32 %v1069, 0.99999
    %v1102 = vmin.f32 %v1070, 0.99999
    %v1103 = vmin.f32 %v1071, 0.99999
    %v1104 = vmin.f32 %v1072, 0.99999
    %v1105 = vmin.f32 %v1073, 0.99999
    %v1106 = vmin.f32 %v1074, 0.99999
    %v1107 = vmin.f32 %v1075, 0.99999
    %v1108 = vmin.f32 %v1076, 0.99999
    %v1109 = vmin.f32 %v1077, 0.99999
    %v1110 = vmin.f32 %v1078, 0.99999
    %v1111 = vmin.f32 %v1079, 0.99999
    %v1112 = vmin.f32 %v1080, 0.99999
    %v1113 = vmin.f32 %v1081, 0.99999
    %v1114 = vmin.f32 %v1082, 0.99999
    %v1115 = vmin.f32 %v1083, 0.99999
    %v1116 = vmin.f32 %v1084, 0.99999
    %v1117 = vmin.f32 %v1085, 0.99999
    %v1118 = vmin.f32 %v1086, 0.99999
    %v1119 = vmin.f32 %v1087, 0.99999
    %v1120 = vmin.f32 %v1088, 0.99999
    %v1121 = vmin.f32 %v1089, 0.99999
    %v1122 = vmin.f32 %v1090, 0.99999
    %v1123 = vmin.f32 %v1091, 0.99999
    %v1124 = vmin.f32 %v1092, 0.99999
    %v1125 = vmin.f32 %v1093, 0.99999
    %v1126 = vmin.f32 %v1094, 0.99999
    %v1127 = vmin.f32 %v1095, 0.99999
    %v1128 = vmin.f32 %v1096, 0.99999
    %v1129 = vmin.f32 %v1097, 0.99999
    %v1130 = vmin.f32 %v1098, 0.99999
    %v1131 = vmin.f32 %v1099, 0.99999
    %v1132 = vadd.f32 %v1100, 1.0
    %v1133 = vadd.f32 %v1101, 1.0
    %v1134 = vadd.f32 %v1102, 1.0
    %v1135 = vadd.f32 %v1103, 1.0
    %v1136 = vadd.f32 %v1104, 1.0
    %v1137 = vadd.f32 %v1105, 1.0
    %v1138 = vadd.f32 %v1106, 1.0
    %v1139 = vadd.f32 %v1107, 1.0
    %v1140 = vadd.f32 %v1108, 1.0
    %v1141 = vadd.f32 %v1109, 1.0
    %v1142 = vadd.f32 %v1110, 1.0
    %v1143 = vadd.f32 %v1111, 1.0
    %v1144 = vadd.f32 %v1112, 1.0
    %v1145 = vadd.f32 %v1113, 1.0
    %v1146 = vadd.f32 %v1114, 1.0
    %v1147 = vadd.f32 %v1115, 1.0
    %v1148 = vadd.f32 %v1116, 1.0
    %v1149 = vadd.f32 %v1117, 1.0
    %v1150 = vadd.f32 %v1118, 1.0
    %v1151 = vadd.f32 %v1119, 1.0
    %v1152 = vadd.f32 %v1120, 1.0
    %v1153 = vadd.f32 %v1121, 1.0
    %v1154 = vadd.f32 %v1122, 1.0
    %v1155 = vadd.f32 %v1123, 1.0
    %v1156 = vadd.f32 %v1124, 1.0
    %v1157 = vadd.f32 %v1125, 1.0
    %v1158 = vadd.f32 %v1126, 1.0
    %v1159 = vadd.f32 %v1127, 1.0
    %v1160 = vadd.f32 %v1128, 1.0
    %v1161 = vadd.f32 %v1129, 1.0
    %v1162 = vadd.f32 %v1130, 1.0
    %v1163 = vadd.f32 %v1131, 1.0
    %v1164 = vsub.f32 1.0, %v1100
    %v1165 = vsub.f32 1.0, %v1101
    %v1166 = vsub.f32 1.0, %v1102
    %v1167 = vsub.f32 1.0, %v1103
    %v1168 = vsub.f32 1.0, %v1104
    %v1169 = vsub.f32 1.0, %v1105
    %v1170 = vsub.f32 1.0, %v1106
    %v1171 = vsub.f32 1.0, %v1107
    %v1172 = vsub.f32 1.0, %v1108
    %v1173 = vsub.f32 1.0, %v1109
    %v1174 = vsub.f32 1.0, %v1110
    %v1175 = vsub.f32 1.0, %v1111
    %v1176 = vsub.f32 1.0, %v1112
    %v1177 = vsub.f32 1.0, %v1113
    %v1178 = vsub.f32 1.0, %v1114
    %v1179 = vsub.f32 1.0, %v1115
    %v1180 = vsub.f32 1.0, %v1116
    %v1181 = vsub.f32 1.0, %v1117
    %v1182 = vsub.f32 1.0, %v1118
    %v1183 = vsub.f32 1.0, %v1119
    %v1184 = vsub.f32 1.0, %v1120
    %v1185 = vsub.f32 1.0, %v1121
    %v1186 = vsub.f32 1.0, %v1122
    %v1187 = vsub.f32 1.0, %v1123
    %v1188 = vsub.f32 1.0, %v1124
    %v1189 = vsub.f32 1.0, %v1125
    %v1190 = vsub.f32 1.0, %v1126
    %v1191 = vsub.f32 1.0, %v1127
    %v1192 = vsub.f32 1.0, %v1128
    %v1193 = vsub.f32 1.0, %v1129
    %v1194 = vsub.f32 1.0, %v1130
    %v1195 = vsub.f32 1.0, %v1131
    %v1196 = vrcp.pop %v1164
    %v1197 = vmul.f32 %v1164, %v1196
    %v1198 = vsub.f32 1.0, %v1197
    %v1199 = vmul.f32 %v1196, %v1198
    %v1200 = vadd.f32 %v1196, %v1199
    %vm1201 = vweird.f32 %v1164
    %vm1202 = vweird.f32 %v1196
    %vm1203 = vmor %vm1201, %vm1202
    %v1204 = vsel %vm1203, %v1196, %v1200
    %v1205 = vand.u32 2147483647, %v1164
    %vm1206 = vcmp.eq.f32.partialorder %v1205, 8.507059e+37
    %v1207 = vand.u32 %v1164, 2147483648
    %v1208 = vor.u32 1.1754944e-38, %v1207
    %v1209 = vsel %vm1206, %v1208, %v1204
    %v1210 = vmul.f32 %v1132, %v1209
    %v1211 = vrcp.pop %v1165
    %v1212 = vmul.f32 %v1165, %v1211
    %v1213 = vsub.f32 1.0, %v1212
    %v1214 = vmul.f32 %v1211, %v1213
    %v1215 = vadd.f32 %v1211, %v1214
    %vm1216 = vweird.f32 %v1165
    %vm1217 = vweird.f32 %v1211
    %vm1218 = vmor %vm1216, %vm1217
    %v1219 = vsel %vm1218, %v1211, %v1215
    %v1220 = vand.u32 2147483647, %v1165
    %vm1221 = vcmp.eq.f32.partialorder %v1220, 8.507059e+37
    %v1222 = vand.u32 %v1165, 2147483648
    %v1223 = vor.u32 1.1754944e-38, %v1222
    %v1224 = vsel %vm1221, %v1223, %v1219
    %v1225 = vmul.f32 %v1133, %v1224
    %v1226 = vrcp.pop %v1166
    %v1227 = vmul.f32 %v1166, %v1226
    %v1228 = vsub.f32 1.0, %v1227
    %v1229 = vmul.f32 %v1226, %v1228
    %v1230 = vadd.f32 %v1226, %v1229
    %vm1231 = vweird.f32 %v1166
    %vm1232 = vweird.f32 %v1226
    %vm1233 = vmor %vm1231, %vm1232
    %v1234 = vsel %vm1233, %v1226, %v1230
    %v1235 = vand.u32 2147483647, %v1166
    %vm1236 = vcmp.eq.f32.partialorder %v1235, 8.507059e+37
    %v1237 = vand.u32 %v1166, 2147483648
    %v1238 = vor.u32 1.1754944e-38, %v1237
    %v1239 = vsel %vm1236, %v1238, %v1234
    %v1240 = vmul.f32 %v1134, %v1239
    %v1241 = vrcp.pop %v1167
    %v1242 = vmul.f32 %v1167, %v1241
    %v1243 = vsub.f32 1.0, %v1242
    %v1244 = vmul.f32 %v1241, %v1243
    %v1245 = vadd.f32 %v1241, %v1244
    %vm1246 = vweird.f32 %v1167
    %vm1247 = vweird.f32 %v1241
    %vm1248 = vmor %vm1246, %vm1247
    %v1249 = vsel %vm1248, %v1241, %v1245
    %v1250 = vand.u32 2147483647, %v1167
    %vm1251 = vcmp.eq.f32.partialorder %v1250, 8.507059e+37
    %v1252 = vand.u32 %v1167, 2147483648
    %v1253 = vor.u32 1.1754944e-38, %v1252
    %v1254 = vsel %vm1251, %v1253, %v1249
    %v1255 = vmul.f32 %v1135, %v1254
    %v1256 = vrcp.pop %v1168
    %v1257 = vmul.f32 %v1168, %v1256
    %v1258 = vsub.f32 1.0, %v1257
    %v1259 = vmul.f32 %v1256, %v1258
    %v1260 = vadd.f32 %v1256, %v1259
    %vm1261 = vweird.f32 %v1168
    %vm1262 = vweird.f32 %v1256
    %vm1263 = vmor %vm1261, %vm1262
    %v1264 = vsel %vm1263, %v1256, %v1260
    %v1265 = vand.u32 2147483647, %v1168
    %vm1266 = vcmp.eq.f32.partialorder %v1265, 8.507059e+37
    %v1267 = vand.u32 %v1168, 2147483648
    %v1268 = vor.u32 1.1754944e-38, %v1267
    %v1269 = vsel %vm1266, %v1268, %v1264
    %v1270 = vmul.f32 %v1136, %v1269
    %v1271 = vrcp.pop %v1169
    %v1272 = vmul.f32 %v1169, %v1271
    %v1273 = vsub.f32 1.0, %v1272
    %v1274 = vmul.f32 %v1271, %v1273
    %v1275 = vadd.f32 %v1271, %v1274
    %vm1276 = vweird.f32 %v1169
    %vm1277 = vweird.f32 %v1271
    %vm1278 = vmor %vm1276, %vm1277
    %v1279 = vsel %vm1278, %v1271, %v1275
    %v1280 = vand.u32 2147483647, %v1169
    %vm1281 = vcmp.eq.f32.partialorder %v1280, 8.507059e+37
    %v1282 = vand.u32 %v1169, 2147483648
    %v1283 = vor.u32 1.1754944e-38, %v1282
    %v1284 = vsel %vm1281, %v1283, %v1279
    %v1285 = vmul.f32 %v1137, %v1284
    %v1286 = vrcp.pop %v1170
    %v1287 = vmul.f32 %v1170, %v1286
    %v1288 = vsub.f32 1.0, %v1287
    %v1289 = vmul.f32 %v1286, %v1288
    %v1290 = vadd.f32 %v1286, %v1289
    %vm1291 = vweird.f32 %v1170
    %vm1292 = vweird.f32 %v1286
    %vm1293 = vmor %vm1291, %vm1292
    %v1294 = vsel %vm1293, %v1286, %v1290
    %v1295 = vand.u32 2147483647, %v1170
    %vm1296 = vcmp.eq.f32.partialorder %v1295, 8.507059e+37
    %v1297 = vand.u32 %v1170, 2147483648
    %v1298 = vor.u32 1.1754944e-38, %v1297
    %v1299 = vsel %vm1296, %v1298, %v1294
    %v1300 = vmul.f32 %v1138, %v1299
    %v1301 = vrcp.pop %v1171
    %v1302 = vmul.f32 %v1171, %v1301
    %v1303 = vsub.f32 1.0, %v1302
    %v1304 = vmul.f32 %v1301, %v1303
    %v1305 = vadd.f32 %v1301, %v1304
    %vm1306 = vweird.f32 %v1171
    %vm1307 = vweird.f32 %v1301
    %vm1308 = vmor %vm1306, %vm1307
    %v1309 = vsel %vm1308, %v1301, %v1305
    %v1310 = vand.u32 2147483647, %v1171
    %vm1311 = vcmp.eq.f32.partialorder %v1310, 8.507059e+37
    %v1312 = vand.u32 %v1171, 2147483648
    %v1313 = vor.u32 1.1754944e-38, %v1312
    %v1314 = vsel %vm1311, %v1313, %v1309
    %v1315 = vmul.f32 %v1139, %v1314
    %v1316 = vrcp.pop %v1172
    %v1317 = vmul.f32 %v1172, %v1316
    %v1318 = vsub.f32 1.0, %v1317
    %v1319 = vmul.f32 %v1316, %v1318
    %v1320 = vadd.f32 %v1316, %v1319
    %vm1321 = vweird.f32 %v1172
    %vm1322 = vweird.f32 %v1316
    %vm1323 = vmor %vm1321, %vm1322
    %v1324 = vsel %vm1323, %v1316, %v1320
    %v1325 = vand.u32 2147483647, %v1172
    %vm1326 = vcmp.eq.f32.partialorder %v1325, 8.507059e+37
    %v1327 = vand.u32 %v1172, 2147483648
    %v1328 = vor.u32 1.1754944e-38, %v1327
    %v1329 = vsel %vm1326, %v1328, %v1324
    %v1330 = vmul.f32 %v1140, %v1329
    %v1331 = vrcp.pop %v1173
    %v1332 = vmul.f32 %v1173, %v1331
    %v1333 = vsub.f32 1.0, %v1332
    %v1334 = vmul.f32 %v1331, %v1333
    %v1335 = vadd.f32 %v1331, %v1334
    %vm1336 = vweird.f32 %v1173
    %vm1337 = vweird.f32 %v1331
    %vm1338 = vmor %vm1336, %vm1337
    %v1339 = vsel %vm1338, %v1331, %v1335
    %v1340 = vand.u32 2147483647, %v1173
    %vm1341 = vcmp.eq.f32.partialorder %v1340, 8.507059e+37
    %v1342 = vand.u32 %v1173, 2147483648
    %v1343 = vor.u32 1.1754944e-38, %v1342
    %v1344 = vsel %vm1341, %v1343, %v1339
    %v1345 = vmul.f32 %v1141, %v1344
    %v1346 = vrcp.pop %v1174
    %v1347 = vmul.f32 %v1174, %v1346
    %v1348 = vsub.f32 1.0, %v1347
    %v1349 = vmul.f32 %v1346, %v1348
    %v1350 = vadd.f32 %v1346, %v1349
    %vm1351 = vweird.f32 %v1174
    %vm1352 = vweird.f32 %v1346
    %vm1353 = vmor %vm1351, %vm1352
    %v1354 = vsel %vm1353, %v1346, %v1350
    %v1355 = vand.u32 2147483647, %v1174
    %vm1356 = vcmp.eq.f32.partialorder %v1355, 8.507059e+37
    %v1357 = vand.u32 %v1174, 2147483648
    %v1358 = vor.u32 1.1754944e-38, %v1357
    %v1359 = vsel %vm1356, %v1358, %v1354
    %v1360 = vmul.f32 %v1142, %v1359
    %v1361 = vrcp.pop %v1175
    %v1362 = vmul.f32 %v1175, %v1361
    %v1363 = vsub.f32 1.0, %v1362
    %v1364 = vmul.f32 %v1361, %v1363
    %v1365 = vadd.f32 %v1361, %v1364
    %vm1366 = vweird.f32 %v1175
    %vm1367 = vweird.f32 %v1361
    %vm1368 = vmor %vm1366, %vm1367
    %v1369 = vsel %vm1368, %v1361, %v1365
    %v1370 = vand.u32 2147483647, %v1175
    %vm1371 = vcmp.eq.f32.partialorder %v1370, 8.507059e+37
    %v1372 = vand.u32 %v1175, 2147483648
    %v1373 = vor.u32 1.1754944e-38, %v1372
    %v1374 = vsel %vm1371, %v1373, %v1369
    %v1375 = vmul.f32 %v1143, %v1374
    %v1376 = vrcp.pop %v1176
    %v1377 = vmul.f32 %v1176, %v1376
    %v1378 = vsub.f32 1.0, %v1377
    %v1379 = vmul.f32 %v1376, %v1378
    %v1380 = vadd.f32 %v1376, %v1379
    %vm1381 = vweird.f32 %v1176
    %vm1382 = vweird.f32 %v1376
    %vm1383 = vmor %vm1381, %vm1382
    %v1384 = vsel %vm1383, %v1376, %v1380
    %v1385 = vand.u32 2147483647, %v1176
    %vm1386 = vcmp.eq.f32.partialorder %v1385, 8.507059e+37
    %v1387 = vand.u32 %v1176, 2147483648
    %v1388 = vor.u32 1.1754944e-38, %v1387
    %v1389 = vsel %vm1386, %v1388, %v1384
    %v1390 = vmul.f32 %v1144, %v1389
    %v1391 = vrcp.pop %v1177
    %v1392 = vmul.f32 %v1177, %v1391
    %v1393 = vsub.f32 1.0, %v1392
    %v1394 = vmul.f32 %v1391, %v1393
    %v1395 = vadd.f32 %v1391, %v1394
    %vm1396 = vweird.f32 %v1177
    %vm1397 = vweird.f32 %v1391
    %vm1398 = vmor %vm1396, %vm1397
    %v1399 = vsel %vm1398, %v1391, %v1395
    %v1400 = vand.u32 2147483647, %v1177
    %vm1401 = vcmp.eq.f32.partialorder %v1400, 8.507059e+37
    %v1402 = vand.u32 %v1177, 2147483648
    %v1403 = vor.u32 1.1754944e-38, %v1402
    %v1404 = vsel %vm1401, %v1403, %v1399
    %v1405 = vmul.f32 %v1145, %v1404
    %v1406 = vrcp.pop %v1178
    %v1407 = vmul.f32 %v1178, %v1406
    %v1408 = vsub.f32 1.0, %v1407
    %v1409 = vmul.f32 %v1406, %v1408
    %v1410 = vadd.f32 %v1406, %v1409
    %vm1411 = vweird.f32 %v1178
    %vm1412 = vweird.f32 %v1406
    %vm1413 = vmor %vm1411, %vm1412
    %v1414 = vsel %vm1413, %v1406, %v1410
    %v1415 = vand.u32 2147483647, %v1178
    %vm1416 = vcmp.eq.f32.partialorder %v1415, 8.507059e+37
    %v1417 = vand.u32 %v1178, 2147483648
    %v1418 = vor.u32 1.1754944e-38, %v1417
    %v1419 = vsel %vm1416, %v1418, %v1414
    %v1420 = vmul.f32 %v1146, %v1419
    %v1421 = vrcp.pop %v1179
    %v1422 = vmul.f32 %v1179, %v1421
    %v1423 = vsub.f32 1.0, %v1422
    %v1424 = vmul.f32 %v1421, %v1423
    %v1425 = vadd.f32 %v1421, %v1424
    %vm1426 = vweird.f32 %v1179
    %vm1427 = vweird.f32 %v1421
    %vm1428 = vmor %vm1426, %vm1427
    %v1429 = vsel %vm1428, %v1421, %v1425
    %v1430 = vand.u32 2147483647, %v1179
    %vm1431 = vcmp.eq.f32.partialorder %v1430, 8.507059e+37
    %v1432 = vand.u32 %v1179, 2147483648
    %v1433 = vor.u32 1.1754944e-38, %v1432
    %v1434 = vsel %vm1431, %v1433, %v1429
    %v1435 = vmul.f32 %v1147, %v1434
    %v1436 = vrcp.pop %v1180
    %v1437 = vmul.f32 %v1180, %v1436
    %v1438 = vsub.f32 1.0, %v1437
    %v1439 = vmul.f32 %v1436, %v1438
    %v1440 = vadd.f32 %v1436, %v1439
    %vm1441 = vweird.f32 %v1180
    %vm1442 = vweird.f32 %v1436
    %vm1443 = vmor %vm1441, %vm1442
    %v1444 = vsel %vm1443, %v1436, %v1440
    %v1445 = vand.u32 2147483647, %v1180
    %vm1446 = vcmp.eq.f32.partialorder %v1445, 8.507059e+37
    %v1447 = vand.u32 %v1180, 2147483648
    %v1448 = vor.u32 1.1754944e-38, %v1447
    %v1449 = vsel %vm1446, %v1448, %v1444
    %v1450 = vmul.f32 %v1148, %v1449
    %v1451 = vrcp.pop %v1181
    %v1452 = vmul.f32 %v1181, %v1451
    %v1453 = vsub.f32 1.0, %v1452
    %v1454 = vmul.f32 %v1451, %v1453
    %v1455 = vadd.f32 %v1451, %v1454
    %vm1456 = vweird.f32 %v1181
    %vm1457 = vweird.f32 %v1451
    %vm1458 = vmor %vm1456, %vm1457
    %v1459 = vsel %vm1458, %v1451, %v1455
    %v1460 = vand.u32 2147483647, %v1181
    %vm1461 = vcmp.eq.f32.partialorder %v1460, 8.507059e+37
    %v1462 = vand.u32 %v1181, 2147483648
    %v1463 = vor.u32 1.1754944e-38, %v1462
    %v1464 = vsel %vm1461, %v1463, %v1459
    %v1465 = vmul.f32 %v1149, %v1464
    %v1466 = vrcp.pop %v1182
    %v1467 = vmul.f32 %v1182, %v1466
    %v1468 = vsub.f32 1.0, %v1467
    %v1469 = vmul.f32 %v1466, %v1468
    %v1470 = vadd.f32 %v1466, %v1469
    %vm1471 = vweird.f32 %v1182
    %vm1472 = vweird.f32 %v1466
    %vm1473 = vmor %vm1471, %vm1472
    %v1474 = vsel %vm1473, %v1466, %v1470
    %v1475 = vand.u32 2147483647, %v1182
    %vm1476 = vcmp.eq.f32.partialorder %v1475, 8.507059e+37
    %v1477 = vand.u32 %v1182, 2147483648
    %v1478 = vor.u32 1.1754944e-38, %v1477
    %v1479 = vsel %vm1476, %v1478, %v1474
    %v1480 = vmul.f32 %v1150, %v1479
    %v1481 = vrcp.pop %v1183
    %v1482 = vmul.f32 %v1183, %v1481
    %v1483 = vsub.f32 1.0, %v1482
    %v1484 = vmul.f32 %v1481, %v1483
    %v1485 = vadd.f32 %v1481, %v1484
    %vm1486 = vweird.f32 %v1183
    %vm1487 = vweird.f32 %v1481
    %vm1488 = vmor %vm1486, %vm1487
    %v1489 = vsel %vm1488, %v1481, %v1485
    %v1490 = vand.u32 2147483647, %v1183
    %vm1491 = vcmp.eq.f32.partialorder %v1490, 8.507059e+37
    %v1492 = vand.u32 %v1183, 2147483648
    %v1493 = vor.u32 1.1754944e-38, %v1492
    %v1494 = vsel %vm1491, %v1493, %v1489
    %v1495 = vmul.f32 %v1151, %v1494
    %v1496 = vrcp.pop %v1184
    %v1497 = vmul.f32 %v1184, %v1496
    %v1498 = vsub.f32 1.0, %v1497
    %v1499 = vmul.f32 %v1496, %v1498
    %v1500 = vadd.f32 %v1496, %v1499
    %vm1501 = vweird.f32 %v1184
    %vm1502 = vweird.f32 %v1496
    %vm1503 = vmor %vm1501, %vm1502
    %v1504 = vsel %vm1503, %v1496, %v1500
    %v1505 = vand.u32 2147483647, %v1184
    %vm1506 = vcmp.eq.f32.partialorder %v1505, 8.507059e+37
    %v1507 = vand.u32 %v1184, 2147483648
    %v1508 = vor.u32 1.1754944e-38, %v1507
    %v1509 = vsel %vm1506, %v1508, %v1504
    %v1510 = vmul.f32 %v1152, %v1509
    %v1511 = vrcp.pop %v1185
    %v1512 = vmul.f32 %v1185, %v1511
    %v1513 = vsub.f32 1.0, %v1512
    %v1514 = vmul.f32 %v1511, %v1513
    %v1515 = vadd.f32 %v1511, %v1514
    %vm1516 = vweird.f32 %v1185
    %vm1517 = vweird.f32 %v1511
    %vm1518 = vmor %vm1516, %vm1517
    %v1519 = vsel %vm1518, %v1511, %v1515
    %v1520 = vand.u32 2147483647, %v1185
    %vm1521 = vcmp.eq.f32.partialorder %v1520, 8.507059e+37
    %v1522 = vand.u32 %v1185, 2147483648
    %v1523 = vor.u32 1.1754944e-38, %v1522
    %v1524 = vsel %vm1521, %v1523, %v1519
    %v1525 = vmul.f32 %v1153, %v1524
    %v1526 = vrcp.pop %v1186
    %v1527 = vmul.f32 %v1186, %v1526
    %v1528 = vsub.f32 1.0, %v1527
    %v1529 = vmul.f32 %v1526, %v1528
    %v1530 = vadd.f32 %v1526, %v1529
    %vm1531 = vweird.f32 %v1186
    %vm1532 = vweird.f32 %v1526
    %vm1533 = vmor %vm1531, %vm1532
    %v1534 = vsel %vm1533, %v1526, %v1530
    %v1535 = vand.u32 2147483647, %v1186
    %vm1536 = vcmp.eq.f32.partialorder %v1535, 8.507059e+37
    %v1537 = vand.u32 %v1186, 2147483648
    %v1538 = vor.u32 1.1754944e-38, %v1537
    %v1539 = vsel %vm1536, %v1538, %v1534
    %v1540 = vmul.f32 %v1154, %v1539
    %v1541 = vrcp.pop %v1187
    %v1542 = vmul.f32 %v1187, %v1541
    %v1543 = vsub.f32 1.0, %v1542
    %v1544 = vmul.f32 %v1541, %v1543
    %v1545 = vadd.f32 %v1541, %v1544
    %vm1546 = vweird.f32 %v1187
    %vm1547 = vweird.f32 %v1541
    %vm1548 = vmor %vm1546, %vm1547
    %v1549 = vsel %vm1548, %v1541, %v1545
    %v1550 = vand.u32 2147483647, %v1187
    %vm1551 = vcmp.eq.f32.partialorder %v1550, 8.507059e+37
    %v1552 = vand.u32 %v1187, 2147483648
    %v1553 = vor.u32 1.1754944e-38, %v1552
    %v1554 = vsel %vm1551, %v1553, %v1549
    %v1555 = vmul.f32 %v1155, %v1554
    %v1556 = vrcp.pop %v1188
    %v1557 = vmul.f32 %v1188, %v1556
    %v1558 = vsub.f32 1.0, %v1557
    %v1559 = vmul.f32 %v1556, %v1558
    %v1560 = vadd.f32 %v1556, %v1559
    %vm1561 = vweird.f32 %v1188
    %vm1562 = vweird.f32 %v1556
    %vm1563 = vmor %vm1561, %vm1562
    %v1564 = vsel %vm1563, %v1556, %v1560
    %v1565 = vand.u32 2147483647, %v1188
    %vm1566 = vcmp.eq.f32.partialorder %v1565, 8.507059e+37
    %v1567 = vand.u32 %v1188, 2147483648
    %v1568 = vor.u32 1.1754944e-38, %v1567
    %v1569 = vsel %vm1566, %v1568, %v1564
    %v1570 = vmul.f32 %v1156, %v1569
    %v1571 = vrcp.pop %v1189
    %v1572 = vmul.f32 %v1189, %v1571
    %v1573 = vsub.f32 1.0, %v1572
    %v1574 = vmul.f32 %v1571, %v1573
    %v1575 = vadd.f32 %v1571, %v1574
    %vm1576 = vweird.f32 %v1189
    %vm1577 = vweird.f32 %v1571
    %vm1578 = vmor %vm1576, %vm1577
    %v1579 = vsel %vm1578, %v1571, %v1575
    %v1580 = vand.u32 2147483647, %v1189
    %vm1581 = vcmp.eq.f32.partialorder %v1580, 8.507059e+37
    %v1582 = vand.u32 %v1189, 2147483648
    %v1583 = vor.u32 1.1754944e-38, %v1582
    %v1584 = vsel %vm1581, %v1583, %v1579
    %v1585 = vmul.f32 %v1157, %v1584
    %v1586 = vrcp.pop %v1190
    %v1587 = vmul.f32 %v1190, %v1586
    %v1588 = vsub.f32 1.0, %v1587
    %v1589 = vmul.f32 %v1586, %v1588
    %v1590 = vadd.f32 %v1586, %v1589
    %vm1591 = vweird.f32 %v1190
    %vm1592 = vweird.f32 %v1586
    %vm1593 = vmor %vm1591, %vm1592
    %v1594 = vsel %vm1593, %v1586, %v1590
    %v1595 = vand.u32 2147483647, %v1190
    %vm1596 = vcmp.eq.f32.partialorder %v1595, 8.507059e+37
    %v1597 = vand.u32 %v1190, 2147483648
    %v1598 = vor.u32 1.1754944e-38, %v1597
    %v1599 = vsel %vm1596, %v1598, %v1594
    %v1600 = vmul.f32 %v1158, %v1599
    %v1601 = vrcp.pop %v1191
    %v1602 = vmul.f32 %v1191, %v1601
    %v1603 = vsub.f32 1.0, %v1602
    %v1604 = vmul.f32 %v1601, %v1603
    %v1605 = vadd.f32 %v1601, %v1604
    %vm1606 = vweird.f32 %v1191
    %vm1607 = vweird.f32 %v1601
    %vm1608 = vmor %vm1606, %vm1607
    %v1609 = vsel %vm1608, %v1601, %v1605
    %v1610 = vand.u32 2147483647, %v1191
    %vm1611 = vcmp.eq.f32.partialorder %v1610, 8.507059e+37
    %v1612 = vand.u32 %v1191, 2147483648
    %v1613 = vor.u32 1.1754944e-38, %v1612
    %v1614 = vsel %vm1611, %v1613, %v1609
    %v1615 = vmul.f32 %v1159, %v1614
    %v1616 = vrcp.pop %v1192
    %v1617 = vmul.f32 %v1192, %v1616
    %v1618 = vsub.f32 1.0, %v1617
    %v1619 = vmul.f32 %v1616, %v1618
    %v1620 = vadd.f32 %v1616, %v1619
    %vm1621 = vweird.f32 %v1192
    %vm1622 = vweird.f32 %v1616
    %vm1623 = vmor %vm1621, %vm1622
    %v1624 = vsel %vm1623, %v1616, %v1620
    %v1625 = vand.u32 2147483647, %v1192
    %vm1626 = vcmp.eq.f32.partialorder %v1625, 8.507059e+37
    %v1627 = vand.u32 %v1192, 2147483648
    %v1628 = vor.u32 1.1754944e-38, %v1627
    %v1629 = vsel %vm1626, %v1628, %v1624
    %v1630 = vmul.f32 %v1160, %v1629
    %v1631 = vrcp.pop %v1193
    %v1632 = vmul.f32 %v1193, %v1631
    %v1633 = vsub.f32 1.0, %v1632
    %v1634 = vmul.f32 %v1631, %v1633
    %v1635 = vadd.f32 %v1631, %v1634
    %vm1636 = vweird.f32 %v1193
    %vm1637 = vweird.f32 %v1631
    %vm1638 = vmor %vm1636, %vm1637
    %v1639 = vsel %vm1638, %v1631, %v1635
    %v1640 = vand.u32 2147483647, %v1193
    %vm1641 = vcmp.eq.f32.partialorder %v1640, 8.507059e+37
    %v1642 = vand.u32 %v1193, 2147483648
    %v1643 = vor.u32 1.1754944e-38, %v1642
    %v1644 = vsel %vm1641, %v1643, %v1639
    %v1645 = vmul.f32 %v1161, %v1644
    %v1646 = vrcp.pop %v1194
    %v1647 = vmul.f32 %v1194, %v1646
    %v1648 = vsub.f32 1.0, %v1647
    %v1649 = vmul.f32 %v1646, %v1648
    %v1650 = vadd.f32 %v1646, %v1649
    %vm1651 = vweird.f32 %v1194
    %vm1652 = vweird.f32 %v1646
    %vm1653 = vmor %vm1651, %vm1652
    %v1654 = vsel %vm1653, %v1646, %v1650
    %v1655 = vand.u32 2147483647, %v1194
    %vm1656 = vcmp.eq.f32.partialorder %v1655, 8.507059e+37
    %v1657 = vand.u32 %v1194, 2147483648
    %v1658 = vor.u32 1.1754944e-38, %v1657
    %v1659 = vsel %vm1656, %v1658, %v1654
    %v1660 = vmul.f32 %v1162, %v1659
    %v1661 = vrcp.pop %v1195
    %v1662 = vmul.f32 %v1195, %v1661
    %v1663 = vsub.f32 1.0, %v1662
    %v1664 = vmul.f32 %v1661, %v1663
    %v1665 = vadd.f32 %v1661, %v1664
    %vm1666 = vweird.f32 %v1195
    %vm1667 = vweird.f32 %v1661
    %vm1668 = vmor %vm1666, %vm1667
    %v1669 = vsel %vm1668, %v1661, %v1665
    %v1670 = vand.u32 2147483647, %v1195
    %vm1671 = vcmp.eq.f32.partialorder %v1670, 8.507059e+37
    %v1672 = vand.u32 %v1195, 2147483648
    %v1673 = vor.u32 1.1754944e-38, %v1672
    %v1674 = vsel %vm1671, %v1673, %v1669
    %v1675 = vmul.f32 %v1163, %v1674
    %v1676 = vlog2.pop %v1210
    %v1677 = vmul.f32 %v1676, 0.6931472
    %v1678 = vlog2.pop %v1225
    %v1679 = vmul.f32 %v1678, 0.6931472
    %v1680 = vlog2.pop %v1240
    %v1681 = vmul.f32 %v1680, 0.6931472
    %v1682 = vlog2.pop %v1255
    %v1683 = vmul.f32 %v1682, 0.6931472
    %v1684 = vlog2.pop %v1270
    %v1685 = vmul.f32 %v1684, 0.6931472
    %v1686 = vlog2.pop %v1285
    %v1687 = vmul.f32 %v1686, 0.6931472
    %v1688 = vlog2.pop %v1300
    %v1689 = vmul.f32 %v1688, 0.6931472
    %v1690 = vlog2.pop %v1315
    %v1691 = vmul.f32 %v1690, 0.6931472
    %v1692 = vlog2.pop %v1330
    %v1693 = vmul.f32 %v1692, 0.6931472
    %v1694 = vlog2.pop %v1345
    %v1695 = vmul.f32 %v1694, 0.6931472
    %v1696 = vlog2.pop %v1360
    %v1697 = vmul.f32 %v1696, 0.6931472
    %v1698 = vlog2.pop %v1375
    %v1699 = vmul.f32 %v1698, 0.6931472
    %v1700 = vlog2.pop %v1390
    %v1701 = vmul.f32 %v1700, 0.6931472
    %v1702 = vlog2.pop %v1405
    %v1703 = vmul.f32 %v1702, 0.6931472
    %v1704 = vlog2.pop %v1420
    %v1705 = vmul.f32 %v1704, 0.6931472
    %v1706 = vlog2.pop %v1435
    %v1707 = vmul.f32 %v1706, 0.6931472
    %v1708 = vlog2.pop %v1450
    %v1709 = vmul.f32 %v1708, 0.6931472
    %v1710 = vlog2.pop %v1465
    %v1711 = vmul.f32 %v1710, 0.6931472
    %v1712 = vlog2.pop %v1480
    %v1713 = vmul.f32 %v1712, 0.6931472
    %v1714 = vlog2.pop %v1495
    %v1715 = vmul.f32 %v1714, 0.6931472
    %v1716 = vlog2.pop %v1510
    %v1717 = vmul.f32 %v1716, 0.6931472
    %v1718 = vlog2.pop %v1525
    %v1719 = vmul.f32 %v1718, 0.6931472
    %v1720 = vlog2.pop %v1540
    %v1721 = vmul.f32 %v1720, 0.6931472
    %v1722 = vlog2.pop %v1555
    %v1723 = vmul.f32 %v1722, 0.6931472
    %v1724 = vlog2.pop %v1570
    %v1725 = vmul.f32 %v1724, 0.6931472
    %v1726 = vlog2.pop %v1585
    %v1727 = vmul.f32 %v1726, 0.6931472
    %v1728 = vlog2.pop %v1600
    %v1729 = vmul.f32 %v1728, 0.6931472
    %v1730 = vlog2.pop %v1615
    %v1731 = vmul.f32 %v1730, 0.6931472
    %v1732 = vlog2.pop %v1630
    %v1733 = vmul.f32 %v1732, 0.6931472
    %v1734 = vlog2.pop %v1645
    %v1735 = vmul.f32 %v1734, 0.6931472
    %v1736 = vlog2.pop %v1660
    %v1737 = vmul.f32 %v1736, 0.6931472
    %v1738 = vlog2.pop %v1675
    %v1739 = vmul.f32 %v1738, 0.6931472
    %v1740 = vmul.f32 %v1677, 0.5
    %v1741 = vmul.f32 %v1679, 0.5
    %v1742 = vmul.f32 %v1681, 0.5
    %v1743 = vmul.f32 %v1683, 0.5
    %v1744 = vmul.f32 %v1685, 0.5
    %v1745 = vmul.f32 %v1687, 0.5
    %v1746 = vmul.f32 %v1689, 0.5
    %v1747 = vmul.f32 %v1691, 0.5
    %v1748 = vmul.f32 %v1693, 0.5
    %v1749 = vmul.f32 %v1695, 0.5
    %v1750 = vmul.f32 %v1697, 0.5
    %v1751 = vmul.f32 %v1699, 0.5
    %v1752 = vmul.f32 %v1701, 0.5
    %v1753 = vmul.f32 %v1703, 0.5
    %v1754 = vmul.f32 %v1705, 0.5
    %v1755 = vmul.f32 %v1707, 0.5
    %v1756 = vmul.f32 %v1709, 0.5
    %v1757 = vmul.f32 %v1711, 0.5
    %v1758 = vmul.f32 %v1713, 0.5
    %v1759 = vmul.f32 %v1715, 0.5
    %v1760 = vmul.f32 %v1717, 0.5
    %v1761 = vmul.f32 %v1719, 0.5
    %v1762 = vmul.f32 %v1721, 0.5
    %v1763 = vmul.f32 %v1723, 0.5
    %v1764 = vmul.f32 %v1725, 0.5
    %v1765 = vmul.f32 %v1727, 0.5
    %v1766 = vmul.f32 %v1729, 0.5
    %v1767 = vmul.f32 %v1731, 0.5
    %v1768 = vmul.f32 %v1733, 0.5
    %v1769 = vmul.f32 %v1735, 0.5
    %v1770 = vmul.f32 %v1737, 0.5
    %v1771 = vmul.f32 %v1739, 0.5
    %v1772 = vmul.f32 %v725, 31.622776
    %v1773 = vmul.f32 %v735, 31.622776
    %v1774 = vmul.f32 %v745, 31.622776
    %v1775 = vmul.f32 %v755, 31.622776
    %v1776 = vmul.f32 %v765, 31.622776
    %v1777 = vmul.f32 %v775, 31.622776
    %v1778 = vmul.f32 %v785, 31.622776
    %v1779 = vmul.f32 %v795, 31.622776
    %v1780 = vmul.f32 %v805, 31.622776
    %v1781 = vmul.f32 %v815, 31.622776
    %v1782 = vmul.f32 %v825, 31.622776
    %v1783 = vmul.f32 %v835, 31.622776
    %v1784 = vmul.f32 %v845, 31.622776
    %v1785 = vmul.f32 %v855, 31.622776
    %v1786 = vmul.f32 %v865, 31.622776
    %v1787 = vmul.f32 %v875, 31.622776
    %v1788 = vmul.f32 %v885, 31.622776
    %v1789 = vmul.f32 %v895, 31.622776
    %v1790 = vmul.f32 %v905, 31.622776
    %v1791 = vmul.f32 %v915, 31.622776
    %v1792 = vmul.f32 %v925, 31.622776
    %v1793 = vmul.f32 %v935, 31.622776
    %v1794 = vmul.f32 %v945, 31.622776
    %v1795 = vmul.f32 %v955, 31.622776
    %v1796 = vmul.f32 %v965, 31.622776
    %v1797 = vmul.f32 %v975, 31.622776
    %v1798 = vmul.f32 %v985, 31.622776
    %v1799 = vmul.f32 %v995, 31.622776
    %v1800 = vmul.f32 %v1005, 31.622776
    %v1801 = vmul.f32 %v1015, 31.622776
    %v1802 = vmul.f32 %v1025, 31.622776
    %v1803 = vmul.f32 %v1035, 31.622776
    %v1804 = vmul.f32 %v1740, %v1772
    %v1805 = vmul.f32 %v1741, %v1773
    %v1806 = vmul.f32 %v1742, %v1774
    %v1807 = vmul.f32 %v1743, %v1775
    %v1808 = vmul.f32 %v1744, %v1776
    %v1809 = vmul.f32 %v1745, %v1777
    %v1810 = vmul.f32 %v1746, %v1778
    %v1811 = vmul.f32 %v1747, %v1779
    %v1812 = vmul.f32 %v1748, %v1780
    %v1813 = vmul.f32 %v1749, %v1781
    %v1814 = vmul.f32 %v1750, %v1782
    %v1815 = vmul.f32 %v1751, %v1783
    %v1816 = vmul.f32 %v1752, %v1784
    %v1817 = vmul.f32 %v1753, %v1785
    %v1818 = vmul.f32 %v1754, %v1786
    %v1819 = vmul.f32 %v1755, %v1787
    %v1820 = vmul.f32 %v1756, %v1788
    %v1821 = vmul.f32 %v1757, %v1789
    %v1822 = vmul.f32 %v1758, %v1790
    %v1823 = vmul.f32 %v1759, %v1791
    %v1824 = vmul.f32 %v1760, %v1792
    %v1825 = vmul.f32 %v1761, %v1793
    %v1826 = vmul.f32 %v1762, %v1794
    %v1827 = vmul.f32 %v1763, %v1795
    %v1828 = vmul.f32 %v1764, %v1796
    %v1829 = vmul.f32 %v1765, %v1797
    %v1830 = vmul.f32 %v1766, %v1798
    %v1831 = vmul.f32 %v1767, %v1799
    %v1832 = vmul.f32 %v1768, %v1800
    %v1833 = vmul.f32 %v1769, %v1801
    %v1834 = vmul.f32 %v1770, %v1802
    %v1835 = vmul.f32 %v1771, %v1803
    %v1836 = vmul.f32 %v556, %v1804
    %v1837 = vmul.f32 %v557, %v1805
    %v1838 = vmul.f32 %v558, %v1806
    %v1839 = vmul.f32 %v559, %v1807
    %v1840 = vmul.f32 %v560, %v1808
    %v1841 = vmul.f32 %v561, %v1809
    %v1842 = vmul.f32 %v562, %v1810
    %v1843 = vmul.f32 %v563, %v1811
    %v1844 = vmul.f32 %v564, %v1812
    %v1845 = vmul.f32 %v565, %v1813
    %v1846 = vmul.f32 %v566, %v1814
    %v1847 = vmul.f32 %v567, %v1815
    %v1848 = vmul.f32 %v568, %v1816
    %v1849 = vmul.f32 %v569, %v1817
    %v1850 = vmul.f32 %v570, %v1818
    %v1851 = vmul.f32 %v571, %v1819
    %v1852 = vmul.f32 %v572, %v1820
    %v1853 = vmul.f32 %v573, %v1821
    %v1854 = vmul.f32 %v574, %v1822
    %v1855 = vmul.f32 %v575, %v1823
    %v1856 = vmul.f32 %v576, %v1824
    %v1857 = vmul.f32 %v577, %v1825
    %v1858 = vmul.f32 %v578, %v1826
    %v1859 = vmul.f32 %v579, %v1827
    %v1860 = vmul.f32 %v580, %v1828
    %v1861 = vmul.f32 %v581, %v1829
    %v1862 = vmul.f32 %v582, %v1830
    %v1863 = vmul.f32 %v583, %v1831
    %v1864 = vmul.f32 %v584, %v1832
    %v1865 = vmul.f32 %v585, %v1833
    %v1866 = vmul.f32 %v586, %v1834
    %v1867 = vmul.f32 %v587, %v1835
    %v1868 = vld [vmem:[%s5] sm:$0xff]
    %v1869 = vld [vmem:[%s5 + $0x8] sm:$0xff]
    %v1870 = vld [vmem:[%s5 + $0x10] sm:$0xff]
    %v1871 = vld [vmem:[%s5 + $0x18] sm:$0xff]
    %v1872 = vld [vmem:[%s5 + $0x20] sm:$0xff]
    %v1873 = vld [vmem:[%s5 + $0x28] sm:$0xff]
    %v1874 = vld [vmem:[%s5 + $0x30] sm:$0xff]
    %v1875 = vld [vmem:[%s5 + $0x38] sm:$0xff]
    %v1876 = vld [vmem:[%s5 + $0x40] sm:$0xff]
    %v1877 = vld [vmem:[%s5 + $0x48] sm:$0xff]
    %v1878 = vld [vmem:[%s5 + $0x50] sm:$0xff]
    %v1879 = vld [vmem:[%s5 + $0x58] sm:$0xff]
    %v1880 = vld [vmem:[%s5 + $0x60] sm:$0xff]
    %v1881 = vld [vmem:[%s5 + $0x68] sm:$0xff]
    %v1882 = vld [vmem:[%s5 + $0x70] sm:$0xff]
    %v1883 = vld [vmem:[%s5 + $0x78] sm:$0xff]
    %1884 = vmatpush.msra.mxu0 %v1883
    %1885 = vmatpush.msra.mxu0 %v1882
    %1886 = vmatpush.msra.mxu0 %v1881
    %1887 = vmatpush.msra.mxu0 %v1880
    %1888 = vmatpush.msra.mxu0 %v1879
    %1889 = vmatpush.msra.mxu0 %v1878
    %1890 = vmatpush.msra.mxu0 %v1877
    %1891 = vmatpush.msra.mxu0 %v1876
    %1892 = vmatpush.msra.mxu0 %v1875
    %1893 = vmatpush.msra.mxu0 %v1874
    %1894 = vmatpush.msra.mxu0 %v1873
    %1895 = vmatpush.msra.mxu0 %v1872
    %1896 = vmatpush.msra.mxu0 %v1871
    %1897 = vmatpush.msra.mxu0 %v1870
    %1898 = vmatpush.msra.mxu0 %v1869
    %1899 = vmatpush.msra.mxu0 %v1868
    %1900 = vmatmul.f32.gmra.mxu0 %v1836
    %v1901 = vpop.f32.mrf.mxu0
    %v1902 = vadd.f32 0.0, %v1901
    %1903 = vmatmul.f32.gmra.mxu0 %v1837
    %v1904 = vpop.f32.mrf.mxu0
    %v1905 = vadd.f32 0.0, %v1904
    %1906 = vmatmul.f32.gmra.mxu0 %v1838
    %v1907 = vpop.f32.mrf.mxu0
    %v1908 = vadd.f32 0.0, %v1907
    %1909 = vmatmul.f32.gmra.mxu0 %v1839
    %v1910 = vpop.f32.mrf.mxu0
    %v1911 = vadd.f32 0.0, %v1910
    %1912 = vmatmul.f32.gmra.mxu0 %v1840
    %v1913 = vpop.f32.mrf.mxu0
    %v1914 = vadd.f32 0.0, %v1913
    %1915 = vmatmul.f32.gmra.mxu0 %v1841
    %v1916 = vpop.f32.mrf.mxu0
    %v1917 = vadd.f32 0.0, %v1916
    %1918 = vmatmul.f32.gmra.mxu0 %v1842
    %v1919 = vpop.f32.mrf.mxu0
    %v1920 = vadd.f32 0.0, %v1919
    %1921 = vmatmul.f32.gmra.mxu0 %v1843
    %v1922 = vpop.f32.mrf.mxu0
    %v1923 = vadd.f32 0.0, %v1922
    %1924 = vmatmul.f32.gmra.mxu0 %v1844
    %v1925 = vpop.f32.mrf.mxu0
    %v1926 = vadd.f32 0.0, %v1925
    %1927 = vmatmul.f32.gmra.mxu0 %v1845
    %v1928 = vpop.f32.mrf.mxu0
    %v1929 = vadd.f32 0.0, %v1928
    %1930 = vmatmul.f32.gmra.mxu0 %v1846
    %v1931 = vpop.f32.mrf.mxu0
    %v1932 = vadd.f32 0.0, %v1931
    %1933 = vmatmul.f32.gmra.mxu0 %v1847
    %v1934 = vpop.f32.mrf.mxu0
    %v1935 = vadd.f32 0.0, %v1934
    %1936 = vmatmul.f32.gmra.mxu0 %v1848
    %v1937 = vpop.f32.mrf.mxu0
    %v1938 = vadd.f32 0.0, %v1937
    %1939 = vmatmul.f32.gmra.mxu0 %v1849
    %v1940 = vpop.f32.mrf.mxu0
    %v1941 = vadd.f32 0.0, %v1940
    %1942 = vmatmul.f32.gmra.mxu0 %v1850
    %v1943 = vpop.f32.mrf.mxu0
    %v1944 = vadd.f32 0.0, %v1943
    %1945 = vmatmul.f32.gmra.mxu0 %v1851
    %v1946 = vpop.f32.mrf.mxu0
    %v1947 = vadd.f32 0.0, %v1946
    %1948 = vmatmul.f32.gmra.mxu0 %v1852
    %v1949 = vpop.f32.mrf.mxu0
    %v1950 = vadd.f32 0.0, %v1949
    %1951 = vmatmul.f32.gmra.mxu0 %v1853
    %v1952 = vpop.f32.mrf.mxu0
    %v1953 = vadd.f32 0.0, %v1952
    %1954 = vmatmul.f32.gmra.mxu0 %v1854
    %v1955 = vpop.f32.mrf.mxu0
    %v1956 = vadd.f32 0.0, %v1955
    %1957 = vmatmul.f32.gmra.mxu0 %v1855
    %v1958 = vpop.f32.mrf.mxu0
    %v1959 = vadd.f32 0.0, %v1958
    %1960 = vmatmul.f32.gmra.mxu0 %v1856
    %v1961 = vpop.f32.mrf.mxu0
    %v1962 = vadd.f32 0.0, %v1961
    %1963 = vmatmul.f32.gmra.mxu0 %v1857
    %v1964 = vpop.f32.mrf.mxu0
    %v1965 = vadd.f32 0.0, %v1964
    %1966 = vmatmul.f32.gmra.mxu0 %v1858
    %v1967 = vpop.f32.mrf.mxu0
    %v1968 = vadd.f32 0.0, %v1967
    %1969 = vmatmul.f32.gmra.mxu0 %v1859
    %v1970 = vpop.f32.mrf.mxu0
    %v1971 = vadd.f32 0.0, %v1970
    %1972 = vmatmul.f32.gmra.mxu0 %v1860
    %v1973 = vpop.f32.mrf.mxu0
    %v1974 = vadd.f32 0.0, %v1973
    %1975 = vmatmul.f32.gmra.mxu0 %v1861
    %v1976 = vpop.f32.mrf.mxu0
    %v1977 = vadd.f32 0.0, %v1976
    %1978 = vmatmul.f32.gmra.mxu0 %v1862
    %v1979 = vpop.f32.mrf.mxu0
    %v1980 = vadd.f32 0.0, %v1979
    %1981 = vmatmul.f32.gmra.mxu0 %v1863
    %v1982 = vpop.f32.mrf.mxu0
    %v1983 = vadd.f32 0.0, %v1982
    %1984 = vmatmul.f32.gmra.mxu0 %v1864
    %v1985 = vpop.f32.mrf.mxu0
    %v1986 = vadd.f32 0.0, %v1985
    %1987 = vmatmul.f32.gmra.mxu0 %v1865
    %v1988 = vpop.f32.mrf.mxu0
    %v1989 = vadd.f32 0.0, %v1988
    %1990 = vmatmul.f32.gmra.mxu0 %v1866
    %v1991 = vpop.f32.mrf.mxu0
    %v1992 = vadd.f32 0.0, %v1991
    %1993 = vmatmul.f32.gmra.mxu0 %v1867
    %v1994 = vpop.f32.mrf.mxu0
    %v1995 = vadd.f32 0.0, %v1994
    %1996 = vdwg.mxu0
    %v1997 = vmul.f32 %v1902, %v1902
    %v1998 = vmul.f32 %v1905, %v1905
    %v1999 = vmul.f32 %v1908, %v1908
    %v2000 = vmul.f32 %v1911, %v1911
    %v2001 = vmul.f32 %v1914, %v1914
    %v2002 = vmul.f32 %v1917, %v1917
    %v2003 = vmul.f32 %v1920, %v1920
    %v2004 = vmul.f32 %v1923, %v1923
    %v2005 = vmul.f32 %v1926, %v1926
    %v2006 = vmul.f32 %v1929, %v1929
    %v2007 = vmul.f32 %v1932, %v1932
    %v2008 = vmul.f32 %v1935, %v1935
    %v2009 = vmul.f32 %v1938, %v1938
    %v2010 = vmul.f32 %v1941, %v1941
    %v2011 = vmul.f32 %v1944, %v1944
    %v2012 = vmul.f32 %v1947, %v1947
    %v2013 = vmul.f32 %v1950, %v1950
    %v2014 = vmul.f32 %v1953, %v1953
    %v2015 = vmul.f32 %v1956, %v1956
    %v2016 = vmul.f32 %v1959, %v1959
    %v2017 = vmul.f32 %v1962, %v1962
    %v2018 = vmul.f32 %v1965, %v1965
    %v2019 = vmul.f32 %v1968, %v1968
    %v2020 = vmul.f32 %v1971, %v1971
    %v2021 = vmul.f32 %v1974, %v1974
    %v2022 = vmul.f32 %v1977, %v1977
    %v2023 = vmul.f32 %v1980, %v1980
    %v2024 = vmul.f32 %v1983, %v1983
    %v2025 = vmul.f32 %v1986, %v1986
    %v2026 = vmul.f32 %v1989, %v1989
    %v2027 = vmul.f32 %v1992, %v1992
    %v2028 = vmul.f32 %v1995, %v1995
    %2029 = vadd.xlane.f32.xlu0 %v1997
    %v2030 = vpop.xlane.xlu0 %2029
    %2031 = vadd.xlane.f32.xlu0 %v1998
    %v2032 = vpop.xlane.xlu0 %2031
    %2033 = vadd.xlane.f32.xlu0 %v1999
    %v2034 = vpop.xlane.xlu0 %2033
    %2035 = vadd.xlane.f32.xlu0 %v2000
    %v2036 = vpop.xlane.xlu0 %2035
    %2037 = vadd.xlane.f32.xlu0 %v2001
    %v2038 = vpop.xlane.xlu0 %2037
    %2039 = vadd.xlane.f32.xlu0 %v2002
    %v2040 = vpop.xlane.xlu0 %2039
    %2041 = vadd.xlane.f32.xlu0 %v2003
    %v2042 = vpop.xlane.xlu0 %2041
    %2043 = vadd.xlane.f32.xlu0 %v2004
    %v2044 = vpop.xlane.xlu0 %2043
    %2045 = vadd.xlane.f32.xlu0 %v2005
    %v2046 = vpop.xlane.xlu0 %2045
    %2047 = vadd.xlane.f32.xlu0 %v2006
    %v2048 = vpop.xlane.xlu0 %2047
    %2049 = vadd.xlane.f32.xlu0 %v2007
    %v2050 = vpop.xlane.xlu0 %2049
    %2051 = vadd.xlane.f32.xlu0 %v2008
    %v2052 = vpop.xlane.xlu0 %2051
    %2053 = vadd.xlane.f32.xlu0 %v2009
    %v2054 = vpop.xlane.xlu0 %2053
    %2055 = vadd.xlane.f32.xlu0 %v2010
    %v2056 = vpop.xlane.xlu0 %2055
    %2057 = vadd.xlane.f32.xlu0 %v2011
    %v2058 = vpop.xlane.xlu0 %2057
    %2059 = vadd.xlane.f32.xlu0 %v2012
    %v2060 = vpop.xlane.xlu0 %2059
    %2061 = vadd.xlane.f32.xlu0 %v2013
    %v2062 = vpop.xlane.xlu0 %2061
    %2063 = vadd.xlane.f32.xlu0 %v2014
    %v2064 = vpop.xlane.xlu0 %2063
    %2065 = vadd.xlane.f32.xlu0 %v2015
    %v2066 = vpop.xlane.xlu0 %2065
    %2067 = vadd.xlane.f32.xlu0 %v2016
    %v2068 = vpop.xlane.xlu0 %2067
    %2069 = vadd.xlane.f32.xlu0 %v2017
    %v2070 = vpop.xlane.xlu0 %2069
    %2071 = vadd.xlane.f32.xlu0 %v2018
    %v2072 = vpop.xlane.xlu0 %2071
    %2073 = vadd.xlane.f32.xlu0 %v2019
    %v2074 = vpop.xlane.xlu0 %2073
    %2075 = vadd.xlane.f32.xlu0 %v2020
    %v2076 = vpop.xlane.xlu0 %2075
    %2077 = vadd.xlane.f32.xlu0 %v2021
    %v2078 = vpop.xlane.xlu0 %2077
    %2079 = vadd.xlane.f32.xlu0 %v2022
    %v2080 = vpop.xlane.xlu0 %2079
    %2081 = vadd.xlane.f32.xlu0 %v2023
    %v2082 = vpop.xlane.xlu0 %2081
    %2083 = vadd.xlane.f32.xlu0 %v2024
    %v2084 = vpop.xlane.xlu0 %2083
    %2085 = vadd.xlane.f32.xlu0 %v2025
    %v2086 = vpop.xlane.xlu0 %2085
    %2087 = vadd.xlane.f32.xlu0 %v2026
    %v2088 = vpop.xlane.xlu0 %2087
    %2089 = vadd.xlane.f32.xlu0 %v2027
    %v2090 = vpop.xlane.xlu0 %2089
    %2091 = vadd.xlane.f32.xlu0 %v2028
    %v2092 = vpop.xlane.xlu0 %2091
    %v2093 = vmax.f32 %v2030, 1e-30
    %v2094 = vmax.f32 %v2032, 1e-30
    %v2095 = vmax.f32 %v2034, 1e-30
    %v2096 = vmax.f32 %v2036, 1e-30
    %v2097 = vmax.f32 %v2038, 1e-30
    %v2098 = vmax.f32 %v2040, 1e-30
    %v2099 = vmax.f32 %v2042, 1e-30
    %v2100 = vmax.f32 %v2044, 1e-30
    %v2101 = vmax.f32 %v2046, 1e-30
    %v2102 = vmax.f32 %v2048, 1e-30
    %v2103 = vmax.f32 %v2050, 1e-30
    %v2104 = vmax.f32 %v2052, 1e-30
    %v2105 = vmax.f32 %v2054, 1e-30
    %v2106 = vmax.f32 %v2056, 1e-30
    %v2107 = vmax.f32 %v2058, 1e-30
    %v2108 = vmax.f32 %v2060, 1e-30
    %v2109 = vmax.f32 %v2062, 1e-30
    %v2110 = vmax.f32 %v2064, 1e-30
    %v2111 = vmax.f32 %v2066, 1e-30
    %v2112 = vmax.f32 %v2068, 1e-30
    %v2113 = vmax.f32 %v2070, 1e-30
    %v2114 = vmax.f32 %v2072, 1e-30
    %v2115 = vmax.f32 %v2074, 1e-30
    %v2116 = vmax.f32 %v2076, 1e-30
    %v2117 = vmax.f32 %v2078, 1e-30
    %v2118 = vmax.f32 %v2080, 1e-30
    %v2119 = vmax.f32 %v2082, 1e-30
    %v2120 = vmax.f32 %v2084, 1e-30
    %v2121 = vmax.f32 %v2086, 1e-30
    %v2122 = vmax.f32 %v2088, 1e-30
    %v2123 = vmax.f32 %v2090, 1e-30
    %v2124 = vmax.f32 %v2092, 1e-30
    %v2125 = vrsqrt.pop %v2093
    %v2126 = vmul.f32 %v2125, %v2093
    %v2127 = vmul.f32 %v2126, %v2125
    %v2128 = vmul.f32 0.5, %v2127
    %v2129 = vsub.f32 1.5, %v2128
    %v2130 = vmul.f32 %v2125, %v2129
    %vm2131 = vweird.f32 %v2093
    %vm2132 = vweird.f32 %v2125
    %vm2133 = vmor %vm2131, %vm2132
    %v2134 = vsel %vm2133, %v2125, %v2130
    %v2135 = vrsqrt.pop %v2094
    %v2136 = vmul.f32 %v2135, %v2094
    %v2137 = vmul.f32 %v2136, %v2135
    %v2138 = vmul.f32 0.5, %v2137
    %v2139 = vsub.f32 1.5, %v2138
    %v2140 = vmul.f32 %v2135, %v2139
    %vm2141 = vweird.f32 %v2094
    %vm2142 = vweird.f32 %v2135
    %vm2143 = vmor %vm2141, %vm2142
    %v2144 = vsel %vm2143, %v2135, %v2140
    %v2145 = vrsqrt.pop %v2095
    %v2146 = vmul.f32 %v2145, %v2095
    %v2147 = vmul.f32 %v2146, %v2145
    %v2148 = vmul.f32 0.5, %v2147
    %v2149 = vsub.f32 1.5, %v2148
    %v2150 = vmul.f32 %v2145, %v2149
    %vm2151 = vweird.f32 %v2095
    %vm2152 = vweird.f32 %v2145
    %vm2153 = vmor %vm2151, %vm2152
    %v2154 = vsel %vm2153, %v2145, %v2150
    %v2155 = vrsqrt.pop %v2096
    %v2156 = vmul.f32 %v2155, %v2096
    %v2157 = vmul.f32 %v2156, %v2155
    %v2158 = vmul.f32 0.5, %v2157
    %v2159 = vsub.f32 1.5, %v2158
    %v2160 = vmul.f32 %v2155, %v2159
    %vm2161 = vweird.f32 %v2096
    %vm2162 = vweird.f32 %v2155
    %vm2163 = vmor %vm2161, %vm2162
    %v2164 = vsel %vm2163, %v2155, %v2160
    %v2165 = vrsqrt.pop %v2097
    %v2166 = vmul.f32 %v2165, %v2097
    %v2167 = vmul.f32 %v2166, %v2165
    %v2168 = vmul.f32 0.5, %v2167
    %v2169 = vsub.f32 1.5, %v2168
    %v2170 = vmul.f32 %v2165, %v2169
    %vm2171 = vweird.f32 %v2097
    %vm2172 = vweird.f32 %v2165
    %vm2173 = vmor %vm2171, %vm2172
    %v2174 = vsel %vm2173, %v2165, %v2170
    %v2175 = vrsqrt.pop %v2098
    %v2176 = vmul.f32 %v2175, %v2098
    %v2177 = vmul.f32 %v2176, %v2175
    %v2178 = vmul.f32 0.5, %v2177
    %v2179 = vsub.f32 1.5, %v2178
    %v2180 = vmul.f32 %v2175, %v2179
    %vm2181 = vweird.f32 %v2098
    %vm2182 = vweird.f32 %v2175
    %vm2183 = vmor %vm2181, %vm2182
    %v2184 = vsel %vm2183, %v2175, %v2180
    %v2185 = vrsqrt.pop %v2099
    %v2186 = vmul.f32 %v2185, %v2099
    %v2187 = vmul.f32 %v2186, %v2185
    %v2188 = vmul.f32 0.5, %v2187
    %v2189 = vsub.f32 1.5, %v2188
    %v2190 = vmul.f32 %v2185, %v2189
    %vm2191 = vweird.f32 %v2099
    %vm2192 = vweird.f32 %v2185
    %vm2193 = vmor %vm2191, %vm2192
    %v2194 = vsel %vm2193, %v2185, %v2190
    %v2195 = vrsqrt.pop %v2100
    %v2196 = vmul.f32 %v2195, %v2100
    %v2197 = vmul.f32 %v2196, %v2195
    %v2198 = vmul.f32 0.5, %v2197
    %v2199 = vsub.f32 1.5, %v2198
    %v2200 = vmul.f32 %v2195, %v2199
    %vm2201 = vweird.f32 %v2100
    %vm2202 = vweird.f32 %v2195
    %vm2203 = vmor %vm2201, %vm2202
    %v2204 = vsel %vm2203, %v2195, %v2200
    %v2205 = vrsqrt.pop %v2101
    %v2206 = vmul.f32 %v2205, %v2101
    %v2207 = vmul.f32 %v2206, %v2205
    %v2208 = vmul.f32 0.5, %v2207
    %v2209 = vsub.f32 1.5, %v2208
    %v2210 = vmul.f32 %v2205, %v2209
    %vm2211 = vweird.f32 %v2101
    %vm2212 = vweird.f32 %v2205
    %vm2213 = vmor %vm2211, %vm2212
    %v2214 = vsel %vm2213, %v2205, %v2210
    %v2215 = vrsqrt.pop %v2102
    %v2216 = vmul.f32 %v2215, %v2102
    %v2217 = vmul.f32 %v2216, %v2215
    %v2218 = vmul.f32 0.5, %v2217
    %v2219 = vsub.f32 1.5, %v2218
    %v2220 = vmul.f32 %v2215, %v2219
    %vm2221 = vweird.f32 %v2102
    %vm2222 = vweird.f32 %v2215
    %vm2223 = vmor %vm2221, %vm2222
    %v2224 = vsel %vm2223, %v2215, %v2220
    %v2225 = vrsqrt.pop %v2103
    %v2226 = vmul.f32 %v2225, %v2103
    %v2227 = vmul.f32 %v2226, %v2225
    %v2228 = vmul.f32 0.5, %v2227
    %v2229 = vsub.f32 1.5, %v2228
    %v2230 = vmul.f32 %v2225, %v2229
    %vm2231 = vweird.f32 %v2103
    %vm2232 = vweird.f32 %v2225
    %vm2233 = vmor %vm2231, %vm2232
    %v2234 = vsel %vm2233, %v2225, %v2230
    %v2235 = vrsqrt.pop %v2104
    %v2236 = vmul.f32 %v2235, %v2104
    %v2237 = vmul.f32 %v2236, %v2235
    %v2238 = vmul.f32 0.5, %v2237
    %v2239 = vsub.f32 1.5, %v2238
    %v2240 = vmul.f32 %v2235, %v2239
    %vm2241 = vweird.f32 %v2104
    %vm2242 = vweird.f32 %v2235
    %vm2243 = vmor %vm2241, %vm2242
    %v2244 = vsel %vm2243, %v2235, %v2240
    %v2245 = vrsqrt.pop %v2105
    %v2246 = vmul.f32 %v2245, %v2105
    %v2247 = vmul.f32 %v2246, %v2245
    %v2248 = vmul.f32 0.5, %v2247
    %v2249 = vsub.f32 1.5, %v2248
    %v2250 = vmul.f32 %v2245, %v2249
    %vm2251 = vweird.f32 %v2105
    %vm2252 = vweird.f32 %v2245
    %vm2253 = vmor %vm2251, %vm2252
    %v2254 = vsel %vm2253, %v2245, %v2250
    %v2255 = vrsqrt.pop %v2106
    %v2256 = vmul.f32 %v2255, %v2106
    %v2257 = vmul.f32 %v2256, %v2255
    %v2258 = vmul.f32 0.5, %v2257
    %v2259 = vsub.f32 1.5, %v2258
    %v2260 = vmul.f32 %v2255, %v2259
    %vm2261 = vweird.f32 %v2106
    %vm2262 = vweird.f32 %v2255
    %vm2263 = vmor %vm2261, %vm2262
    %v2264 = vsel %vm2263, %v2255, %v2260
    %v2265 = vrsqrt.pop %v2107
    %v2266 = vmul.f32 %v2265, %v2107
    %v2267 = vmul.f32 %v2266, %v2265
    %v2268 = vmul.f32 0.5, %v2267
    %v2269 = vsub.f32 1.5, %v2268
    %v2270 = vmul.f32 %v2265, %v2269
    %vm2271 = vweird.f32 %v2107
    %vm2272 = vweird.f32 %v2265
    %vm2273 = vmor %vm2271, %vm2272
    %v2274 = vsel %vm2273, %v2265, %v2270
    %v2275 = vrsqrt.pop %v2108
    %v2276 = vmul.f32 %v2275, %v2108
    %v2277 = vmul.f32 %v2276, %v2275
    %v2278 = vmul.f32 0.5, %v2277
    %v2279 = vsub.f32 1.5, %v2278
    %v2280 = vmul.f32 %v2275, %v2279
    %vm2281 = vweird.f32 %v2108
    %vm2282 = vweird.f32 %v2275
    %vm2283 = vmor %vm2281, %vm2282
    %v2284 = vsel %vm2283, %v2275, %v2280
    %v2285 = vrsqrt.pop %v2109
    %v2286 = vmul.f32 %v2285, %v2109
    %v2287 = vmul.f32 %v2286, %v2285
    %v2288 = vmul.f32 0.5, %v2287
    %v2289 = vsub.f32 1.5, %v2288
    %v2290 = vmul.f32 %v2285, %v2289
    %vm2291 = vweird.f32 %v2109
    %vm2292 = vweird.f32 %v2285
    %vm2293 = vmor %vm2291, %vm2292
    %v2294 = vsel %vm2293, %v2285, %v2290
    %v2295 = vrsqrt.pop %v2110
    %v2296 = vmul.f32 %v2295, %v2110
    %v2297 = vmul.f32 %v2296, %v2295
    %v2298 = vmul.f32 0.5, %v2297
    %v2299 = vsub.f32 1.5, %v2298
    %v2300 = vmul.f32 %v2295, %v2299
    %vm2301 = vweird.f32 %v2110
    %vm2302 = vweird.f32 %v2295
    %vm2303 = vmor %vm2301, %vm2302
    %v2304 = vsel %vm2303, %v2295, %v2300
    %v2305 = vrsqrt.pop %v2111
    %v2306 = vmul.f32 %v2305, %v2111
    %v2307 = vmul.f32 %v2306, %v2305
    %v2308 = vmul.f32 0.5, %v2307
    %v2309 = vsub.f32 1.5, %v2308
    %v2310 = vmul.f32 %v2305, %v2309
    %vm2311 = vweird.f32 %v2111
    %vm2312 = vweird.f32 %v2305
    %vm2313 = vmor %vm2311, %vm2312
    %v2314 = vsel %vm2313, %v2305, %v2310
    %v2315 = vrsqrt.pop %v2112
    %v2316 = vmul.f32 %v2315, %v2112
    %v2317 = vmul.f32 %v2316, %v2315
    %v2318 = vmul.f32 0.5, %v2317
    %v2319 = vsub.f32 1.5, %v2318
    %v2320 = vmul.f32 %v2315, %v2319
    %vm2321 = vweird.f32 %v2112
    %vm2322 = vweird.f32 %v2315
    %vm2323 = vmor %vm2321, %vm2322
    %v2324 = vsel %vm2323, %v2315, %v2320
    %v2325 = vrsqrt.pop %v2113
    %v2326 = vmul.f32 %v2325, %v2113
    %v2327 = vmul.f32 %v2326, %v2325
    %v2328 = vmul.f32 0.5, %v2327
    %v2329 = vsub.f32 1.5, %v2328
    %v2330 = vmul.f32 %v2325, %v2329
    %vm2331 = vweird.f32 %v2113
    %vm2332 = vweird.f32 %v2325
    %vm2333 = vmor %vm2331, %vm2332
    %v2334 = vsel %vm2333, %v2325, %v2330
    %v2335 = vrsqrt.pop %v2114
    %v2336 = vmul.f32 %v2335, %v2114
    %v2337 = vmul.f32 %v2336, %v2335
    %v2338 = vmul.f32 0.5, %v2337
    %v2339 = vsub.f32 1.5, %v2338
    %v2340 = vmul.f32 %v2335, %v2339
    %vm2341 = vweird.f32 %v2114
    %vm2342 = vweird.f32 %v2335
    %vm2343 = vmor %vm2341, %vm2342
    %v2344 = vsel %vm2343, %v2335, %v2340
    %v2345 = vrsqrt.pop %v2115
    %v2346 = vmul.f32 %v2345, %v2115
    %v2347 = vmul.f32 %v2346, %v2345
    %v2348 = vmul.f32 0.5, %v2347
    %v2349 = vsub.f32 1.5, %v2348
    %v2350 = vmul.f32 %v2345, %v2349
    %vm2351 = vweird.f32 %v2115
    %vm2352 = vweird.f32 %v2345
    %vm2353 = vmor %vm2351, %vm2352
    %v2354 = vsel %vm2353, %v2345, %v2350
    %v2355 = vrsqrt.pop %v2116
    %v2356 = vmul.f32 %v2355, %v2116
    %v2357 = vmul.f32 %v2356, %v2355
    %v2358 = vmul.f32 0.5, %v2357
    %v2359 = vsub.f32 1.5, %v2358
    %v2360 = vmul.f32 %v2355, %v2359
    %vm2361 = vweird.f32 %v2116
    %vm2362 = vweird.f32 %v2355
    %vm2363 = vmor %vm2361, %vm2362
    %v2364 = vsel %vm2363, %v2355, %v2360
    %v2365 = vrsqrt.pop %v2117
    %v2366 = vmul.f32 %v2365, %v2117
    %v2367 = vmul.f32 %v2366, %v2365
    %v2368 = vmul.f32 0.5, %v2367
    %v2369 = vsub.f32 1.5, %v2368
    %v2370 = vmul.f32 %v2365, %v2369
    %vm2371 = vweird.f32 %v2117
    %vm2372 = vweird.f32 %v2365
    %vm2373 = vmor %vm2371, %vm2372
    %v2374 = vsel %vm2373, %v2365, %v2370
    %v2375 = vrsqrt.pop %v2118
    %v2376 = vmul.f32 %v2375, %v2118
    %v2377 = vmul.f32 %v2376, %v2375
    %v2378 = vmul.f32 0.5, %v2377
    %v2379 = vsub.f32 1.5, %v2378
    %v2380 = vmul.f32 %v2375, %v2379
    %vm2381 = vweird.f32 %v2118
    %vm2382 = vweird.f32 %v2375
    %vm2383 = vmor %vm2381, %vm2382
    %v2384 = vsel %vm2383, %v2375, %v2380
    %v2385 = vrsqrt.pop %v2119
    %v2386 = vmul.f32 %v2385, %v2119
    %v2387 = vmul.f32 %v2386, %v2385
    %v2388 = vmul.f32 0.5, %v2387
    %v2389 = vsub.f32 1.5, %v2388
    %v2390 = vmul.f32 %v2385, %v2389
    %vm2391 = vweird.f32 %v2119
    %vm2392 = vweird.f32 %v2385
    %vm2393 = vmor %vm2391, %vm2392
    %v2394 = vsel %vm2393, %v2385, %v2390
    %v2395 = vrsqrt.pop %v2120
    %v2396 = vmul.f32 %v2395, %v2120
    %v2397 = vmul.f32 %v2396, %v2395
    %v2398 = vmul.f32 0.5, %v2397
    %v2399 = vsub.f32 1.5, %v2398
    %v2400 = vmul.f32 %v2395, %v2399
    %vm2401 = vweird.f32 %v2120
    %vm2402 = vweird.f32 %v2395
    %vm2403 = vmor %vm2401, %vm2402
    %v2404 = vsel %vm2403, %v2395, %v2400
    %v2405 = vrsqrt.pop %v2121
    %v2406 = vmul.f32 %v2405, %v2121
    %v2407 = vmul.f32 %v2406, %v2405
    %v2408 = vmul.f32 0.5, %v2407
    %v2409 = vsub.f32 1.5, %v2408
    %v2410 = vmul.f32 %v2405, %v2409
    %vm2411 = vweird.f32 %v2121
    %vm2412 = vweird.f32 %v2405
    %vm2413 = vmor %vm2411, %vm2412
    %v2414 = vsel %vm2413, %v2405, %v2410
    %v2415 = vrsqrt.pop %v2122
    %v2416 = vmul.f32 %v2415, %v2122
    %v2417 = vmul.f32 %v2416, %v2415
    %v2418 = vmul.f32 0.5, %v2417
    %v2419 = vsub.f32 1.5, %v2418
    %v2420 = vmul.f32 %v2415, %v2419
    %vm2421 = vweird.f32 %v2122
    %vm2422 = vweird.f32 %v2415
    %vm2423 = vmor %vm2421, %vm2422
    %v2424 = vsel %vm2423, %v2415, %v2420
    %v2425 = vrsqrt.pop %v2123
    %v2426 = vmul.f32 %v2425, %v2123
    %v2427 = vmul.f32 %v2426, %v2425
    %v2428 = vmul.f32 0.5, %v2427
    %v2429 = vsub.f32 1.5, %v2428
    %v2430 = vmul.f32 %v2425, %v2429
    %vm2431 = vweird.f32 %v2123
    %vm2432 = vweird.f32 %v2425
    %vm2433 = vmor %vm2431, %vm2432
    %v2434 = vsel %vm2433, %v2425, %v2430
    %v2435 = vrsqrt.pop %v2124
    %v2436 = vmul.f32 %v2435, %v2124
    %v2437 = vmul.f32 %v2436, %v2435
    %v2438 = vmul.f32 0.5, %v2437
    %v2439 = vsub.f32 1.5, %v2438
    %v2440 = vmul.f32 %v2435, %v2439
    %vm2441 = vweird.f32 %v2124
    %vm2442 = vweird.f32 %v2435
    %vm2443 = vmor %vm2441, %vm2442
    %v2444 = vsel %vm2443, %v2435, %v2440
    %v2445 = vmul.f32 %v2030, %v2134
    %v2446 = vmul.f32 %v2032, %v2144
    %v2447 = vmul.f32 %v2034, %v2154
    %v2448 = vmul.f32 %v2036, %v2164
    %v2449 = vmul.f32 %v2038, %v2174
    %v2450 = vmul.f32 %v2040, %v2184
    %v2451 = vmul.f32 %v2042, %v2194
    %v2452 = vmul.f32 %v2044, %v2204
    %v2453 = vmul.f32 %v2046, %v2214
    %v2454 = vmul.f32 %v2048, %v2224
    %v2455 = vmul.f32 %v2050, %v2234
    %v2456 = vmul.f32 %v2052, %v2244
    %v2457 = vmul.f32 %v2054, %v2254
    %v2458 = vmul.f32 %v2056, %v2264
    %v2459 = vmul.f32 %v2058, %v2274
    %v2460 = vmul.f32 %v2060, %v2284
    %v2461 = vmul.f32 %v2062, %v2294
    %v2462 = vmul.f32 %v2064, %v2304
    %v2463 = vmul.f32 %v2066, %v2314
    %v2464 = vmul.f32 %v2068, %v2324
    %v2465 = vmul.f32 %v2070, %v2334
    %v2466 = vmul.f32 %v2072, %v2344
    %v2467 = vmul.f32 %v2074, %v2354
    %v2468 = vmul.f32 %v2076, %v2364
    %v2469 = vmul.f32 %v2078, %v2374
    %v2470 = vmul.f32 %v2080, %v2384
    %v2471 = vmul.f32 %v2082, %v2394
    %v2472 = vmul.f32 %v2084, %v2404
    %v2473 = vmul.f32 %v2086, %v2414
    %v2474 = vmul.f32 %v2088, %v2424
    %v2475 = vmul.f32 %v2090, %v2434
    %v2476 = vmul.f32 %v2092, %v2444
    %v2477 = vmul.f32 %v2445, 0.031622775
    %v2478 = vmul.f32 %v2446, 0.031622775
    %v2479 = vmul.f32 %v2447, 0.031622775
    %v2480 = vmul.f32 %v2448, 0.031622775
    %v2481 = vmul.f32 %v2449, 0.031622775
    %v2482 = vmul.f32 %v2450, 0.031622775
    %v2483 = vmul.f32 %v2451, 0.031622775
    %v2484 = vmul.f32 %v2452, 0.031622775
    %v2485 = vmul.f32 %v2453, 0.031622775
    %v2486 = vmul.f32 %v2454, 0.031622775
    %v2487 = vmul.f32 %v2455, 0.031622775
    %v2488 = vmul.f32 %v2456, 0.031622775
    %v2489 = vmul.f32 %v2457, 0.031622775
    %v2490 = vmul.f32 %v2458, 0.031622775
    %v2491 = vmul.f32 %v2459, 0.031622775
    %v2492 = vmul.f32 %v2460, 0.031622775
    %v2493 = vmul.f32 %v2461, 0.031622775
    %v2494 = vmul.f32 %v2462, 0.031622775
    %v2495 = vmul.f32 %v2463, 0.031622775
    %v2496 = vmul.f32 %v2464, 0.031622775
    %v2497 = vmul.f32 %v2465, 0.031622775
    %v2498 = vmul.f32 %v2466, 0.031622775
    %v2499 = vmul.f32 %v2467, 0.031622775
    %v2500 = vmul.f32 %v2468, 0.031622775
    %v2501 = vmul.f32 %v2469, 0.031622775
    %v2502 = vmul.f32 %v2470, 0.031622775
    %v2503 = vmul.f32 %v2471, 0.031622775
    %v2504 = vmul.f32 %v2472, 0.031622775
    %v2505 = vmul.f32 %v2473, 0.031622775
    %v2506 = vmul.f32 %v2474, 0.031622775
    %v2507 = vmul.f32 %v2475, 0.031622775
    %v2508 = vmul.f32 %v2476, 0.031622775
    %v2509 = vtanh.pop %v2477
    %v2510 = vtanh.pop %v2478
    %v2511 = vtanh.pop %v2479
    %v2512 = vtanh.pop %v2480
    %v2513 = vtanh.pop %v2481
    %v2514 = vtanh.pop %v2482
    %v2515 = vtanh.pop %v2483
    %v2516 = vtanh.pop %v2484
    %v2517 = vtanh.pop %v2485
    %v2518 = vtanh.pop %v2486
    %v2519 = vtanh.pop %v2487
    %v2520 = vtanh.pop %v2488
    %v2521 = vtanh.pop %v2489
    %v2522 = vtanh.pop %v2490
    %v2523 = vtanh.pop %v2491
    %v2524 = vtanh.pop %v2492
    %v2525 = vtanh.pop %v2493
    %v2526 = vtanh.pop %v2494
    %v2527 = vtanh.pop %v2495
    %v2528 = vtanh.pop %v2496
    %v2529 = vtanh.pop %v2497
    %v2530 = vtanh.pop %v2498
    %v2531 = vtanh.pop %v2499
    %v2532 = vtanh.pop %v2500
    %v2533 = vtanh.pop %v2501
    %v2534 = vtanh.pop %v2502
    %v2535 = vtanh.pop %v2503
    %v2536 = vtanh.pop %v2504
    %v2537 = vtanh.pop %v2505
    %v2538 = vtanh.pop %v2506
    %v2539 = vtanh.pop %v2507
    %v2540 = vtanh.pop %v2508
    %v2541 = vmul.f32 %v2134, 31.622776
    %v2542 = vmul.f32 %v2144, 31.622776
    %v2543 = vmul.f32 %v2154, 31.622776
    %v2544 = vmul.f32 %v2164, 31.622776
    %v2545 = vmul.f32 %v2174, 31.622776
    %v2546 = vmul.f32 %v2184, 31.622776
    %v2547 = vmul.f32 %v2194, 31.622776
    %v2548 = vmul.f32 %v2204, 31.622776
    %v2549 = vmul.f32 %v2214, 31.622776
    %v2550 = vmul.f32 %v2224, 31.622776
    %v2551 = vmul.f32 %v2234, 31.622776
    %v2552 = vmul.f32 %v2244, 31.622776
    %v2553 = vmul.f32 %v2254, 31.622776
    %v2554 = vmul.f32 %v2264, 31.622776
    %v2555 = vmul.f32 %v2274, 31.622776
    %v2556 = vmul.f32 %v2284, 31.622776
    %v2557 = vmul.f32 %v2294, 31.622776
    %v2558 = vmul.f32 %v2304, 31.622776
    %v2559 = vmul.f32 %v2314, 31.622776
    %v2560 = vmul.f32 %v2324, 31.622776
    %v2561 = vmul.f32 %v2334, 31.622776
    %v2562 = vmul.f32 %v2344, 31.622776
    %v2563 = vmul.f32 %v2354, 31.622776
    %v2564 = vmul.f32 %v2364, 31.622776
    %v2565 = vmul.f32 %v2374, 31.622776
    %v2566 = vmul.f32 %v2384, 31.622776
    %v2567 = vmul.f32 %v2394, 31.622776
    %v2568 = vmul.f32 %v2404, 31.622776
    %v2569 = vmul.f32 %v2414, 31.622776
    %v2570 = vmul.f32 %v2424, 31.622776
    %v2571 = vmul.f32 %v2434, 31.622776
    %v2572 = vmul.f32 %v2444, 31.622776
    %v2573 = vmul.f32 %v2509, %v2541
    %v2574 = vmul.f32 %v2510, %v2542
    %v2575 = vmul.f32 %v2511, %v2543
    %v2576 = vmul.f32 %v2512, %v2544
    %v2577 = vmul.f32 %v2513, %v2545
    %v2578 = vmul.f32 %v2514, %v2546
    %v2579 = vmul.f32 %v2515, %v2547
    %v2580 = vmul.f32 %v2516, %v2548
    %v2581 = vmul.f32 %v2517, %v2549
    %v2582 = vmul.f32 %v2518, %v2550
    %v2583 = vmul.f32 %v2519, %v2551
    %v2584 = vmul.f32 %v2520, %v2552
    %v2585 = vmul.f32 %v2521, %v2553
    %v2586 = vmul.f32 %v2522, %v2554
    %v2587 = vmul.f32 %v2523, %v2555
    %v2588 = vmul.f32 %v2524, %v2556
    %v2589 = vmul.f32 %v2525, %v2557
    %v2590 = vmul.f32 %v2526, %v2558
    %v2591 = vmul.f32 %v2527, %v2559
    %v2592 = vmul.f32 %v2528, %v2560
    %v2593 = vmul.f32 %v2529, %v2561
    %v2594 = vmul.f32 %v2530, %v2562
    %v2595 = vmul.f32 %v2531, %v2563
    %v2596 = vmul.f32 %v2532, %v2564
    %v2597 = vmul.f32 %v2533, %v2565
    %v2598 = vmul.f32 %v2534, %v2566
    %v2599 = vmul.f32 %v2535, %v2567
    %v2600 = vmul.f32 %v2536, %v2568
    %v2601 = vmul.f32 %v2537, %v2569
    %v2602 = vmul.f32 %v2538, %v2570
    %v2603 = vmul.f32 %v2539, %v2571
    %v2604 = vmul.f32 %v2540, %v2572
    %v2605 = vmul.f32 %v1902, %v2573
    %v2606 = vmul.f32 %v1905, %v2574
    %v2607 = vmul.f32 %v1908, %v2575
    %v2608 = vmul.f32 %v1911, %v2576
    %v2609 = vmul.f32 %v1914, %v2577
    %v2610 = vmul.f32 %v1917, %v2578
    %v2611 = vmul.f32 %v1920, %v2579
    %v2612 = vmul.f32 %v1923, %v2580
    %v2613 = vmul.f32 %v1926, %v2581
    %v2614 = vmul.f32 %v1929, %v2582
    %v2615 = vmul.f32 %v1932, %v2583
    %v2616 = vmul.f32 %v1935, %v2584
    %v2617 = vmul.f32 %v1938, %v2585
    %v2618 = vmul.f32 %v1941, %v2586
    %v2619 = vmul.f32 %v1944, %v2587
    %v2620 = vmul.f32 %v1947, %v2588
    %v2621 = vmul.f32 %v1950, %v2589
    %v2622 = vmul.f32 %v1953, %v2590
    %v2623 = vmul.f32 %v1956, %v2591
    %v2624 = vmul.f32 %v1959, %v2592
    %v2625 = vmul.f32 %v1962, %v2593
    %v2626 = vmul.f32 %v1965, %v2594
    %v2627 = vmul.f32 %v1968, %v2595
    %v2628 = vmul.f32 %v1971, %v2596
    %v2629 = vmul.f32 %v1974, %v2597
    %v2630 = vmul.f32 %v1977, %v2598
    %v2631 = vmul.f32 %v1980, %v2599
    %v2632 = vmul.f32 %v1983, %v2600
    %v2633 = vmul.f32 %v1986, %v2601
    %v2634 = vmul.f32 %v1989, %v2602
    %v2635 = vmul.f32 %v1992, %v2603
    %v2636 = vmul.f32 %v1995, %v2604
    %v2637 = vstv %s48
    %v2638 = vmul.f32 %v2637, %v2605
    %v2639 = vmul.f32 %v2637, %v2606
    %v2640 = vmul.f32 %v2637, %v2607
    %v2641 = vmul.f32 %v2637, %v2608
    %v2642 = vmul.f32 %v2637, %v2609
    %v2643 = vmul.f32 %v2637, %v2610
    %v2644 = vmul.f32 %v2637, %v2611
    %v2645 = vmul.f32 %v2637, %v2612
    %v2646 = vmul.f32 %v2637, %v2613
    %v2647 = vmul.f32 %v2637, %v2614
    %v2648 = vmul.f32 %v2637, %v2615
    %v2649 = vmul.f32 %v2637, %v2616
    %v2650 = vmul.f32 %v2637, %v2617
    %v2651 = vmul.f32 %v2637, %v2618
    %v2652 = vmul.f32 %v2637, %v2619
    %v2653 = vmul.f32 %v2637, %v2620
    %v2654 = vmul.f32 %v2637, %v2621
    %v2655 = vmul.f32 %v2637, %v2622
    %v2656 = vmul.f32 %v2637, %v2623
    %v2657 = vmul.f32 %v2637, %v2624
    %v2658 = vmul.f32 %v2637, %v2625
    %v2659 = vmul.f32 %v2637, %v2626
    %v2660 = vmul.f32 %v2637, %v2627
    %v2661 = vmul.f32 %v2637, %v2628
    %v2662 = vmul.f32 %v2637, %v2629
    %v2663 = vmul.f32 %v2637, %v2630
    %v2664 = vmul.f32 %v2637, %v2631
    %v2665 = vmul.f32 %v2637, %v2632
    %v2666 = vmul.f32 %v2637, %v2633
    %v2667 = vmul.f32 %v2637, %v2634
    %v2668 = vmul.f32 %v2637, %v2635
    %v2669 = vmul.f32 %v2637, %v2636
    %v2670 = vstv %s49
    %v2671 = vmul.f32 %v2670, %v556
    %v2672 = vmul.f32 %v2670, %v557
    %v2673 = vmul.f32 %v2670, %v558
    %v2674 = vmul.f32 %v2670, %v559
    %v2675 = vmul.f32 %v2670, %v560
    %v2676 = vmul.f32 %v2670, %v561
    %v2677 = vmul.f32 %v2670, %v562
    %v2678 = vmul.f32 %v2670, %v563
    %v2679 = vmul.f32 %v2670, %v564
    %v2680 = vmul.f32 %v2670, %v565
    %v2681 = vmul.f32 %v2670, %v566
    %v2682 = vmul.f32 %v2670, %v567
    %v2683 = vmul.f32 %v2670, %v568
    %v2684 = vmul.f32 %v2670, %v569
    %v2685 = vmul.f32 %v2670, %v570
    %v2686 = vmul.f32 %v2670, %v571
    %v2687 = vmul.f32 %v2670, %v572
    %v2688 = vmul.f32 %v2670, %v573
    %v2689 = vmul.f32 %v2670, %v574
    %v2690 = vmul.f32 %v2670, %v575
    %v2691 = vmul.f32 %v2670, %v576
    %v2692 = vmul.f32 %v2670, %v577
    %v2693 = vmul.f32 %v2670, %v578
    %v2694 = vmul.f32 %v2670, %v579
    %v2695 = vmul.f32 %v2670, %v580
    %v2696 = vmul.f32 %v2670, %v581
    %v2697 = vmul.f32 %v2670, %v582
    %v2698 = vmul.f32 %v2670, %v583
    %v2699 = vmul.f32 %v2670, %v584
    %v2700 = vmul.f32 %v2670, %v585
    %v2701 = vmul.f32 %v2670, %v586
    %v2702 = vmul.f32 %v2670, %v587
    %v2703 = vadd.f32 %v2638, %v2671
    %v2704 = vadd.f32 %v2639, %v2672
    %v2705 = vadd.f32 %v2640, %v2673
    %v2706 = vadd.f32 %v2641, %v2674
    %v2707 = vadd.f32 %v2642, %v2675
    %v2708 = vadd.f32 %v2643, %v2676
    %v2709 = vadd.f32 %v2644, %v2677
    %v2710 = vadd.f32 %v2645, %v2678
    %v2711 = vadd.f32 %v2646, %v2679
    %v2712 = vadd.f32 %v2647, %v2680
    %v2713 = vadd.f32 %v2648, %v2681
    %v2714 = vadd.f32 %v2649, %v2682
    %v2715 = vadd.f32 %v2650, %v2683
    %v2716 = vadd.f32 %v2651, %v2684
    %v2717 = vadd.f32 %v2652, %v2685
    %v2718 = vadd.f32 %v2653, %v2686
    %v2719 = vadd.f32 %v2654, %v2687
    %v2720 = vadd.f32 %v2655, %v2688
    %v2721 = vadd.f32 %v2656, %v2689
    %v2722 = vadd.f32 %v2657, %v2690
    %v2723 = vadd.f32 %v2658, %v2691
    %v2724 = vadd.f32 %v2659, %v2692
    %v2725 = vadd.f32 %v2660, %v2693
    %v2726 = vadd.f32 %v2661, %v2694
    %v2727 = vadd.f32 %v2662, %v2695
    %v2728 = vadd.f32 %v2663, %v2696
    %v2729 = vadd.f32 %v2664, %v2697
    %v2730 = vadd.f32 %v2665, %v2698
    %v2731 = vadd.f32 %v2666, %v2699
    %v2732 = vadd.f32 %v2667, %v2700
    %v2733 = vadd.f32 %v2668, %v2701
    %v2734 = vadd.f32 %v2669, %v2702
    %v2735 = vadd.f32 %v2703, %v2704
    %v2736 = vadd.f32 %v2735, %v2705
    %v2737 = vadd.f32 %v2736, %v2706
    %v2738 = vadd.f32 %v2737, %v2707
    %v2739 = vadd.f32 %v2738, %v2708
    %v2740 = vadd.f32 %v2739, %v2709
    %v2741 = vadd.f32 %v2740, %v2710
    %v2742 = vadd.f32 %v2741, %v2711
    %v2743 = vadd.f32 %v2742, %v2712
    %v2744 = vadd.f32 %v2743, %v2713
    %v2745 = vadd.f32 %v2744, %v2714
    %v2746 = vadd.f32 %v2745, %v2715
    %v2747 = vadd.f32 %v2746, %v2716
    %v2748 = vadd.f32 %v2747, %v2717
    %v2749 = vadd.f32 %v2748, %v2718
    %v2750 = vadd.f32 %v2749, %v2719
    %v2751 = vadd.f32 %v2750, %v2720
    %v2752 = vadd.f32 %v2751, %v2721
    %v2753 = vadd.f32 %v2752, %v2722
    %v2754 = vadd.f32 %v2753, %v2723
    %v2755 = vadd.f32 %v2754, %v2724
    %v2756 = vadd.f32 %v2755, %v2725
    %v2757 = vadd.f32 %v2756, %v2726
    %v2758 = vadd.f32 %v2757, %v2727
    %v2759 = vadd.f32 %v2758, %v2728
    %v2760 = vadd.f32 %v2759, %v2729
    %v2761 = vadd.f32 %v2760, %v2730
    %v2762 = vadd.f32 %v2761, %v2731
    %v2763 = vadd.f32 %v2762, %v2732
    %v2764 = vadd.f32 %v2763, %v2733
    %v2765 = vadd.f32 %v2764, %v2734
    %v2766 = vrot.slane %v2765, 4
    %v2767 = vadd.f32 %v2765, %v2766
    %v2768 = vrot.slane %v2767, 2
    %v2769 = vadd.f32 %v2767, %v2768
    %v2770 = vrot.slane %v2769, 1
    %v2771 = vadd.f32 %v2769, %v2770
    %v2772 = vmul.f32 %v2703, %v2703
    %v2773 = vmul.f32 %v2704, %v2704
    %v2774 = vmul.f32 %v2705, %v2705
    %v2775 = vmul.f32 %v2706, %v2706
    %v2776 = vmul.f32 %v2707, %v2707
    %v2777 = vmul.f32 %v2708, %v2708
    %v2778 = vmul.f32 %v2709, %v2709
    %v2779 = vmul.f32 %v2710, %v2710
    %v2780 = vmul.f32 %v2711, %v2711
    %v2781 = vmul.f32 %v2712, %v2712
    %v2782 = vmul.f32 %v2713, %v2713
    %v2783 = vmul.f32 %v2714, %v2714
    %v2784 = vmul.f32 %v2715, %v2715
    %v2785 = vmul.f32 %v2716, %v2716
    %v2786 = vmul.f32 %v2717, %v2717
    %v2787 = vmul.f32 %v2718, %v2718
    %v2788 = vmul.f32 %v2719, %v2719
    %v2789 = vmul.f32 %v2720, %v2720
    %v2790 = vmul.f32 %v2721, %v2721
    %v2791 = vmul.f32 %v2722, %v2722
    %v2792 = vmul.f32 %v2723, %v2723
    %v2793 = vmul.f32 %v2724, %v2724
    %v2794 = vmul.f32 %v2725, %v2725
    %v2795 = vmul.f32 %v2726, %v2726
    %v2796 = vmul.f32 %v2727, %v2727
    %v2797 = vmul.f32 %v2728, %v2728
    %v2798 = vmul.f32 %v2729, %v2729
    %v2799 = vmul.f32 %v2730, %v2730
    %v2800 = vmul.f32 %v2731, %v2731
    %v2801 = vmul.f32 %v2732, %v2732
    %v2802 = vmul.f32 %v2733, %v2733
    %v2803 = vmul.f32 %v2734, %v2734
    %v2804 = vadd.f32 %v2772, %v2773
    %v2805 = vadd.f32 %v2804, %v2774
    %v2806 = vadd.f32 %v2805, %v2775
    %v2807 = vadd.f32 %v2806, %v2776
    %v2808 = vadd.f32 %v2807, %v2777
    %v2809 = vadd.f32 %v2808, %v2778
    %v2810 = vadd.f32 %v2809, %v2779
    %v2811 = vadd.f32 %v2810, %v2780
    %v2812 = vadd.f32 %v2811, %v2781
    %v2813 = vadd.f32 %v2812, %v2782
    %v2814 = vadd.f32 %v2813, %v2783
    %v2815 = vadd.f32 %v2814, %v2784
    %v2816 = vadd.f32 %v2815, %v2785
    %v2817 = vadd.f32 %v2816, %v2786
    %v2818 = vadd.f32 %v2817, %v2787
    %v2819 = vadd.f32 %v2818, %v2788
    %v2820 = vadd.f32 %v2819, %v2789
    %v2821 = vadd.f32 %v2820, %v2790
    %v2822 = vadd.f32 %v2821, %v2791
    %v2823 = vadd.f32 %v2822, %v2792
    %v2824 = vadd.f32 %v2823, %v2793
    %v2825 = vadd.f32 %v2824, %v2794
    %v2826 = vadd.f32 %v2825, %v2795
    %v2827 = vadd.f32 %v2826, %v2796
    %v2828 = vadd.f32 %v2827, %v2797
    %v2829 = vadd.f32 %v2828, %v2798
    %v2830 = vadd.f32 %v2829, %v2799
    %v2831 = vadd.f32 %v2830, %v2800
    %v2832 = vadd.f32 %v2831, %v2801
    %v2833 = vadd.f32 %v2832, %v2802
    %v2834 = vadd.f32 %v2833, %v2803
    %v2835 = vrot.slane %v2834, 4
    %v2836 = vadd.f32 %v2834, %v2835
    %v2837 = vrot.slane %v2836, 2
    %v2838 = vadd.f32 %v2836, %v2837
    %v2839 = vrot.slane %v2838, 1
    %v2840 = vadd.f32 %v2838, %v2839
    %v2841 = vmul.f32 %v2771, 0.00390625
    %v2842 = vmul.f32 %v2840, 0.00390625
    %v2843 = vmul.f32 %v2841, %v2841
    %v2844 = vsub.f32 %v2842, %v2843
    %v2845 = vmax.f32 %v2844, 0.0
    %v2846 = vadd.f32 %v2845, 1e-05
    %v2847 = vrsqrt.pop %v2846
    %v2848 = vmul.f32 %v2847, %v2846
    %v2849 = vmul.f32 %v2848, %v2847
    %v2850 = vmul.f32 0.5, %v2849
    %v2851 = vsub.f32 1.5, %v2850
    %v2852 = vmul.f32 %v2847, %v2851
    %vm2853 = vweird.f32 %v2846
    %vm2854 = vweird.f32 %v2847
    %vm2855 = vmor %vm2853, %vm2854
    %v2856 = vsel %vm2855, %v2847, %v2852
    %v2857 = vld [vmem:[%s6] sm:$0x1]
    %v2858 = vmul.f32 %v2856, %v2857
    %v2859 = vsub.f32 %v2703, %v2841
    %v2860 = vsub.f32 %v2704, %v2841
    %v2861 = vsub.f32 %v2705, %v2841
    %v2862 = vsub.f32 %v2706, %v2841
    %v2863 = vsub.f32 %v2707, %v2841
    %v2864 = vsub.f32 %v2708, %v2841
    %v2865 = vsub.f32 %v2709, %v2841
    %v2866 = vsub.f32 %v2710, %v2841
    %v2867 = vsub.f32 %v2711, %v2841
    %v2868 = vsub.f32 %v2712, %v2841
    %v2869 = vsub.f32 %v2713, %v2841
    %v2870 = vsub.f32 %v2714, %v2841
    %v2871 = vsub.f32 %v2715, %v2841
    %v2872 = vsub.f32 %v2716, %v2841
    %v2873 = vsub.f32 %v2717, %v2841
    %v2874 = vsub.f32 %v2718, %v2841
    %v2875 = vsub.f32 %v2719, %v2841
    %v2876 = vsub.f32 %v2720, %v2841
    %v2877 = vsub.f32 %v2721, %v2841
    %v2878 = vsub.f32 %v2722, %v2841
    %v2879 = vsub.f32 %v2723, %v2841
    %v2880 = vsub.f32 %v2724, %v2841
    %v2881 = vsub.f32 %v2725, %v2841
    %v2882 = vsub.f32 %v2726, %v2841
    %v2883 = vsub.f32 %v2727, %v2841
    %v2884 = vsub.f32 %v2728, %v2841
    %v2885 = vsub.f32 %v2729, %v2841
    %v2886 = vsub.f32 %v2730, %v2841
    %v2887 = vsub.f32 %v2731, %v2841
    %v2888 = vsub.f32 %v2732, %v2841
    %v2889 = vsub.f32 %v2733, %v2841
    %v2890 = vsub.f32 %v2734, %v2841
    %v2891 = vperm.slane %v2858, 0
    %v2892 = vmul.f32 %v2859, %v2891
    %v2893 = vmul.f32 %v2860, %v2891
    %v2894 = vmul.f32 %v2861, %v2891
    %v2895 = vmul.f32 %v2862, %v2891
    %v2896 = vmul.f32 %v2863, %v2891
    %v2897 = vmul.f32 %v2864, %v2891
    %v2898 = vmul.f32 %v2865, %v2891
    %v2899 = vmul.f32 %v2866, %v2891
    %v2900 = vmul.f32 %v2867, %v2891
    %v2901 = vmul.f32 %v2868, %v2891
    %v2902 = vmul.f32 %v2869, %v2891
    %v2903 = vmul.f32 %v2870, %v2891
    %v2904 = vmul.f32 %v2871, %v2891
    %v2905 = vmul.f32 %v2872, %v2891
    %v2906 = vmul.f32 %v2873, %v2891
    %v2907 = vmul.f32 %v2874, %v2891
    %v2908 = vmul.f32 %v2875, %v2891
    %v2909 = vmul.f32 %v2876, %v2891
    %v2910 = vmul.f32 %v2877, %v2891
    %v2911 = vmul.f32 %v2878, %v2891
    %v2912 = vmul.f32 %v2879, %v2891
    %v2913 = vmul.f32 %v2880, %v2891
    %v2914 = vmul.f32 %v2881, %v2891
    %v2915 = vmul.f32 %v2882, %v2891
    %v2916 = vmul.f32 %v2883, %v2891
    %v2917 = vmul.f32 %v2884, %v2891
    %v2918 = vmul.f32 %v2885, %v2891
    %v2919 = vmul.f32 %v2886, %v2891
    %v2920 = vmul.f32 %v2887, %v2891
    %v2921 = vmul.f32 %v2888, %v2891
    %v2922 = vmul.f32 %v2889, %v2891
    %v2923 = vmul.f32 %v2890, %v2891
    %v2924 = vld [vmem:[%s7] sm:$0x1]
    %v2926 = vperm.slane %v2924, 0
    %v2928 = vadd.f32 %v2892, %v2926
    %v2929 = vadd.f32 %v2893, %v2926
    %v2930 = vadd.f32 %v2894, %v2926
    %v2931 = vadd.f32 %v2895, %v2926
    %v2932 = vadd.f32 %v2896, %v2926
    %v2933 = vadd.f32 %v2897, %v2926
    %v2934 = vadd.f32 %v2898, %v2926
    %v2935 = vadd.f32 %v2899, %v2926
    %v2936 = vadd.f32 %v2900, %v2926
    %v2937 = vadd.f32 %v2901, %v2926
    %v2938 = vadd.f32 %v2902, %v2926
    %v2939 = vadd.f32 %v2903, %v2926
    %v2940 = vadd.f32 %v2904, %v2926
    %v2941 = vadd.f32 %v2905, %v2926
    %v2942 = vadd.f32 %v2906, %v2926
    %v2943 = vadd.f32 %v2907, %v2926
    %v2944 = vadd.f32 %v2908, %v2926
    %v2945 = vadd.f32 %v2909, %v2926
    %v2946 = vadd.f32 %v2910, %v2926
    %v2947 = vadd.f32 %v2911, %v2926
    %v2948 = vadd.f32 %v2912, %v2926
    %v2949 = vadd.f32 %v2913, %v2926
    %v2950 = vadd.f32 %v2914, %v2926
    %v2951 = vadd.f32 %v2915, %v2926
    %v2952 = vadd.f32 %v2916, %v2926
    %v2953 = vadd.f32 %v2917, %v2926
    %v2954 = vadd.f32 %v2918, %v2926
    %v2955 = vadd.f32 %v2919, %v2926
    %v2956 = vadd.f32 %v2920, %v2926
    %v2957 = vadd.f32 %v2921, %v2926
    %v2958 = vadd.f32 %v2922, %v2926
    %v2959 = vadd.f32 %v2923, %v2926
    %v2960 = vmax.f32 %v2928, 0.0
    %v2961 = vmax.f32 %v2929, 0.0
    %v2962 = vmax.f32 %v2930, 0.0
    %v2963 = vmax.f32 %v2931, 0.0
    %v2964 = vmax.f32 %v2932, 0.0
    %v2965 = vmax.f32 %v2933, 0.0
    %v2966 = vmax.f32 %v2934, 0.0
    %v2967 = vmax.f32 %v2935, 0.0
    %v2968 = vmax.f32 %v2936, 0.0
    %v2969 = vmax.f32 %v2937, 0.0
    %v2970 = vmax.f32 %v2938, 0.0
    %v2971 = vmax.f32 %v2939, 0.0
    %v2972 = vmax.f32 %v2940, 0.0
    %v2973 = vmax.f32 %v2941, 0.0
    %v2974 = vmax.f32 %v2942, 0.0
    %v2975 = vmax.f32 %v2943, 0.0
    %v2976 = vmax.f32 %v2944, 0.0
    %v2977 = vmax.f32 %v2945, 0.0
    %v2978 = vmax.f32 %v2946, 0.0
    %v2979 = vmax.f32 %v2947, 0.0
    %v2980 = vmax.f32 %v2948, 0.0
    %v2981 = vmax.f32 %v2949, 0.0
    %v2982 = vmax.f32 %v2950, 0.0
    %v2983 = vmax.f32 %v2951, 0.0
    %v2984 = vmax.f32 %v2952, 0.0
    %v2985 = vmax.f32 %v2953, 0.0
    %v2986 = vmax.f32 %v2954, 0.0
    %v2987 = vmax.f32 %v2955, 0.0
    %v2988 = vmax.f32 %v2956, 0.0
    %v2989 = vmax.f32 %v2957, 0.0
    %v2990 = vmax.f32 %v2958, 0.0
    %v2991 = vmax.f32 %v2959, 0.0
    %v2992 = vpack.c.bf16 %v2961, %v2960
    %v2993 = vpack.c.bf16 %v2963, %v2962
    %v2994 = vpack.c.bf16 %v2965, %v2964
    %v2995 = vpack.c.bf16 %v2967, %v2966
    %v2996 = vpack.c.bf16 %v2969, %v2968
    %v2997 = vpack.c.bf16 %v2971, %v2970
    %v2998 = vpack.c.bf16 %v2973, %v2972
    %v2999 = vpack.c.bf16 %v2975, %v2974
    %v3000 = vpack.c.bf16 %v2977, %v2976
    %v3001 = vpack.c.bf16 %v2979, %v2978
    %v3002 = vpack.c.bf16 %v2981, %v2980
    %v3003 = vpack.c.bf16 %v2983, %v2982
    %v3004 = vpack.c.bf16 %v2985, %v2984
    %v3005 = vpack.c.bf16 %v2987, %v2986
    %v3006 = vpack.c.bf16 %v2989, %v2988
    %v3007 = vpack.c.bf16 %v2991, %v2990
    %v3008 = vld [vmem:[%s8] sm:$0xf]
    %v3009 = vld [vmem:[%s8 + $0x4] sm:$0xf]
    %v3010 = vld [vmem:[%s8 + $0x8] sm:$0xf]
    %v3011 = vld [vmem:[%s8 + $0xc] sm:$0xf]
    %v3012 = vld [vmem:[%s8 + $0x10] sm:$0xf]
    %v3013 = vld [vmem:[%s8 + $0x14] sm:$0xf]
    %v3014 = vld [vmem:[%s8 + $0x18] sm:$0xf]
    %v3015 = vld [vmem:[%s8 + $0x1c] sm:$0xf]
    %v3016 = vld [vmem:[%s8 + $0x20] sm:$0xf]
    %v3017 = vld [vmem:[%s8 + $0x24] sm:$0xf]
    %v3018 = vld [vmem:[%s8 + $0x28] sm:$0xf]
    %v3019 = vld [vmem:[%s8 + $0x2c] sm:$0xf]
    %v3020 = vld [vmem:[%s8 + $0x30] sm:$0xf]
    %v3021 = vld [vmem:[%s8 + $0x34] sm:$0xf]
    %v3022 = vld [vmem:[%s8 + $0x38] sm:$0xf]
    %v3023 = vld [vmem:[%s8 + $0x3c] sm:$0xf]
    %v3024 = vld [vmem:[%s9] sm:$0x1]
    %v3026 = vperm.slane %v3024, 0
    %v3044 = vunpack.c.l.b16 %v3008
    %v3045 = vunpack.c.l.b16 %v3009
    %v3046 = vunpack.c.l.b16 %v3010
    %v3047 = vunpack.c.l.b16 %v3011
    %v3048 = vunpack.c.l.b16 %v3012
    %v3049 = vunpack.c.l.b16 %v3013
    %v3050 = vunpack.c.l.b16 %v3014
    %v3051 = vunpack.c.l.b16 %v3015
    %v3052 = vunpack.c.l.b16 %v3016
    %v3053 = vunpack.c.l.b16 %v3017
    %v3054 = vunpack.c.l.b16 %v3018
    %v3055 = vunpack.c.l.b16 %v3019
    %v3056 = vunpack.c.l.b16 %v3020
    %v3057 = vunpack.c.l.b16 %v3021
    %v3058 = vunpack.c.l.b16 %v3022
    %v3059 = vunpack.c.l.b16 %v3023
    %v3060 = vpack.c.b16 %v3045, %v3044
    %v3061 = vpack.c.b16 %v3047, %v3046
    %v3062 = vpack.c.b16 %v3049, %v3048
    %v3063 = vpack.c.b16 %v3051, %v3050
    %v3064 = vpack.c.b16 %v3053, %v3052
    %v3065 = vpack.c.b16 %v3055, %v3054
    %v3066 = vpack.c.b16 %v3057, %v3056
    %v3067 = vpack.c.b16 %v3059, %v3058
    %3076 = vmatpush.bf16.msra.mxu0 %v3067
    %3077 = vmatpush.bf16.msra.mxu0 %v3066
    %3078 = vmatpush.bf16.msra.mxu0 %v3065
    %3079 = vmatpush.bf16.msra.mxu0 %v3064
    %3080 = vmatpush.bf16.msra.mxu0 %v3063
    %3081 = vmatpush.bf16.msra.mxu0 %v3062
    %3082 = vmatpush.bf16.msra.mxu0 %v3061
    %3083 = vmatpush.bf16.msra.mxu0 %v3060
    %3084 = vmatmul.bf16.gmra.mxu0 %v2992
    %v3085 = vpop.f32.mrf.mxu0
    %v3086 = vadd.f32 %v3026, %v3085
    %v3087 = vpop.f32.mrf.mxu0
    %v3088 = vadd.f32 %v3026, %v3087
    %3089 = vmatmul.bf16.gmra.mxu0 %v2993
    %v3090 = vpop.f32.mrf.mxu0
    %v3091 = vadd.f32 %v3026, %v3090
    %v3092 = vpop.f32.mrf.mxu0
    %v3093 = vadd.f32 %v3026, %v3092
    %3094 = vmatmul.bf16.gmra.mxu0 %v2994
    %v3095 = vpop.f32.mrf.mxu0
    %v3096 = vadd.f32 %v3026, %v3095
    %v3097 = vpop.f32.mrf.mxu0
    %v3098 = vadd.f32 %v3026, %v3097
    %3099 = vmatmul.bf16.gmra.mxu0 %v2995
    %v3100 = vpop.f32.mrf.mxu0
    %v3101 = vadd.f32 %v3026, %v3100
    %v3102 = vpop.f32.mrf.mxu0
    %v3103 = vadd.f32 %v3026, %v3102
    %3104 = vmatmul.bf16.gmra.mxu0 %v2996
    %v3105 = vpop.f32.mrf.mxu0
    %v3106 = vadd.f32 %v3026, %v3105
    %v3107 = vpop.f32.mrf.mxu0
    %v3108 = vadd.f32 %v3026, %v3107
    %3109 = vmatmul.bf16.gmra.mxu0 %v2997
    %v3110 = vpop.f32.mrf.mxu0
    %v3111 = vadd.f32 %v3026, %v3110
    %v3112 = vpop.f32.mrf.mxu0
    %v3113 = vadd.f32 %v3026, %v3112
    %3114 = vmatmul.bf16.gmra.mxu0 %v2998
    %v3115 = vpop.f32.mrf.mxu0
    %v3116 = vadd.f32 %v3026, %v3115
    %v3117 = vpop.f32.mrf.mxu0
    %v3118 = vadd.f32 %v3026, %v3117
    %3119 = vmatmul.bf16.gmra.mxu0 %v2999
    %v3120 = vpop.f32.mrf.mxu0
    %v3121 = vadd.f32 %v3026, %v3120
    %v3122 = vpop.f32.mrf.mxu0
    %v3123 = vadd.f32 %v3026, %v3122
    %3124 = vmatmul.bf16.gmra.mxu0 %v3000
    %v3125 = vpop.f32.mrf.mxu0
    %v3126 = vadd.f32 %v3026, %v3125
    %v3127 = vpop.f32.mrf.mxu0
    %v3128 = vadd.f32 %v3026, %v3127
    %3129 = vmatmul.bf16.gmra.mxu0 %v3001
    %v3130 = vpop.f32.mrf.mxu0
    %v3131 = vadd.f32 %v3026, %v3130
    %v3132 = vpop.f32.mrf.mxu0
    %v3133 = vadd.f32 %v3026, %v3132
    %3134 = vmatmul.bf16.gmra.mxu0 %v3002
    %v3135 = vpop.f32.mrf.mxu0
    %v3136 = vadd.f32 %v3026, %v3135
    %v3137 = vpop.f32.mrf.mxu0
    %v3138 = vadd.f32 %v3026, %v3137
    %3139 = vmatmul.bf16.gmra.mxu0 %v3003
    %v3140 = vpop.f32.mrf.mxu0
    %v3141 = vadd.f32 %v3026, %v3140
    %v3142 = vpop.f32.mrf.mxu0
    %v3143 = vadd.f32 %v3026, %v3142
    %3144 = vmatmul.bf16.gmra.mxu0 %v3004
    %v3145 = vpop.f32.mrf.mxu0
    %v3146 = vadd.f32 %v3026, %v3145
    %v3147 = vpop.f32.mrf.mxu0
    %v3148 = vadd.f32 %v3026, %v3147
    %3149 = vmatmul.bf16.gmra.mxu0 %v3005
    %v3150 = vpop.f32.mrf.mxu0
    %v3151 = vadd.f32 %v3026, %v3150
    %v3152 = vpop.f32.mrf.mxu0
    %v3153 = vadd.f32 %v3026, %v3152
    %3154 = vmatmul.bf16.gmra.mxu0 %v3006
    %v3155 = vpop.f32.mrf.mxu0
    %v3156 = vadd.f32 %v3026, %v3155
    %v3157 = vpop.f32.mrf.mxu0
    %v3158 = vadd.f32 %v3026, %v3157
    %3159 = vmatmul.bf16.gmra.mxu0 %v3007
    %v3160 = vpop.f32.mrf.mxu0
    %v3161 = vadd.f32 %v3026, %v3160
    %v3162 = vpop.f32.mrf.mxu0
    %v3163 = vadd.f32 %v3026, %v3162
    %3164 = vdwg.mxu0
    %3165 = vst [vmem:[%s10] sm:$0xff] %v3086
    %3166 = vst [vmem:[%s10 + $0x8] sm:$0xff] %v3088
    %3167 = vst [vmem:[%s10 + $0x10] sm:$0xff] %v3091
    %3168 = vst [vmem:[%s10 + $0x18] sm:$0xff] %v3093
    %3169 = vst [vmem:[%s10 + $0x20] sm:$0xff] %v3096
    %3170 = vst [vmem:[%s10 + $0x28] sm:$0xff] %v3098
    %3171 = vst [vmem:[%s10 + $0x30] sm:$0xff] %v3101
    %3172 = vst [vmem:[%s10 + $0x38] sm:$0xff] %v3103
    %3173 = vst [vmem:[%s10 + $0x40] sm:$0xff] %v3106
    %3174 = vst [vmem:[%s10 + $0x48] sm:$0xff] %v3108
    %3175 = vst [vmem:[%s10 + $0x50] sm:$0xff] %v3111
    %3176 = vst [vmem:[%s10 + $0x58] sm:$0xff] %v3113
    %3177 = vst [vmem:[%s10 + $0x60] sm:$0xff] %v3116
    %3178 = vst [vmem:[%s10 + $0x68] sm:$0xff] %v3118
    %3179 = vst [vmem:[%s10 + $0x70] sm:$0xff] %v3121
    %3180 = vst [vmem:[%s10 + $0x78] sm:$0xff] %v3123
    %3181 = vst [vmem:[%s10 + $0x80] sm:$0xff] %v3126
    %3182 = vst [vmem:[%s10 + $0x88] sm:$0xff] %v3128
    %3183 = vst [vmem:[%s10 + $0x90] sm:$0xff] %v3131
    %3184 = vst [vmem:[%s10 + $0x98] sm:$0xff] %v3133
    %3185 = vst [vmem:[%s10 + $0xa0] sm:$0xff] %v3136
    %3186 = vst [vmem:[%s10 + $0xa8] sm:$0xff] %v3138
    %3187 = vst [vmem:[%s10 + $0xb0] sm:$0xff] %v3141
    %3188 = vst [vmem:[%s10 + $0xb8] sm:$0xff] %v3143
    %3189 = vst [vmem:[%s10 + $0xc0] sm:$0xff] %v3146
    %3190 = vst [vmem:[%s10 + $0xc8] sm:$0xff] %v3148
    %3191 = vst [vmem:[%s10 + $0xd0] sm:$0xff] %v3151
    %3192 = vst [vmem:[%s10 + $0xd8] sm:$0xff] %v3153
    %3193 = vst [vmem:[%s10 + $0xe0] sm:$0xff] %v3156
    %3194 = vst [vmem:[%s10 + $0xe8] sm:$0xff] %v3158
    %3195 = vst [vmem:[%s10 + $0xf0] sm:$0xff] %v3161
    %3196 = vst [vmem:[%s10 + $0xf8] sm:$0xff] %v3163
    // Predicated region
    $region46: #{forward.1} parent=1 // pred_check
      _
    $region47: #{forward.1} parent=1 // pred_check_branch
      %3198 = sbr.rel (0) target = $region49
    $region48: #{forward.1} parent=1 // pred_region
      _
    $region49: #{forward.1} parent=1 // pred_fallthru
      _
    // Predicated region
    $region50: #{forward.1} parent=1 // pred_check
      _
    $region51: #{forward.1} parent=1 // pred_check_branch
      %3200 = sbr.rel (0) target = $region53
    $region52: #{forward.1} parent=1 // pred_region
      _
    $region53: #{forward.1} parent=1 // pred_fallthru
      _
    %3201 = vsyncpa [#allocation3], 1

</llo_original>
